<compile_context>
chip_gen: v5e
topology: v5e:2x2
jax: 0.10.0
libtpu: 0.0.40
codegen_flags: <defaults>
</compile_context>

<pallas_src>
import functools

import jax
import jax.numpy as jnp
from jax.experimental import pallas as pl
from jax.experimental.pallas import tpu as pltpu

DTYPE = jnp.bfloat16


# --------------------- generation-aware configuration ------------------------

def _tpu_config():
    """VMEM limit / tile sizes / GELU dtype per TPU generation.

    v7x : 64 MiB VMEM/TC -> request ~48 MiB (headroom for compiler scratch), 256-row tiles.
    v6e : 128 MiB VMEM   -> ~100 MiB, 512-row tiles, bf16 GELU (bf16 VPU/EUP).
    v5e : 128 MiB VMEM   -> ~100 MiB, 512-row tiles, 128-wide class tile, f32 GELU.
    """
    kind = ""
    try:
        kind = jax.devices()[0].device_kind.lower()
    except Exception:
        pass
    vmem_cap = None
    try:
        vmem_cap = int(pltpu.get_tpu_info().vmem_capacity_bytes)
    except Exception:
        vmem_cap = None

    is_v7 = ("v7" in kind) or ("7x" in kind) or (
        vmem_cap is not None and vmem_cap <= 64 * 1024 * 1024)
    is_v6 = "v6" in kind
    is_v5e = ("v5e" in kind) or ("v5 lite" in kind) or ("v5litepod" in kind)

    if is_v7:
        return dict(vmem_limit=48 * 1024 * 1024, row_tile=256, cls_tile=256,
                    gelu_dtype=jnp.bfloat16)
    if is_v6:
        return dict(vmem_limit=100 * 1024 * 1024, row_tile=512, cls_tile=256,
                    gelu_dtype=jnp.bfloat16)
    if is_v5e:
        return dict(vmem_limit=100 * 1024 * 1024, row_tile=512, cls_tile=128,
                    gelu_dtype=jnp.float32)
    # unknown generation (v4 / v5p / ...): conservative, previously-validated defaults
    return dict(vmem_limit=64 * 1024 * 1024, row_tile=256, cls_tile=128,
                gelu_dtype=jnp.float32)


_CFG = _tpu_config()
ROW_TILE = _CFG["row_tile"]
CLS_TILE = _CFG["cls_tile"]
VMEM_LIMIT = _CFG["vmem_limit"]
GELU_DTYPE = _CFG["gelu_dtype"]
Q_TILE = 128  # flash-style query-row tile inside the attention kernel


def _cparams(*sem):
    return pltpu.CompilerParams(dimension_semantics=sem, vmem_limit_bytes=VMEM_LIMIT)


@functools.lru_cache(maxsize=None)
def _single_buffer_ok():
    """Probe whether pipeline_mode=pl.Buffered(1) is accepted, so constant weight
    operands can be single-buffered (reclaims VMEM for larger row tiles)."""
    if not hasattr(pl, "Buffered"):
        return False
    try:
        def _k(x_ref, o_ref):
            o_ref[...] = x_ref[...] + 1.0

        y = pl.pallas_call(
            _k,
            out_shape=jax.ShapeDtypeStruct((16, 128), jnp.float32),
            grid=(2,),
            in_specs=[pl.BlockSpec((8, 128), lambda i: (0, 0),
                                   pipeline_mode=pl.Buffered(1))],
            out_specs=pl.BlockSpec((8, 128), lambda i: (i, 0)),
        )(jnp.zeros((8, 128), jnp.float32))
        jax.block_until_ready(y)
        return True
    except Exception:
        return False


def _const_spec(shape):
    """BlockSpec for an operand whose block index never changes across the grid."""
    index_map = lambda *_: (0,) * len(shape)
    if _single_buffer_ok():
        return pl.BlockSpec(shape, index_map, pipeline_mode=pl.Buffered(1))
    return pl.BlockSpec(shape, index_map)


def _gelu(x):
    # tanh approximation of GELU (dtype-preserving: bf16 on v6e/v7x, f32 on v5e)
    return 0.5 * x * (1.0 + jnp.tanh(0.7978845608028654 * (x + 0.044715 * x * x * x)))


def _round_up(a, m):
    return ((a + m - 1) // m) * m


# ----------------------------- Pallas kernels -------------------------------

def _linear_kernel(x_ref, w_ref, b_ref, o_ref):
    y = jnp.dot(x_ref[...], w_ref[...], preferred_element_type=jnp.float32)
    y = y + b_ref[...].astype(jnp.float32)
    o_ref[...] = y.astype(o_ref.dtype)


def pallas_linear(x, w, b, *, row_tile=ROW_TILE):
    """Tiled (rows) matmul + bias — used for the patch embedding."""
    M, K = x.shape
    N = w.shape[1]
    tm = min(row_tile, M)
    return pl.pallas_call(
        _linear_kernel,
        out_shape=jax.ShapeDtypeStruct((M, N), x.dtype),
        grid=(pl.cdiv(M, tm),),
        in_specs=[
            pl.BlockSpec((tm, K), lambda i: (i, 0)),
            _const_spec((K, N)),
            _const_spec((1, N)),
        ],
        out_specs=pl.BlockSpec((tm, N), lambda i: (i, 0)),
        compiler_params=_cparams("parallel"),
    )(x, w, b.reshape(1, N))


def _layernorm_kernel(x_ref, g_ref, b_ref, o_ref, *, eps):
    xf = x_ref[...].astype(jnp.float32)
    mean = jnp.mean(xf, axis=-1, keepdims=True)
    var = jnp.mean((xf - mean) ** 2, axis=-1, keepdims=True)
    y = (xf - mean) * jax.lax.rsqrt(var + eps)
    y = y * g_ref[...].astype(jnp.float32) + b_ref[...].astype(jnp.float32)
    o_ref[...] = y.astype(o_ref.dtype)


def pallas_layernorm(x, g, b, *, eps=1e-6, row_tile=ROW_TILE):
    M, D = x.shape
    tm = min(row_tile, M)
    return pl.pallas_call(
        functools.partial(_layernorm_kernel, eps=eps),
        out_shape=jax.ShapeDtypeStruct((M, D), x.dtype),
        grid=(pl.cdiv(M, tm),),
        in_specs=[
            pl.BlockSpec((tm, D), lambda i: (i, 0)),
            _const_spec((1, D)),
            _const_spec((1, D)),
        ],
        out_specs=pl.BlockSpec((tm, D), lambda i: (i, 0)),
        compiler_params=_cparams("parallel"),
    )(x, g.reshape(1, D), b.reshape(1, D))


def _ln_linear_kernel(x_ref, g_ref, bta_ref, w_ref, b_ref, o_ref, *, eps):
    # fused LayerNorm (f32 stats) + matmul (bf16 MXU, f32 acc) + bias
    xf = x_ref[...].astype(jnp.float32)
    mean = jnp.mean(xf, axis=-1, keepdims=True)
    var = jnp.mean((xf - mean) ** 2, axis=-1, keepdims=True)
    xn = (xf - mean) * jax.lax.rsqrt(var + eps)
    xn = xn * g_ref[...].astype(jnp.float32) + bta_ref[...].astype(jnp.float32)
    y = jnp.dot(xn.astype(w_ref.dtype), w_ref[...], preferred_element_type=jnp.float32)
    y = y + b_ref[...].astype(jnp.float32)
    o_ref[...] = y.astype(o_ref.dtype)


def pallas_ln_linear(x, ln_g, ln_b, w, b, *, eps=1e-6, row_tile=ROW_TILE):
    M, D = x.shape
    N = w.shape[1]
    tm = min(row_tile, M)
    return pl.pallas_call(
        functools.partial(_ln_linear_kernel, eps=eps),
        out_shape=jax.ShapeDtypeStruct((M, N), x.dtype),
        grid=(pl.cdiv(M, tm),),
        in_specs=[
            pl.BlockSpec((tm, D), lambda i: (i, 0)),
            _const_spec((1, D)),
            _const_spec((1, D)),
            _const_spec((D, N)),
            _const_spec((1, N)),
        ],
        out_specs=pl.BlockSpec((tm, N), lambda i: (i, 0)),
        compiler_params=_cparams("parallel"),
    )(x, ln_g.reshape(1, D), ln_b.reshape(1, D), w, b.reshape(1, N))


def _ln_mlp_residual_kernel(x_ref, g_ref, bta_ref, w1_ref, b1_ref, w2_ref, b2_ref,
                            o_ref, *, eps, gelu_dtype):
    # out = x + FC2(GELU(FC1(LN(x)))), hidden activation lives only in VMEM
    xf = x_ref[...].astype(jnp.float32)
    mean = jnp.mean(xf, axis=-1, keepdims=True)
    var = jnp.mean((xf - mean) ** 2, axis=-1, keepdims=True)
    xn = (xf - mean) * jax.lax.rsqrt(var + eps)
    xn = xn * g_ref[...].astype(jnp.float32) + bta_ref[...].astype(jnp.float32)
    h = jnp.dot(xn.astype(w1_ref.dtype), w1_ref[...], preferred_element_type=jnp.float32)
    h = h + b1_ref[...].astype(jnp.float32)
    h = _gelu(h.astype(gelu_dtype))            # bf16 on v6e/v7x (bf16 VPU/EUP), f32 on v5e
    y = jnp.dot(h.astype(w2_ref.dtype), w2_ref[...], preferred_element_type=jnp.float32)
    y = y + b2_ref[...].astype(jnp.float32)
    o_ref[...] = (xf + y).astype(o_ref.dtype)


def pallas_ln_mlp_residual(x, ln_g, ln_b, w1, b1, w2, b2, *, eps=1e-6,
                           row_tile=ROW_TILE, gelu_dtype=GELU_DTYPE):
    M, D = x.shape
    H = w1.shape[1]
    tm = min(row_tile, M)
    return pl.pallas_call(
        functools.partial(_ln_mlp_residual_kernel, eps=eps, gelu_dtype=gelu_dtype),
        out_shape=jax.ShapeDtypeStruct((M, D), x.dtype),
        grid=(pl.cdiv(M, tm),),
        in_specs=[
            pl.BlockSpec((tm, D), lambda i: (i, 0)),
            _const_spec((1, D)),
            _const_spec((1, D)),
            _const_spec((D, H)),
            _const_spec((1, H)),
            _const_spec((H, D)),
            _const_spec((1, D)),
        ],
        out_specs=pl.BlockSpec((tm, D), lambda i: (i, 0)),
        compiler_params=_cparams("parallel"),
    )(x, ln_g.reshape(1, D), ln_b.reshape(1, D), w1, b1.reshape(1, H), w2, b2.reshape(1, D))


def _attn_proj_kernel(qkvq_ref, qkvk_ref, xres_ref, pw_ref, pb_ref, o_ref, attn_sc,
                      *, heads, head_dim, s_real):
    # One (batch element, query-row tile) per grid step.
    #   qkvq_ref : (1, Tq, 3D) — Q rows for this tile (1/sqrt(Dh) pre-folded into W_q/b_q)
    #   qkvk_ref : (1, S , 3D) — full K/V rows (block index constant over the inner axis)
    #   attn_sc  : (Tq, D) f32 VMEM scratch — each head writes its static lane slice
    D = heads * head_dim
    S = qkvk_ref.shape[1]
    if s_real < S:  # padded key columns -> large-negative additive mask (static at trace)
        key_mask = jnp.where(
            jax.lax.broadcasted_iota(jnp.int32, (1, S), 1) >= s_real,
            jnp.float32(-1e30), jnp.float32(0.0))
    for h in range(heads):
        hs = h * head_dim
        he = hs + head_dim
        q = qkvq_ref[0, :, hs:he]                        # (Tq, Dh) bf16, already scaled
        k = qkvk_ref[0, :, D + hs:D + he]                # (S , Dh) bf16
        v = qkvk_ref[0, :, 2 * D + hs:2 * D + he]        # (S , Dh) bf16
        s = jax.lax.dot_general(q, k, (((1,), (1,)), ((), ())),
                                preferred_element_type=jnp.float32)    # (Tq, S) f32
        if s_real < S:
            s = s + key_mask
        m = jnp.max(s, axis=-1, keepdims=True)
        p = jnp.exp(s - m)
        p = p * pl.reciprocal(jnp.sum(p, axis=-1, keepdims=True), approx=True)
        attn_sc[:, hs:he] = jnp.dot(p.astype(v.dtype), v,
                                    preferred_element_type=jnp.float32)  # (Tq, Dh) f32
    proj = jnp.dot(attn_sc[...].astype(pw_ref.dtype), pw_ref[...],
                   preferred_element_type=jnp.float32)
    proj = proj + pb_ref[...].astype(jnp.float32)
    o_ref[0] = (xres_ref[0].astype(jnp.float32) + proj).astype(o_ref.dtype)


def pallas_attention_block(qkv, x, proj_w, proj_b, *, heads, s_real, q_tile=Q_TILE):
    B, S, D3 = qkv.shape
    D = x.shape[-1]
    Dh = D // heads
    tq = min(q_tile, S)
    assert S % tq == 0, "caller pads S so the query tile divides it"
    return pl.pallas_call(
        functools.partial(_attn_proj_kernel, heads=heads, head_dim=Dh, s_real=s_real),
        out_shape=jax.ShapeDtypeStruct((B, S, D), x.dtype),
        grid=(B, S // tq),
        in_specs=[
            pl.BlockSpec((1, tq, D3), lambda b, qi: (b, qi, 0)),   # Q rows
            pl.BlockSpec((1, S, D3), lambda b, qi: (b, 0, 0)),     # full K/V (per batch)
            pl.BlockSpec((1, tq, D), lambda b, qi: (b, qi, 0)),    # residual rows
            _const_spec((D, D)),                                   # proj W (resident)
            _const_spec((1, D)),                                   # proj b
        ],
        out_specs=pl.BlockSpec((1, tq, D), lambda b, qi: (b, qi, 0)),
        scratch_shapes=[pltpu.VMEM((tq, D), jnp.float32)],
        compiler_params=_cparams("parallel", "parallel"),
    )(qkv, qkv, x, proj_w, proj_b.reshape(1, D))


def _bn_cls_kernel(x_ref, g_ref, b_ref, w_ref, cls_ref, *, eps):
    # BatchNorm1d (train mode, biased batch stats, f32) + Linear(bias=False) class tile.
    # BN'd feature is recomputed per class tile (tiny: B x D) so the class axis stays
    # "parallel"-safe across TensorCores; the x block index is constant -> DMA'd once.
    xf = x_ref[...].astype(jnp.float32)                                  # (B, D)
    mean = jnp.mean(xf, axis=0, keepdims=True)
    var = jnp.mean((xf - mean) ** 2, axis=0, keepdims=True)
    feat = (xf - mean) * jax.lax.rsqrt(var + eps)
    feat = feat * g_ref[...].astype(jnp.float32) + b_ref[...].astype(jnp.float32)
    cls = jnp.dot(feat.astype(w_ref.dtype), w_ref[...], preferred_element_type=jnp.float32)
    cls_ref[...] = cls.astype(cls_ref.dtype)           # f32 logits for the CE loss


def pallas_bn_classifier(x, gamma, beta, w_cls, *, eps=1e-5, n_tile=CLS_TILE):
    B, D = x.shape
    N = w_cls.shape[1]
    tn = min(n_tile, N)
    return pl.pallas_call(
        functools.partial(_bn_cls_kernel, eps=eps),
        out_shape=jax.ShapeDtypeStruct((B, N), jnp.float32),
        grid=(pl.cdiv(N, tn),),
        in_specs=[
            _const_spec((B, D)),
            _const_spec((1, D)),
            _const_spec((1, D)),
            pl.BlockSpec((D, tn), lambda n: (0, n)),
        ],
        out_specs=pl.BlockSpec((B, tn), lambda n: (0, n)),
        compiler_params=_cparams("parallel"),
    )(x, gamma.reshape(1, D), beta.reshape(1, D), w_cls)


# ------------------------------ parameters ----------------------------------

def fold_qk_scale(qkv_w, qkv_b, heads):
    """Fold 1/sqrt(Dh) into the Q columns of the fused QKV weight/bias.

    NOTE: when loading pretrained TransReID weights, apply the same folding once.
    """
    D = qkv_w.shape[0]
    scale = 1.0 / ((D // heads) ** 0.5)
    col_scale = jnp.where(jnp.arange(qkv_w.shape[1]) < D, scale, 1.0).astype(jnp.float32)
    w = (qkv_w.astype(jnp.float32) * col_scale[None, :]).astype(qkv_w.dtype)
    b = (qkv_b.astype(jnp.float32) * col_scale).astype(qkv_b.dtype)
    return w, b


def init_params(key, *, C, P, D, depth, mlp_hidden, num_classes, num_patches, heads):
    keys = jax.random.split(key, 4 + depth)

    def nrm(k, shape, std=0.02):
        return (std * jax.random.normal(k, shape)).astype(DTYPE)

    k_pe, k_cls, k_pos, k_clf = keys[0], keys[1], keys[2], keys[3]
    params = {
        "patch_w": nrm(k_pe, (C * P * P, D)),            # conv weight (D,C,P,P) flattened/T
        "patch_b": jnp.zeros((D,), DTYPE),
        "cls_token": nrm(k_cls, (1, 1, D)),
        "pos_embed": nrm(k_pos, (1, num_patches + 1, D)),
        "ln_g": jnp.ones((D,), DTYPE),
        "ln_b": jnp.zeros((D,), DTYPE),
        "bn_g": jnp.ones((D,), DTYPE),                   # weights_init_kaiming: BN weight = 1
        "bn_b": jnp.zeros((D,), DTYPE),                  # BN bias = 0 (frozen)
        "cls_w": nrm(k_clf, (D, num_classes), std=0.001),  # weights_init_classifier
        "blocks": [],
    }
    for i in range(depth):
        bk = jax.random.split(keys[4 + i], 4)
        qkv_w, qkv_b = fold_qk_scale(nrm(bk[0], (D, 3 * D)), jnp.zeros((3 * D,), DTYPE), heads)
        params["blocks"].append({
            "ln1_g": jnp.ones((D,), DTYPE), "ln1_b": jnp.zeros((D,), DTYPE),
            "qkv_w": qkv_w, "qkv_b": qkv_b,
            "proj_w": nrm(bk[1], (D, D)), "proj_b": jnp.zeros((D,), DTYPE),
            "ln2_g": jnp.ones((D,), DTYPE), "ln2_b": jnp.zeros((D,), DTYPE),
            "fc1_w": nrm(bk[2], (D, mlp_hidden)), "fc1_b": jnp.zeros((mlp_hidden,), DTYPE),
            "fc2_w": nrm(bk[3], (mlp_hidden, D)), "fc2_b": jnp.zeros((D,), DTYPE),
        })
    return params


# -------------------------------- forward -----------------------------------

def build_transformer_forward(params, x, *, patch, heads):
    B, C, H, W = x.shape
    P = patch
    D = params["patch_w"].shape[1]

    # --- patch embedding: stride==kernel conv -> im2col (pure layout) + tiled matmul ---
    patches = x.reshape(B, C, H // P, P, W // P, P)
    patches = patches.transpose(0, 2, 4, 1, 3, 5).reshape(
        B * (H // P) * (W // P), C * P * P)
    tok = pallas_linear(patches, params["patch_w"], params["patch_b"])
    tok = tok.reshape(B, -1, D)

    # --- cls token + positional embedding (cheap glue) ---
    cls_tok = jnp.broadcast_to(params["cls_token"], (B, 1, D)).astype(tok.dtype)
    xseq = jnp.concatenate([cls_tok, tok], axis=1) + params["pos_embed"].astype(tok.dtype)
    S_real = xseq.shape[1]

    # --- pad sequence so attention tiles are lane/sublane aligned (128-aligned for real
    #     ReID sizes S=197/211 -> 256). Padded key columns are masked in the attention
    #     kernel; every other op is row-wise, so the CLS row (row 0) is unaffected.
    S = _round_up(S_real, 128) if S_real > 128 else _round_up(S_real, 8)
    if S != S_real:
        xseq = jnp.pad(xseq, ((0, 0), (0, S - S_real), (0, 0)))
    M = B * S

    # --- transformer encoder blocks: 3 fused pallas_calls per block ---
    for blk in params["blocks"]:
        qkv = pallas_ln_linear(xseq.reshape(M, D), blk["ln1_g"], blk["ln1_b"],
                               blk["qkv_w"], blk["qkv_b"]).reshape(B, S, 3 * D)
        # TODO(synk): on v5e, fusing LN1+QKV into the attention kernel would also remove
        #             the (B,S,3D) HBM round-trip (~1.5 GB over 12 blocks at ReID sizes).
        xseq = pallas_attention_block(qkv, xseq, blk["proj_w"], blk["proj_b"],
                                      heads=heads, s_real=S_real)
        xseq = pallas_ln_mlp_residual(xseq.reshape(M, D), blk["ln2_g"], blk["ln2_b"],
                                      blk["fc1_w"], blk["fc1_b"],
                                      blk["fc2_w"], blk["fc2_b"]).reshape(B, S, D)

    # --- final LayerNorm on the CLS rows only (LN is per-row -> identical result) ---
    global_feat = pallas_layernorm(xseq[:, 0], params["ln_g"], params["ln_b"])   # (B, D)

    # --- bottleneck BatchNorm1d + Linear(bias=False) classifier, tiled over classes ---
    cls_score = pallas_bn_classifier(global_feat, params["bn_g"], params["bn_b"],
                                     params["cls_w"])
    # training-mode return of build_transformer.forward
    return cls_score, global_feat


# --------------------------------- main --------------------------------------

if __name__ == "__main__":
    # Toy, lane/sublane-friendly shapes: S = num_patches + 1 = 16 (mult of 8),
    # D = 128, mlp = 512, num_classes = 128 (lane-dense outputs everywhere).
    B, C, H, W = 2, 3, 40, 24
    P, D, depth, heads = 8, 128, 2, 4          # real model uses D=768, depth=12, heads=12
    num_classes = 128
    mlp_hidden = 4 * D
    num_patches = (H // P) * (W // P)          # 5 * 3 = 15

    key = jax.random.PRNGKey(0)
    kx, kp = jax.random.split(key)
    x = jax.random.normal(kx, (B, C, H, W), jnp.float32).astype(DTYPE)
    params = init_params(kp, C=C, P=P, D=D, depth=depth, mlp_hidden=mlp_hidden,
                         num_classes=num_classes, num_patches=num_patches, heads=heads)

    fwd = jax.jit(functools.partial(build_transformer_forward, patch=P, heads=heads))
    cls_score, global_feat = fwd(params, x)
    jax.block_until_ready((cls_score, global_feat))

    assert cls_score.shape == (B, num_classes)
    assert global_feat.shape == (B, D)
    assert bool(jnp.all(jnp.isfinite(cls_score.astype(jnp.float32))))
    assert bool(jnp.all(jnp.isfinite(global_feat.astype(jnp.float32))))
    print("KERNEL_OK")
</pallas_src>

<mosaic_0001>
module attributes {stable_mosaic.version = 11 : i64} {
  func.func @_ln_linear_kernel(%arg0: i32, %arg1: memref<32x128xbf16, #tpu.memory_space<vmem>>, %arg2: memref<1x128xbf16, #tpu.memory_space<vmem>>, %arg3: memref<1x128xbf16, #tpu.memory_space<vmem>>, %arg4: memref<128x384xbf16, #tpu.memory_space<vmem>>, %arg5: memref<1x384xbf16, #tpu.memory_space<vmem>>, %arg6: memref<32x384xbf16, #tpu.memory_space<vmem>>) attributes {dimension_semantics = [#tpu.dimension_semantics<parallel>], iteration_bounds = array<i64: 1>, scalar_prefetch = 0 : i64, scratch_operands = 0 : i64, tpu.core_type = #tpu.core_type<tc>, window_params = [{transform_indices = @transform_0, window_bounds = array<i64: 32, 128>}, {pipeline_mode = #tpu.pipeline_mode<synchronous>, transform_indices = @transform_1, window_bounds = array<i64: 1, 128>}, {pipeline_mode = #tpu.pipeline_mode<synchronous>, transform_indices = @transform_2, window_bounds = array<i64: 1, 128>}, {pipeline_mode = #tpu.pipeline_mode<synchronous>, transform_indices = @transform_3, window_bounds = array<i64: 128, 384>}, {pipeline_mode = #tpu.pipeline_mode<synchronous>, transform_indices = @transform_4, window_bounds = array<i64: 1, 384>}, {transform_indices = @transform_5, window_bounds = array<i64: 32, 384>}]} {
    %c0 = arith.constant 0 : index
    %c0_0 = arith.constant 0 : index
    %0 = vector.load %arg1[%c0, %c0_0] : memref<32x128xbf16, #tpu.memory_space<vmem>>, vector<32x128xbf16>
    %1 = arith.extf %0 : vector<32x128xbf16> to vector<32x128xf32>
    %cst = arith.constant dense<0.000000e+00> : vector<32xf32>
    %2 = vector.multi_reduction <add>, %1, %cst [1] : vector<32x128xf32> to vector<32xf32>
    %3 = vector.shape_cast %2 : vector<32xf32> to vector<32x1xf32>
    %cst_1 = arith.constant 1.280000e+02 : f32
    %4 = vector.broadcast %cst_1 : f32 to vector<32x1xf32>
    %5 = arith.divf %3, %4 : vector<32x1xf32>
    %6 = vector.broadcast %5 : vector<32x1xf32> to vector<32x128xf32>
    %7 = arith.subf %1, %6 : vector<32x128xf32>
    %8 = arith.mulf %7, %7 : vector<32x128xf32>
    %cst_2 = arith.constant dense<0.000000e+00> : vector<32xf32>
    %9 = vector.multi_reduction <add>, %8, %cst_2 [1] : vector<32x128xf32> to vector<32xf32>
    %10 = vector.shape_cast %9 : vector<32xf32> to vector<32x1xf32>
    %cst_3 = arith.constant 1.280000e+02 : f32
    %11 = vector.broadcast %cst_3 : f32 to vector<32x1xf32>
    %12 = arith.divf %10, %11 : vector<32x1xf32>
    %13 = vector.broadcast %5 : vector<32x1xf32> to vector<32x128xf32>
    %14 = arith.subf %1, %13 : vector<32x128xf32>
    %cst_4 = arith.constant 9.99999997E-7 : f32
    %15 = vector.broadcast %cst_4 : f32 to vector<32x1xf32>
    %16 = arith.addf %12, %15 : vector<32x1xf32>
    %17 = math.rsqrt %16 : vector<32x1xf32>
    %18 = vector.broadcast %17 : vector<32x1xf32> to vector<32x128xf32>
    %19 = arith.mulf %14, %18 : vector<32x128xf32>
    %c0_5 = arith.constant 0 : index
    %c0_6 = arith.constant 0 : index
    %20 = vector.load %arg2[%c0_5, %c0_6] : memref<1x128xbf16, #tpu.memory_space<vmem>>, vector<1x128xbf16>
    %21 = arith.extf %20 : vector<1x128xbf16> to vector<1x128xf32>
    %22 = vector.broadcast %21 : vector<1x128xf32> to vector<32x128xf32>
    %23 = arith.mulf %19, %22 : vector<32x128xf32>
    %c0_7 = arith.constant 0 : index
    %c0_8 = arith.constant 0 : index
    %24 = vector.load %arg3[%c0_7, %c0_8] : memref<1x128xbf16, #tpu.memory_space<vmem>>, vector<1x128xbf16>
    %25 = arith.extf %24 : vector<1x128xbf16> to vector<1x128xf32>
    %26 = vector.broadcast %25 : vector<1x128xf32> to vector<32x128xf32>
    %27 = arith.addf %23, %26 : vector<32x128xf32>
    %28 = arith.truncf %27 : vector<32x128xf32> to vector<32x128xbf16>
    %c0_9 = arith.constant 0 : index
    %c0_10 = arith.constant 0 : index
    %29 = vector.load %arg4[%c0_9, %c0_10] : memref<128x384xbf16, #tpu.memory_space<vmem>>, vector<128x384xbf16>
    %cst_11 = arith.constant dense<0.000000e+00> : vector<32x384xf32>
    %30 = tpu.matmul %28, %29, %cst_11 {dimension_numbers = #tpu.dot_dimension_numbers<[1], [0], [0], [1], [0, 0, 1, 1], [], []>} : vector<32x128xbf16>, vector<128x384xbf16>, vector<32x384xf32> -> vector<32x384xf32>
    %c0_12 = arith.constant 0 : index
    %c0_13 = arith.constant 0 : index
    %31 = vector.load %arg5[%c0_12, %c0_13] : memref<1x384xbf16, #tpu.memory_space<vmem>>, vector<1x384xbf16>
    %32 = arith.extf %31 : vector<1x384xbf16> to vector<1x384xf32>
    %33 = vector.broadcast %32 : vector<1x384xf32> to vector<32x384xf32>
    %34 = arith.addf %30, %33 : vector<32x384xf32>
    %35 = arith.truncf %34 : vector<32x384xf32> to vector<32x384xbf16>
    %c0_14 = arith.constant 0 : index
    %c0_15 = arith.constant 0 : index
    %36 = vector.load %arg6[%c0_14, %c0_15] : memref<32x384xbf16, #tpu.memory_space<vmem>>, vector<32x384xbf16>
    tpu.vector_store %arg6[%c0_14, %c0_15], %35 {strides = array<i32>} : memref<32x384xbf16, #tpu.memory_space<vmem>>, vector<32x384xbf16>,
    return
  }
  func.func @transform_0(%arg0: i32) -> (i32, i32) {
    %c0_i32 = arith.constant 0 : i32
    %c0_i32_0 = arith.constant 0 : i32
    return %arg0, %c0_i32 : i32, i32
  }
  func.func @transform_1(%arg0: i32) -> (i32, i32) {
    %c0_i32 = arith.constant 0 : i32
    %c0_i32_0 = arith.constant 0 : i32
    %c0_i32_1 = arith.constant 0 : i32
    return %c0_i32, %c0_i32_0 : i32, i32
  }
  func.func @transform_2(%arg0: i32) -> (i32, i32) {
    %c0_i32 = arith.constant 0 : i32
    %c0_i32_0 = arith.constant 0 : i32
    %c0_i32_1 = arith.constant 0 : i32
    return %c0_i32, %c0_i32_0 : i32, i32
  }
  func.func @transform_3(%arg0: i32) -> (i32, i32) {
    %c0_i32 = arith.constant 0 : i32
    %c0_i32_0 = arith.constant 0 : i32
    %c0_i32_1 = arith.constant 0 : i32
    return %c0_i32, %c0_i32_0 : i32, i32
  }
  func.func @transform_4(%arg0: i32) -> (i32, i32) {
    %c0_i32 = arith.constant 0 : i32
    %c0_i32_0 = arith.constant 0 : i32
    %c0_i32_1 = arith.constant 0 : i32
    return %c0_i32, %c0_i32_0 : i32, i32
  }
  func.func @transform_5(%arg0: i32) -> (i32, i32) {
    %c0_i32 = arith.constant 0 : i32
    %c0_i32_0 = arith.constant 0 : i32
    return %arg0, %c0_i32 : i32, i32
  }
}

module attributes {stable_mosaic.version = 11 : i64} {
  func.func @_linear_kernel(%arg0: i32, %arg1: memref<30x192xbf16, #tpu.memory_space<vmem>>, %arg2: memref<192x128xbf16, #tpu.memory_space<vmem>>, %arg3: memref<1x128xbf16, #tpu.memory_space<vmem>>, %arg4: memref<30x128xbf16, #tpu.memory_space<vmem>>) attributes {dimension_semantics = [#tpu.dimension_semantics<parallel>], iteration_bounds = array<i64: 1>, scalar_prefetch = 0 : i64, scratch_operands = 0 : i64, tpu.core_type = #tpu.core_type<tc>, window_params = [{transform_indices = @transform_0, window_bounds = array<i64: 30, 192>}, {pipeline_mode = #tpu.pipeline_mode<synchronous>, transform_indices = @transform_1, window_bounds = array<i64: 192, 128>}, {pipeline_mode = #tpu.pipeline_mode<synchronous>, transform_indices = @transform_2, window_bounds = array<i64: 1, 128>}, {transform_indices = @transform_3, window_bounds = array<i64: 30, 128>}]} {
    %c0 = arith.constant 0 : index
    %c0_0 = arith.constant 0 : index
    %0 = vector.load %arg1[%c0, %c0_0] : memref<30x192xbf16, #tpu.memory_space<vmem>>, vector<30x192xbf16>
    %c0_1 = arith.constant 0 : index
    %c0_2 = arith.constant 0 : index
    %1 = vector.load %arg2[%c0_1, %c0_2] : memref<192x128xbf16, #tpu.memory_space<vmem>>, vector<192x128xbf16>
    %cst = arith.constant dense<0.000000e+00> : vector<30x128xf32>
    %2 = tpu.matmul %0, %1, %cst {dimension_numbers = #tpu.dot_dimension_numbers<[1], [0], [0], [1], [0, 0, 1, 1], [], []>} : vector<30x192xbf16>, vector<192x128xbf16>, vector<30x128xf32> -> vector<30x128xf32>
    %c0_3 = arith.constant 0 : index
    %c0_4 = arith.constant 0 : index
    %3 = vector.load %arg3[%c0_3, %c0_4] : memref<1x128xbf16, #tpu.memory_space<vmem>>, vector<1x128xbf16>
    %4 = arith.extf %3 : vector<1x128xbf16> to vector<1x128xf32>
    %5 = vector.broadcast %4 : vector<1x128xf32> to vector<30x128xf32>
    %6 = arith.addf %2, %5 : vector<30x128xf32>
    %7 = arith.truncf %6 : vector<30x128xf32> to vector<30x128xbf16>
    %c0_5 = arith.constant 0 : index
    %c0_6 = arith.constant 0 : index
    %8 = vector.load %arg4[%c0_5, %c0_6] : memref<30x128xbf16, #tpu.memory_space<vmem>>, vector<30x128xbf16>
    tpu.vector_store %arg4[%c0_5, %c0_6], %7 {strides = array<i32>} : memref<30x128xbf16, #tpu.memory_space<vmem>>, vector<30x128xbf16>,
    return
  }
  func.func @transform_0(%arg0: i32) -> (i32, i32) {
    %c0_i32 = arith.constant 0 : i32
    %c0_i32_0 = arith.constant 0 : i32
    return %arg0, %c0_i32 : i32, i32
  }
  func.func @transform_1(%arg0: i32) -> (i32, i32) {
    %c0_i32 = arith.constant 0 : i32
    %c0_i32_0 = arith.constant 0 : i32
    %c0_i32_1 = arith.constant 0 : i32
    return %c0_i32, %c0_i32_0 : i32, i32
  }
  func.func @transform_2(%arg0: i32) -> (i32, i32) {
    %c0_i32 = arith.constant 0 : i32
    %c0_i32_0 = arith.constant 0 : i32
    %c0_i32_1 = arith.constant 0 : i32
    return %c0_i32, %c0_i32_0 : i32, i32
  }
  func.func @transform_3(%arg0: i32) -> (i32, i32) {
    %c0_i32 = arith.constant 0 : i32
    %c0_i32_0 = arith.constant 0 : i32
    return %arg0, %c0_i32 : i32, i32
  }
}

module attributes {stable_mosaic.version = 11 : i64} {
  func.func @_attn_proj_kernel(%arg0: i32, %arg1: i32, %arg2: memref<1x16x384xbf16, #tpu.memory_space<vmem>>, %arg3: memref<1x16x384xbf16, #tpu.memory_space<vmem>>, %arg4: memref<1x16x128xbf16, #tpu.memory_space<vmem>>, %arg5: memref<128x128xbf16, #tpu.memory_space<vmem>>, %arg6: memref<1x128xbf16, #tpu.memory_space<vmem>>, %arg7: memref<1x16x128xbf16, #tpu.memory_space<vmem>>, %arg8: memref<16x128xf32, #tpu.memory_space<vmem>>) attributes {dimension_semantics = [#tpu.dimension_semantics<parallel>, #tpu.dimension_semantics<parallel>], iteration_bounds = array<i64: 2, 1>, scalar_prefetch = 0 : i64, scratch_operands = 1 : i64, tpu.core_type = #tpu.core_type<tc>, window_params = [{transform_indices = @transform_0, window_bounds = array<i64: 1, 16, 384>}, {transform_indices = @transform_1, window_bounds = array<i64: 1, 16, 384>}, {transform_indices = @transform_2, window_bounds = array<i64: 1, 16, 128>}, {pipeline_mode = #tpu.pipeline_mode<synchronous>, transform_indices = @transform_3, window_bounds = array<i64: 128, 128>}, {pipeline_mode = #tpu.pipeline_mode<synchronous>, transform_indices = @transform_4, window_bounds = array<i64: 1, 128>}, {transform_indices = @transform_5, window_bounds = array<i64: 1, 16, 128>}]} {
    %c0 = arith.constant 0 : index
    %c0_0 = arith.constant 0 : index
    %c0_1 = arith.constant 0 : index
    %0 = vector.load %arg2[%c0, %c0_0, %c0_1] : memref<1x16x384xbf16, #tpu.memory_space<vmem>>, vector<1x16x32xbf16>
    %1 = vector.shape_cast %0 : vector<1x16x32xbf16> to vector<16x32xbf16>
    %c0_2 = arith.constant 0 : index
    %c0_3 = arith.constant 0 : index
    %c128 = arith.constant 128 : index
    %2 = vector.load %arg3[%c0_2, %c0_3, %c128] : memref<1x16x384xbf16, #tpu.memory_space<vmem>>, vector<1x16x32xbf16>
    %3 = vector.shape_cast %2 : vector<1x16x32xbf16> to vector<16x32xbf16>
    %c0_4 = arith.constant 0 : index
    %c0_5 = arith.constant 0 : index
    %c256 = arith.constant 256 : index
    %4 = vector.load %arg3[%c0_4, %c0_5, %c256] : memref<1x16x384xbf16, #tpu.memory_space<vmem>>, vector<1x16x32xbf16>
    %5 = vector.shape_cast %4 : vector<1x16x32xbf16> to vector<16x32xbf16>
    %cst = arith.constant dense<0.000000e+00> : vector<16x16xf32>
    %6 = tpu.matmul %1, %3, %cst {dimension_numbers = #tpu.dot_dimension_numbers<[1], [1], [0], [0], [0, 0, 1, 0], [], []>} : vector<16x32xbf16>, vector<16x32xbf16>, vector<16x16xf32> -> vector<16x16xf32>
    %cst_6 = arith.constant dense<0xFF800000> : vector<16xf32>
    %7 = vector.multi_reduction <maximumf>, %6, %cst_6 [1] : vector<16x16xf32> to vector<16xf32>
    %8 = vector.shape_cast %7 : vector<16xf32> to vector<16x1xf32>
    %9 = vector.broadcast %8 : vector<16x1xf32> to vector<16x16xf32>
    %10 = arith.subf %6, %9 : vector<16x16xf32>
    %11 = math.exp %10 : vector<16x16xf32>
    %cst_7 = arith.constant dense<0.000000e+00> : vector<16xf32>
    %12 = vector.multi_reduction <add>, %11, %cst_7 [1] : vector<16x16xf32> to vector<16xf32>
    %13 = vector.shape_cast %12 : vector<16xf32> to vector<16x1xf32>
    %14 = tpu.reciprocal %13 {approx = true} : vector<16x1xf32> -> vector<16x1xf32>
    %15 = vector.broadcast %14 : vector<16x1xf32> to vector<16x16xf32>
    %16 = arith.mulf %11, %15 : vector<16x16xf32>
    %17 = arith.truncf %16 : vector<16x16xf32> to vector<16x16xbf16>
    %cst_8 = arith.constant dense<0.000000e+00> : vector<16x32xf32>
    %18 = tpu.matmul %17, %5, %cst_8 {dimension_numbers = #tpu.dot_dimension_numbers<[1], [0], [0], [1], [0, 0, 1, 1], [], []>} : vector<16x16xbf16>, vector<16x32xbf16>, vector<16x32xf32> -> vector<16x32xf32>
    %c0_9 = arith.constant 0 : index
    %c0_10 = arith.constant 0 : index
    %19 = vector.load %arg8[%c0_9, %c0_10] : memref<16x128xf32, #tpu.memory_space<vmem>>, vector<16x32xf32>
    tpu.vector_store %arg8[%c0_9, %c0_10], %18 {strides = array<i32>} : memref<16x128xf32, #tpu.memory_space<vmem>>, vector<16x32xf32>,
    %c0_11 = arith.constant 0 : index
    %c0_12 = arith.constant 0 : index
    %c32 = arith.constant 32 : index
    %20 = vector.load %arg2[%c0_11, %c0_12, %c32] : memref<1x16x384xbf16, #tpu.memory_space<vmem>>, vector<1x16x32xbf16>
    %21 = vector.shape_cast %20 : vector<1x16x32xbf16> to vector<16x32xbf16>
    %c0_13 = arith.constant 0 : index
    %c0_14 = arith.constant 0 : index
    %c160 = arith.constant 160 : index
    %22 = vector.load %arg3[%c0_13, %c0_14, %c160] : memref<1x16x384xbf16, #tpu.memory_space<vmem>>, vector<1x16x32xbf16>
    %23 = vector.shape_cast %22 : vector<1x16x32xbf16> to vector<16x32xbf16>
    %c0_15 = arith.constant 0 : index
    %c0_16 = arith.constant 0 : index
    %c288 = arith.constant 288 : index
    %24 = vector.load %arg3[%c0_15, %c0_16, %c288] : memref<1x16x384xbf16, #tpu.memory_space<vmem>>, vector<1x16x32xbf16>
    %25 = vector.shape_cast %24 : vector<1x16x32xbf16> to vector<16x32xbf16>
    %cst_17 = arith.constant dense<0.000000e+00> : vector<16x16xf32>
    %26 = tpu.matmul %21, %23, %cst_17 {dimension_numbers = #tpu.dot_dimension_numbers<[1], [1], [0], [0], [0, 0, 1, 0], [], []>} : vector<16x32xbf16>, vector<16x32xbf16>, vector<16x16xf32> -> vector<16x16xf32>
    %cst_18 = arith.constant dense<0xFF800000> : vector<16xf32>
    %27 = vector.multi_reduction <maximumf>, %26, %cst_18 [1] : vector<16x16xf32> to vector<16xf32>
    %28 = vector.shape_cast %27 : vector<16xf32> to vector<16x1xf32>
    %29 = vector.broadcast %28 : vector<16x1xf32> to vector<16x16xf32>
    %30 = arith.subf %26, %29 : vector<16x16xf32>
    %31 = math.exp %30 : vector<16x16xf32>
    %cst_19 = arith.constant dense<0.000000e+00> : vector<16xf32>
    %32 = vector.multi_reduction <add>, %31, %cst_19 [1] : vector<16x16xf32> to vector<16xf32>
    %33 = vector.shape_cast %32 : vector<16xf32> to vector<16x1xf32>
    %34 = tpu.reciprocal %33 {approx = true} : vector<16x1xf32> -> vector<16x1xf32>
    %35 = vector.broadcast %34 : vector<16x1xf32> to vector<16x16xf32>
    %36 = arith.mulf %31, %35 : vector<16x16xf32>
    %37 = arith.truncf %36 : vector<16x16xf32> to vector<16x16xbf16>
    %cst_20 = arith.constant dense<0.000000e+00> : vector<16x32xf32>
    %38 = tpu.matmul %37, %25, %cst_20 {dimension_numbers = #tpu.dot_dimension_numbers<[1], [0], [0], [1], [0, 0, 1, 1], [], []>} : vector<16x16xbf16>, vector<16x32xbf16>, vector<16x32xf32> -> vector<16x32xf32>
    %c0_21 = arith.constant 0 : index
    %c32_22 = arith.constant 32 : index
    %39 = vector.load %arg8[%c0_21, %c32_22] : memref<16x128xf32, #tpu.memory_space<vmem>>, vector<16x32xf32>
    tpu.vector_store %arg8[%c0_21, %c32_22], %38 {strides = array<i32>} : memref<16x128xf32, #tpu.memory_space<vmem>>, vector<16x32xf32>,
    %c0_23 = arith.constant 0 : index
    %c0_24 = arith.constant 0 : index
    %c64 = arith.constant 64 : index
    %40 = vector.load %arg2[%c0_23, %c0_24, %c64] : memref<1x16x384xbf16, #tpu.memory_space<vmem>>, vector<1x16x32xbf16>
    %41 = vector.shape_cast %40 : vector<1x16x32xbf16> to vector<16x32xbf16>
    %c0_25 = arith.constant 0 : index
    %c0_26 = arith.constant 0 : index
    %c192 = arith.constant 192 : index
    %42 = vector.load %arg3[%c0_25, %c0_26, %c192] : memref<1x16x384xbf16, #tpu.memory_space<vmem>>, vector<1x16x32xbf16>
    %43 = vector.shape_cast %42 : vector<1x16x32xbf16> to vector<16x32xbf16>
    %c0_27 = arith.constant 0 : index
    %c0_28 = arith.constant 0 : index
    %c320 = arith.constant 320 : index
    %44 = vector.load %arg3[%c0_27, %c0_28, %c320] : memref<1x16x384xbf16, #tpu.memory_space<vmem>>, vector<1x16x32xbf16>
    %45 = vector.shape_cast %44 : vector<1x16x32xbf16> to vector<16x32xbf16>
    %cst_29 = arith.constant dense<0.000000e+00> : vector<16x16xf32>
    %46 = tpu.matmul %41, %43, %cst_29 {dimension_numbers = #tpu.dot_dimension_numbers<[1], [1], [0], [0], [0, 0, 1, 0], [], []>} : vector<16x32xbf16>, vector<16x32xbf16>, vector<16x16xf32> -> vector<16x16xf32>
    %cst_30 = arith.constant dense<0xFF800000> : vector<16xf32>
    %47 = vector.multi_reduction <maximumf>, %46, %cst_30 [1] : vector<16x16xf32> to vector<16xf32>
    %48 = vector.shape_cast %47 : vector<16xf32> to vector<16x1xf32>
    %49 = vector.broadcast %48 : vector<16x1xf32> to vector<16x16xf32>
    %50 = arith.subf %46, %49 : vector<16x16xf32>
    %51 = math.exp %50 : vector<16x16xf32>
    %cst_31 = arith.constant dense<0.000000e+00> : vector<16xf32>
    %52 = vector.multi_reduction <add>, %51, %cst_31 [1] : vector<16x16xf32> to vector<16xf32>
    %53 = vector.shape_cast %52 : vector<16xf32> to vector<16x1xf32>
    %54 = tpu.reciprocal %53 {approx = true} : vector<16x1xf32> -> vector<16x1xf32>
    %55 = vector.broadcast %54 : vector<16x1xf32> to vector<16x16xf32>
    %56 = arith.mulf %51, %55 : vector<16x16xf32>
    %57 = arith.truncf %56 : vector<16x16xf32> to vector<16x16xbf16>
    %cst_32 = arith.constant dense<0.000000e+00> : vector<16x32xf32>
    %58 = tpu.matmul %57, %45, %cst_32 {dimension_numbers = #tpu.dot_dimension_numbers<[1], [0], [0], [1], [0, 0, 1, 1], [], []>} : vector<16x16xbf16>, vector<16x32xbf16>, vector<16x32xf32> -> vector<16x32xf32>
    %c0_33 = arith.constant 0 : index
    %c64_34 = arith.constant 64 : index
    %59 = vector.load %arg8[%c0_33, %c64_34] : memref<16x128xf32, #tpu.memory_space<vmem>>, vector<16x32xf32>
    tpu.vector_store %arg8[%c0_33, %c64_34], %58 {strides = array<i32>} : memref<16x128xf32, #tpu.memory_space<vmem>>, vector<16x32xf32>,
    %c0_35 = arith.constant 0 : index
    %c0_36 = arith.constant 0 : index
    %c96 = arith.constant 96 : index
    %60 = vector.load %arg2[%c0_35, %c0_36, %c96] : memref<1x16x384xbf16, #tpu.memory_space<vmem>>, vector<1x16x32xbf16>
    %61 = vector.shape_cast %60 : vector<1x16x32xbf16> to vector<16x32xbf16>
    %c0_37 = arith.constant 0 : index
    %c0_38 = arith.constant 0 : index
    %c224 = arith.constant 224 : index
    %62 = vector.load %arg3[%c0_37, %c0_38, %c224] : memref<1x16x384xbf16, #tpu.memory_space<vmem>>, vector<1x16x32xbf16>
    %63 = vector.shape_cast %62 : vector<1x16x32xbf16> to vector<16x32xbf16>
    %c0_39 = arith.constant 0 : index
    %c0_40 = arith.constant 0 : index
    %c352 = arith.constant 352 : index
    %64 = vector.load %arg3[%c0_39, %c0_40, %c352] : memref<1x16x384xbf16, #tpu.memory_space<vmem>>, vector<1x16x32xbf16>
    %65 = vector.shape_cast %64 : vector<1x16x32xbf16> to vector<16x32xbf16>
    %cst_41 = arith.constant dense<0.000000e+00> : vector<16x16xf32>
    %66 = tpu.matmul %61, %63, %cst_41 {dimension_numbers = #tpu.dot_dimension_numbers<[1], [1], [0], [0], [0, 0, 1, 0], [], []>} : vector<16x32xbf16>, vector<16x32xbf16>, vector<16x16xf32> -> vector<16x16xf32>
    %cst_42 = arith.constant dense<0xFF800000> : vector<16xf32>
    %67 = vector.multi_reduction <maximumf>, %66, %cst_42 [1] : vector<16x16xf32> to vector<16xf32>
    %68 = vector.shape_cast %67 : vector<16xf32> to vector<16x1xf32>
    %69 = vector.broadcast %68 : vector<16x1xf32> to vector<16x16xf32>
    %70 = arith.subf %66, %69 : vector<16x16xf32>
    %71 = math.exp %70 : vector<16x16xf32>
    %cst_43 = arith.constant dense<0.000000e+00> : vector<16xf32>
    %72 = vector.multi_reduction <add>, %71, %cst_43 [1] : vector<16x16xf32> to vector<16xf32>
    %73 = vector.shape_cast %72 : vector<16xf32> to vector<16x1xf32>
    %74 = tpu.reciprocal %73 {approx = true} : vector<16x1xf32> -> vector<16x1xf32>
    %75 = vector.broadcast %74 : vector<16x1xf32> to vector<16x16xf32>
    %76 = arith.mulf %71, %75 : vector<16x16xf32>
    %77 = arith.truncf %76 : vector<16x16xf32> to vector<16x16xbf16>
    %cst_44 = arith.constant dense<0.000000e+00> : vector<16x32xf32>
    %78 = tpu.matmul %77, %65, %cst_44 {dimension_numbers = #tpu.dot_dimension_numbers<[1], [0], [0], [1], [0, 0, 1, 1], [], []>} : vector<16x16xbf16>, vector<16x32xbf16>, vector<16x32xf32> -> vector<16x32xf32>
    %c0_45 = arith.constant 0 : index
    %c96_46 = arith.constant 96 : index
    %79 = vector.load %arg8[%c0_45, %c96_46] : memref<16x128xf32, #tpu.memory_space<vmem>>, vector<16x32xf32>
    tpu.vector_store %arg8[%c0_45, %c96_46], %78 {strides = array<i32>} : memref<16x128xf32, #tpu.memory_space<vmem>>, vector<16x32xf32>,
    %c0_47 = arith.constant 0 : index
    %c0_48 = arith.constant 0 : index
    %80 = vector.load %arg8[%c0_47, %c0_48] : memref<16x128xf32, #tpu.memory_space<vmem>>, vector<16x128xf32>
    %81 = arith.truncf %80 : vector<16x128xf32> to vector<16x128xbf16>
    %c0_49 = arith.constant 0 : index
    %c0_50 = arith.constant 0 : index
    %82 = vector.load %arg5[%c0_49, %c0_50] : memref<128x128xbf16, #tpu.memory_space<vmem>>, vector<128x128xbf16>
    %cst_51 = arith.constant dense<0.000000e+00> : vector<16x128xf32>
    %83 = tpu.matmul %81, %82, %cst_51 {dimension_numbers = #tpu.dot_dimension_numbers<[1], [0], [0], [1], [0, 0, 1, 1], [], []>} : vector<16x128xbf16>, vector<128x128xbf16>, vector<16x128xf32> -> vector<16x128xf32>
    %c0_52 = arith.constant 0 : index
    %c0_53 = arith.constant 0 : index
    %84 = vector.load %arg6[%c0_52, %c0_53] : memref<1x128xbf16, #tpu.memory_space<vmem>>, vector<1x128xbf16>
    %85 = arith.extf %84 : vector<1x128xbf16> to vector<1x128xf32>
    %86 = vector.broadcast %85 : vector<1x128xf32> to vector<16x128xf32>
    %87 = arith.addf %83, %86 : vector<16x128xf32>
    %c0_54 = arith.constant 0 : index
    %c0_55 = arith.constant 0 : index
    %c0_56 = arith.constant 0 : index
    %88 = vector.load %arg4[%c0_54, %c0_55, %c0_56] : memref<1x16x128xbf16, #tpu.memory_space<vmem>>, vector<1x16x128xbf16>
    %89 = vector.shape_cast %88 : vector<1x16x128xbf16> to vector<16x128xbf16>
    %90 = arith.extf %89 : vector<16x128xbf16> to vector<16x128xf32>
    %91 = arith.addf %90, %87 : vector<16x128xf32>
    %92 = arith.truncf %91 : vector<16x128xf32> to vector<16x128xbf16>
    %c0_57 = arith.constant 0 : index
    %c0_58 = arith.constant 0 : index
    %c0_59 = arith.constant 0 : index
    %93 = vector.load %arg7[%c0_57, %c0_58, %c0_59] : memref<1x16x128xbf16, #tpu.memory_space<vmem>>, vector<1x16x128xbf16>
    %94 = vector.shape_cast %93 : vector<1x16x128xbf16> to vector<16x128xbf16>
    %95 = vector.shape_cast %92 : vector<16x128xbf16> to vector<1x16x128xbf16>
    tpu.vector_store %arg7[%c0_57, %c0_58, %c0_59], %95 {strides = array<i32>} : memref<1x16x128xbf16, #tpu.memory_space<vmem>>, vector<1x16x128xbf16>,
    return
  }
  func.func @transform_0(%arg0: i32, %arg1: i32) -> (i32, i32, i32) {
    %c0_i32 = arith.constant 0 : i32
    %c0_i32_0 = arith.constant 0 : i32
    return %arg0, %arg1, %c0_i32 : i32, i32, i32
  }
  func.func @transform_1(%arg0: i32, %arg1: i32) -> (i32, i32, i32) {
    %c0_i32 = arith.constant 0 : i32
    %c0_i32_0 = arith.constant 0 : i32
    %c0_i32_1 = arith.constant 0 : i32
    return %arg0, %c0_i32, %c0_i32_0 : i32, i32, i32
  }
  func.func @transform_2(%arg0: i32, %arg1: i32) -> (i32, i32, i32) {
    %c0_i32 = arith.constant 0 : i32
    %c0_i32_0 = arith.constant 0 : i32
    return %arg0, %arg1, %c0_i32 : i32, i32, i32
  }
  func.func @transform_3(%arg0: i32, %arg1: i32) -> (i32, i32) {
    %c0_i32 = arith.constant 0 : i32
    %c0_i32_0 = arith.constant 0 : i32
    %c0_i32_1 = arith.constant 0 : i32
    return %c0_i32, %c0_i32_0 : i32, i32
  }
  func.func @transform_4(%arg0: i32, %arg1: i32) -> (i32, i32) {
    %c0_i32 = arith.constant 0 : i32
    %c0_i32_0 = arith.constant 0 : i32
    %c0_i32_1 = arith.constant 0 : i32
    return %c0_i32, %c0_i32_0 : i32, i32
  }
  func.func @transform_5(%arg0: i32, %arg1: i32) -> (i32, i32, i32) {
    %c0_i32 = arith.constant 0 : i32
    %c0_i32_0 = arith.constant 0 : i32
    return %arg0, %arg1, %c0_i32 : i32, i32, i32
  }
}

module attributes {stable_mosaic.version = 11 : i64} {
  func.func @_ln_mlp_residual_kernel(%arg0: i32, %arg1: memref<32x128xbf16, #tpu.memory_space<vmem>>, %arg2: memref<1x128xbf16, #tpu.memory_space<vmem>>, %arg3: memref<1x128xbf16, #tpu.memory_space<vmem>>, %arg4: memref<128x512xbf16, #tpu.memory_space<vmem>>, %arg5: memref<1x512xbf16, #tpu.memory_space<vmem>>, %arg6: memref<512x128xbf16, #tpu.memory_space<vmem>>, %arg7: memref<1x128xbf16, #tpu.memory_space<vmem>>, %arg8: memref<32x128xbf16, #tpu.memory_space<vmem>>) attributes {dimension_semantics = [#tpu.dimension_semantics<parallel>], iteration_bounds = array<i64: 1>, scalar_prefetch = 0 : i64, scratch_operands = 0 : i64, tpu.core_type = #tpu.core_type<tc>, window_params = [{transform_indices = @transform_0, window_bounds = array<i64: 32, 128>}, {pipeline_mode = #tpu.pipeline_mode<synchronous>, transform_indices = @transform_1, window_bounds = array<i64: 1, 128>}, {pipeline_mode = #tpu.pipeline_mode<synchronous>, transform_indices = @transform_2, window_bounds = array<i64: 1, 128>}, {pipeline_mode = #tpu.pipeline_mode<synchronous>, transform_indices = @transform_3, window_bounds = array<i64: 128, 512>}, {pipeline_mode = #tpu.pipeline_mode<synchronous>, transform_indices = @transform_4, window_bounds = array<i64: 1, 512>}, {pipeline_mode = #tpu.pipeline_mode<synchronous>, transform_indices = @transform_5, window_bounds = array<i64: 512, 128>}, {pipeline_mode = #tpu.pipeline_mode<synchronous>, transform_indices = @transform_6, window_bounds = array<i64: 1, 128>}, {transform_indices = @transform_7, window_bounds = array<i64: 32, 128>}]} {
    %c0 = arith.constant 0 : index
    %c0_0 = arith.constant 0 : index
    %0 = vector.load %arg1[%c0, %c0_0] : memref<32x128xbf16, #tpu.memory_space<vmem>>, vector<32x128xbf16>
    %1 = arith.extf %0 : vector<32x128xbf16> to vector<32x128xf32>
    %cst = arith.constant dense<0.000000e+00> : vector<32xf32>
    %2 = vector.multi_reduction <add>, %1, %cst [1] : vector<32x128xf32> to vector<32xf32>
    %3 = vector.shape_cast %2 : vector<32xf32> to vector<32x1xf32>
    %cst_1 = arith.constant 1.280000e+02 : f32
    %4 = vector.broadcast %cst_1 : f32 to vector<32x1xf32>
    %5 = arith.divf %3, %4 : vector<32x1xf32>
    %6 = vector.broadcast %5 : vector<32x1xf32> to vector<32x128xf32>
    %7 = arith.subf %1, %6 : vector<32x128xf32>
    %8 = arith.mulf %7, %7 : vector<32x128xf32>
    %cst_2 = arith.constant dense<0.000000e+00> : vector<32xf32>
    %9 = vector.multi_reduction <add>, %8, %cst_2 [1] : vector<32x128xf32> to vector<32xf32>
    %10 = vector.shape_cast %9 : vector<32xf32> to vector<32x1xf32>
    %cst_3 = arith.constant 1.280000e+02 : f32
    %11 = vector.broadcast %cst_3 : f32 to vector<32x1xf32>
    %12 = arith.divf %10, %11 : vector<32x1xf32>
    %13 = vector.broadcast %5 : vector<32x1xf32> to vector<32x128xf32>
    %14 = arith.subf %1, %13 : vector<32x128xf32>
    %cst_4 = arith.constant 9.99999997E-7 : f32
    %15 = vector.broadcast %cst_4 : f32 to vector<32x1xf32>
    %16 = arith.addf %12, %15 : vector<32x1xf32>
    %17 = math.rsqrt %16 : vector<32x1xf32>
    %18 = vector.broadcast %17 : vector<32x1xf32> to vector<32x128xf32>
    %19 = arith.mulf %14, %18 : vector<32x128xf32>
    %c0_5 = arith.constant 0 : index
    %c0_6 = arith.constant 0 : index
    %20 = vector.load %arg2[%c0_5, %c0_6] : memref<1x128xbf16, #tpu.memory_space<vmem>>, vector<1x128xbf16>
    %21 = arith.extf %20 : vector<1x128xbf16> to vector<1x128xf32>
    %22 = vector.broadcast %21 : vector<1x128xf32> to vector<32x128xf32>
    %23 = arith.mulf %19, %22 : vector<32x128xf32>
    %c0_7 = arith.constant 0 : index
    %c0_8 = arith.constant 0 : index
    %24 = vector.load %arg3[%c0_7, %c0_8] : memref<1x128xbf16, #tpu.memory_space<vmem>>, vector<1x128xbf16>
    %25 = arith.extf %24 : vector<1x128xbf16> to vector<1x128xf32>
    %26 = vector.broadcast %25 : vector<1x128xf32> to vector<32x128xf32>
    %27 = arith.addf %23, %26 : vector<32x128xf32>
    %28 = arith.truncf %27 : vector<32x128xf32> to vector<32x128xbf16>
    %c0_9 = arith.constant 0 : index
    %c0_10 = arith.constant 0 : index
    %29 = vector.load %arg4[%c0_9, %c0_10] : memref<128x512xbf16, #tpu.memory_space<vmem>>, vector<128x512xbf16>
    %cst_11 = arith.constant dense<0.000000e+00> : vector<32x512xf32>
    %30 = tpu.matmul %28, %29, %cst_11 {dimension_numbers = #tpu.dot_dimension_numbers<[1], [0], [0], [1], [0, 0, 1, 1], [], []>} : vector<32x128xbf16>, vector<128x512xbf16>, vector<32x512xf32> -> vector<32x512xf32>
    %c0_12 = arith.constant 0 : index
    %c0_13 = arith.constant 0 : index
    %31 = vector.load %arg5[%c0_12, %c0_13] : memref<1x512xbf16, #tpu.memory_space<vmem>>, vector<1x512xbf16>
    %32 = arith.extf %31 : vector<1x512xbf16> to vector<1x512xf32>
    %33 = vector.broadcast %32 : vector<1x512xf32> to vector<32x512xf32>
    %34 = arith.addf %30, %33 : vector<32x512xf32>
    %cst_14 = arith.constant 5.000000e-01 : f32
    %35 = vector.broadcast %cst_14 : f32 to vector<32x512xf32>
    %36 = arith.mulf %35, %34 : vector<32x512xf32>
    %cst_15 = arith.constant 4.471500e-02 : f32
    %37 = vector.broadcast %cst_15 : f32 to vector<32x512xf32>
    %38 = arith.mulf %37, %34 : vector<32x512xf32>
    %39 = arith.mulf %38, %34 : vector<32x512xf32>
    %40 = arith.mulf %39, %34 : vector<32x512xf32>
    %41 = arith.addf %34, %40 : vector<32x512xf32>
    %cst_16 = arith.constant 0.797884583 : f32
    %42 = vector.broadcast %cst_16 : f32 to vector<32x512xf32>
    %43 = arith.mulf %42, %41 : vector<32x512xf32>
    %44 = math.tanh %43 : vector<32x512xf32>
    %cst_17 = arith.constant 1.000000e+00 : f32
    %45 = vector.broadcast %cst_17 : f32 to vector<32x512xf32>
    %46 = arith.addf %45, %44 : vector<32x512xf32>
    %47 = arith.mulf %36, %46 : vector<32x512xf32>
    %48 = arith.truncf %47 : vector<32x512xf32> to vector<32x512xbf16>
    %c0_18 = arith.constant 0 : index
    %c0_19 = arith.constant 0 : index
    %49 = vector.load %arg6[%c0_18, %c0_19] : memref<512x128xbf16, #tpu.memory_space<vmem>>, vector<512x128xbf16>
    %cst_20 = arith.constant dense<0.000000e+00> : vector<32x128xf32>
    %50 = tpu.matmul %48, %49, %cst_20 {dimension_numbers = #tpu.dot_dimension_numbers<[1], [0], [0], [1], [0, 0, 1, 1], [], []>} : vector<32x512xbf16>, vector<512x128xbf16>, vector<32x128xf32> -> vector<32x128xf32>
    %c0_21 = arith.constant 0 : index
    %c0_22 = arith.constant 0 : index
    %51 = vector.load %arg7[%c0_21, %c0_22] : memref<1x128xbf16, #tpu.memory_space<vmem>>, vector<1x128xbf16>
    %52 = arith.extf %51 : vector<1x128xbf16> to vector<1x128xf32>
    %53 = vector.broadcast %52 : vector<1x128xf32> to vector<32x128xf32>
    %54 = arith.addf %50, %53 : vector<32x128xf32>
    %55 = arith.addf %1, %54 : vector<32x128xf32>
    %56 = arith.truncf %55 : vector<32x128xf32> to vector<32x128xbf16>
    %c0_23 = arith.constant 0 : index
    %c0_24 = arith.constant 0 : index
    %57 = vector.load %arg8[%c0_23, %c0_24] : memref<32x128xbf16, #tpu.memory_space<vmem>>, vector<32x128xbf16>
    tpu.vector_store %arg8[%c0_23, %c0_24], %56 {strides = array<i32>} : memref<32x128xbf16, #tpu.memory_space<vmem>>, vector<32x128xbf16>,
    return
  }
  func.func @transform_0(%arg0: i32) -> (i32, i32) {
    %c0_i32 = arith.constant 0 : i32
    %c0_i32_0 = arith.constant 0 : i32
    return %arg0, %c0_i32 : i32, i32
  }
  func.func @transform_1(%arg0: i32) -> (i32, i32) {
    %c0_i32 = arith.constant 0 : i32
    %c0_i32_0 = arith.constant 0 : i32
    %c0_i32_1 = arith.constant 0 : i32
    return %c0_i32, %c0_i32_0 : i32, i32
  }
  func.func @transform_2(%arg0: i32) -> (i32, i32) {
    %c0_i32 = arith.constant 0 : i32
    %c0_i32_0 = arith.constant 0 : i32
    %c0_i32_1 = arith.constant 0 : i32
    return %c0_i32, %c0_i32_0 : i32, i32
  }
  func.func @transform_3(%arg0: i32) -> (i32, i32) {
    %c0_i32 = arith.constant 0 : i32
    %c0_i32_0 = arith.constant 0 : i32
    %c0_i32_1 = arith.constant 0 : i32
    return %c0_i32, %c0_i32_0 : i32, i32
  }
  func.func @transform_4(%arg0: i32) -> (i32, i32) {
    %c0_i32 = arith.constant 0 : i32
    %c0_i32_0 = arith.constant 0 : i32
    %c0_i32_1 = arith.constant 0 : i32
    return %c0_i32, %c0_i32_0 : i32, i32
  }
  func.func @transform_5(%arg0: i32) -> (i32, i32) {
    %c0_i32 = arith.constant 0 : i32
    %c0_i32_0 = arith.constant 0 : i32
    %c0_i32_1 = arith.constant 0 : i32
    return %c0_i32, %c0_i32_0 : i32, i32
  }
  func.func @transform_6(%arg0: i32) -> (i32, i32) {
    %c0_i32 = arith.constant 0 : i32
    %c0_i32_0 = arith.constant 0 : i32
    %c0_i32_1 = arith.constant 0 : i32
    return %c0_i32, %c0_i32_0 : i32, i32
  }
  func.func @transform_7(%arg0: i32) -> (i32, i32) {
    %c0_i32 = arith.constant 0 : i32
    %c0_i32_0 = arith.constant 0 : i32
    return %arg0, %c0_i32 : i32, i32
  }
}

module attributes {stable_mosaic.version = 11 : i64} {
  func.func @_layernorm_kernel(%arg0: i32, %arg1: memref<2x128xbf16, #tpu.memory_space<vmem>>, %arg2: memref<1x128xbf16, #tpu.memory_space<vmem>>, %arg3: memref<1x128xbf16, #tpu.memory_space<vmem>>, %arg4: memref<2x128xbf16, #tpu.memory_space<vmem>>) attributes {dimension_semantics = [#tpu.dimension_semantics<parallel>], iteration_bounds = array<i64: 1>, scalar_prefetch = 0 : i64, scratch_operands = 0 : i64, tpu.core_type = #tpu.core_type<tc>, window_params = [{transform_indices = @transform_0, window_bounds = array<i64: 2, 128>}, {pipeline_mode = #tpu.pipeline_mode<synchronous>, transform_indices = @transform_1, window_bounds = array<i64: 1, 128>}, {pipeline_mode = #tpu.pipeline_mode<synchronous>, transform_indices = @transform_2, window_bounds = array<i64: 1, 128>}, {transform_indices = @transform_3, window_bounds = array<i64: 2, 128>}]} {
    %c0 = arith.constant 0 : index
    %c0_0 = arith.constant 0 : index
    %0 = vector.load %arg1[%c0, %c0_0] : memref<2x128xbf16, #tpu.memory_space<vmem>>, vector<2x128xbf16>
    %1 = arith.extf %0 : vector<2x128xbf16> to vector<2x128xf32>
    %cst = arith.constant dense<0.000000e+00> : vector<2xf32>
    %2 = vector.multi_reduction <add>, %1, %cst [1] : vector<2x128xf32> to vector<2xf32>
    %3 = vector.shape_cast %2 : vector<2xf32> to vector<2x1xf32>
    %cst_1 = arith.constant 1.280000e+02 : f32
    %4 = vector.broadcast %cst_1 : f32 to vector<2x1xf32>
    %5 = arith.divf %3, %4 : vector<2x1xf32>
    %6 = vector.broadcast %5 : vector<2x1xf32> to vector<2x128xf32>
    %7 = arith.subf %1, %6 : vector<2x128xf32>
    %8 = arith.mulf %7, %7 : vector<2x128xf32>
    %cst_2 = arith.constant dense<0.000000e+00> : vector<2xf32>
    %9 = vector.multi_reduction <add>, %8, %cst_2 [1] : vector<2x128xf32> to vector<2xf32>
    %10 = vector.shape_cast %9 : vector<2xf32> to vector<2x1xf32>
    %cst_3 = arith.constant 1.280000e+02 : f32
    %11 = vector.broadcast %cst_3 : f32 to vector<2x1xf32>
    %12 = arith.divf %10, %11 : vector<2x1xf32>
    %13 = vector.broadcast %5 : vector<2x1xf32> to vector<2x128xf32>
    %14 = arith.subf %1, %13 : vector<2x128xf32>
    %cst_4 = arith.constant 9.99999997E-7 : f32
    %15 = vector.broadcast %cst_4 : f32 to vector<2x1xf32>
    %16 = arith.addf %12, %15 : vector<2x1xf32>
    %17 = math.rsqrt %16 : vector<2x1xf32>
    %18 = vector.broadcast %17 : vector<2x1xf32> to vector<2x128xf32>
    %19 = arith.mulf %14, %18 : vector<2x128xf32>
    %c0_5 = arith.constant 0 : index
    %c0_6 = arith.constant 0 : index
    %20 = vector.load %arg2[%c0_5, %c0_6] : memref<1x128xbf16, #tpu.memory_space<vmem>>, vector<1x128xbf16>
    %21 = arith.extf %20 : vector<1x128xbf16> to vector<1x128xf32>
    %22 = vector.broadcast %21 : vector<1x128xf32> to vector<2x128xf32>
    %23 = arith.mulf %19, %22 : vector<2x128xf32>
    %c0_7 = arith.constant 0 : index
    %c0_8 = arith.constant 0 : index
    %24 = vector.load %arg3[%c0_7, %c0_8] : memref<1x128xbf16, #tpu.memory_space<vmem>>, vector<1x128xbf16>
    %25 = arith.extf %24 : vector<1x128xbf16> to vector<1x128xf32>
    %26 = vector.broadcast %25 : vector<1x128xf32> to vector<2x128xf32>
    %27 = arith.addf %23, %26 : vector<2x128xf32>
    %28 = arith.truncf %27 : vector<2x128xf32> to vector<2x128xbf16>
    %c0_9 = arith.constant 0 : index
    %c0_10 = arith.constant 0 : index
    %29 = vector.load %arg4[%c0_9, %c0_10] : memref<2x128xbf16, #tpu.memory_space<vmem>>, vector<2x128xbf16>
    tpu.vector_store %arg4[%c0_9, %c0_10], %28 {strides = array<i32>} : memref<2x128xbf16, #tpu.memory_space<vmem>>, vector<2x128xbf16>,
    return
  }
  func.func @transform_0(%arg0: i32) -> (i32, i32) {
    %c0_i32 = arith.constant 0 : i32
    %c0_i32_0 = arith.constant 0 : i32
    return %arg0, %c0_i32 : i32, i32
  }
  func.func @transform_1(%arg0: i32) -> (i32, i32) {
    %c0_i32 = arith.constant 0 : i32
    %c0_i32_0 = arith.constant 0 : i32
    %c0_i32_1 = arith.constant 0 : i32
    return %c0_i32, %c0_i32_0 : i32, i32
  }
  func.func @transform_2(%arg0: i32) -> (i32, i32) {
    %c0_i32 = arith.constant 0 : i32
    %c0_i32_0 = arith.constant 0 : i32
    %c0_i32_1 = arith.constant 0 : i32
    return %c0_i32, %c0_i32_0 : i32, i32
  }
  func.func @transform_3(%arg0: i32) -> (i32, i32) {
    %c0_i32 = arith.constant 0 : i32
    %c0_i32_0 = arith.constant 0 : i32
    return %arg0, %c0_i32 : i32, i32
  }
}

module attributes {stable_mosaic.version = 11 : i64} {
  func.func @_bn_cls_kernel(%arg0: i32, %arg1: memref<2x128xbf16, #tpu.memory_space<vmem>>, %arg2: memref<1x128xbf16, #tpu.memory_space<vmem>>, %arg3: memref<1x128xbf16, #tpu.memory_space<vmem>>, %arg4: memref<128x128xbf16, #tpu.memory_space<vmem>>, %arg5: memref<2x128xf32, #tpu.memory_space<vmem>>) attributes {dimension_semantics = [#tpu.dimension_semantics<parallel>], iteration_bounds = array<i64: 1>, scalar_prefetch = 0 : i64, scratch_operands = 0 : i64, tpu.core_type = #tpu.core_type<tc>, window_params = [{pipeline_mode = #tpu.pipeline_mode<synchronous>, transform_indices = @transform_0, window_bounds = array<i64: 2, 128>}, {pipeline_mode = #tpu.pipeline_mode<synchronous>, transform_indices = @transform_1, window_bounds = array<i64: 1, 128>}, {pipeline_mode = #tpu.pipeline_mode<synchronous>, transform_indices = @transform_2, window_bounds = array<i64: 1, 128>}, {transform_indices = @transform_3, window_bounds = array<i64: 128, 128>}, {transform_indices = @transform_4, window_bounds = array<i64: 2, 128>}]} {
    %c0 = arith.constant 0 : index
    %c0_0 = arith.constant 0 : index
    %0 = vector.load %arg1[%c0, %c0_0] : memref<2x128xbf16, #tpu.memory_space<vmem>>, vector<2x128xbf16>
    %1 = arith.extf %0 : vector<2x128xbf16> to vector<2x128xf32>
    %cst = arith.constant dense<0.000000e+00> : vector<128xf32>
    %2 = vector.multi_reduction <add>, %1, %cst [0] : vector<2x128xf32> to vector<128xf32>
    %3 = vector.shape_cast %2 : vector<128xf32> to vector<1x128xf32>
    %cst_1 = arith.constant 2.000000e+00 : f32
    %4 = vector.broadcast %cst_1 : f32 to vector<1x128xf32>
    %5 = arith.divf %3, %4 : vector<1x128xf32>
    %6 = vector.broadcast %5 : vector<1x128xf32> to vector<2x128xf32>
    %7 = arith.subf %1, %6 : vector<2x128xf32>
    %8 = arith.mulf %7, %7 : vector<2x128xf32>
    %cst_2 = arith.constant dense<0.000000e+00> : vector<128xf32>
    %9 = vector.multi_reduction <add>, %8, %cst_2 [0] : vector<2x128xf32> to vector<128xf32>
    %10 = vector.shape_cast %9 : vector<128xf32> to vector<1x128xf32>
    %cst_3 = arith.constant 2.000000e+00 : f32
    %11 = vector.broadcast %cst_3 : f32 to vector<1x128xf32>
    %12 = arith.divf %10, %11 : vector<1x128xf32>
    %13 = vector.broadcast %5 : vector<1x128xf32> to vector<2x128xf32>
    %14 = arith.subf %1, %13 : vector<2x128xf32>
    %cst_4 = arith.constant 9.99999974E-6 : f32
    %15 = vector.broadcast %cst_4 : f32 to vector<1x128xf32>
    %16 = arith.addf %12, %15 : vector<1x128xf32>
    %17 = math.rsqrt %16 : vector<1x128xf32>
    %18 = vector.broadcast %17 : vector<1x128xf32> to vector<2x128xf32>
    %19 = arith.mulf %14, %18 : vector<2x128xf32>
    %c0_5 = arith.constant 0 : index
    %c0_6 = arith.constant 0 : index
    %20 = vector.load %arg2[%c0_5, %c0_6] : memref<1x128xbf16, #tpu.memory_space<vmem>>, vector<1x128xbf16>
    %21 = arith.extf %20 : vector<1x128xbf16> to vector<1x128xf32>
    %22 = vector.broadcast %21 : vector<1x128xf32> to vector<2x128xf32>
    %23 = arith.mulf %19, %22 : vector<2x128xf32>
    %c0_7 = arith.constant 0 : index
    %c0_8 = arith.constant 0 : index
    %24 = vector.load %arg3[%c0_7, %c0_8] : memref<1x128xbf16, #tpu.memory_space<vmem>>, vector<1x128xbf16>
    %25 = arith.extf %24 : vector<1x128xbf16> to vector<1x128xf32>
    %26 = vector.broadcast %25 : vector<1x128xf32> to vector<2x128xf32>
    %27 = arith.addf %23, %26 : vector<2x128xf32>
    %28 = arith.truncf %27 : vector<2x128xf32> to vector<2x128xbf16>
    %c0_9 = arith.constant 0 : index
    %c0_10 = arith.constant 0 : index
    %29 = vector.load %arg4[%c0_9, %c0_10] : memref<128x128xbf16, #tpu.memory_space<vmem>>, vector<128x128xbf16>
    %cst_11 = arith.constant dense<0.000000e+00> : vector<2x128xf32>
    %30 = tpu.matmul %28, %29, %cst_11 {dimension_numbers = #tpu.dot_dimension_numbers<[1], [0], [0], [1], [0, 0, 1, 1], [], []>} : vector<2x128xbf16>, vector<128x128xbf16>, vector<2x128xf32> -> vector<2x128xf32>
    %c0_12 = arith.constant 0 : index
    %c0_13 = arith.constant 0 : index
    %31 = vector.load %arg5[%c0_12, %c0_13] : memref<2x128xf32, #tpu.memory_space<vmem>>, vector<2x128xf32>
    tpu.vector_store %arg5[%c0_12, %c0_13], %30 {strides = array<i32>} : memref<2x128xf32, #tpu.memory_space<vmem>>, vector<2x128xf32>,
    return
  }
  func.func @transform_0(%arg0: i32) -> (i32, i32) {
    %c0_i32 = arith.constant 0 : i32
    %c0_i32_0 = arith.constant 0 : i32
    %c0_i32_1 = arith.constant 0 : i32
    return %c0_i32, %c0_i32_0 : i32, i32
  }
  func.func @transform_1(%arg0: i32) -> (i32, i32) {
    %c0_i32 = arith.constant 0 : i32
    %c0_i32_0 = arith.constant 0 : i32
    %c0_i32_1 = arith.constant 0 : i32
    return %c0_i32, %c0_i32_0 : i32, i32
  }
  func.func @transform_2(%arg0: i32) -> (i32, i32) {
    %c0_i32 = arith.constant 0 : i32
    %c0_i32_0 = arith.constant 0 : i32
    %c0_i32_1 = arith.constant 0 : i32
    return %c0_i32, %c0_i32_0 : i32, i32
  }
  func.func @transform_3(%arg0: i32) -> (i32, i32) {
    %c0_i32 = arith.constant 0 : i32
    %c0_i32_0 = arith.constant 0 : i32
    return %c0_i32, %arg0 : i32, i32
  }
  func.func @transform_4(%arg0: i32) -> (i32, i32) {
    %c0_i32 = arith.constant 0 : i32
    %c0_i32_0 = arith.constant 0 : i32
    return %c0_i32, %arg0 : i32, i32
  }
}

</mosaic_0001>

<llo_original>
// kernel: build_transformer_forward.10
$region0: #{build_transformer_forward.10}
  #allocation0 [shape = 'u32[]', space=smem, size = 0x4, offset = 0x4, fixed_abs, tag = 'smem constant byte address 0x4 - core index']
  #allocation1 [shape = 'u32[72,128]{1,0:T(1,128)}', space=vmem, size = 0x9000, scoped, tag = 'internal scratch']
  %s0 = inlined_call_operand.vmem [shape: bf16[32,128], index: 0, kind: input, shape index: {}]
  %s1 = inlined_call_operand.vmem [shape: bf16[1,128], index: 1, kind: input, shape index: {}]
  %s2 = inlined_call_operand.vmem [shape: bf16[1,128], index: 2, kind: input, shape index: {}]
  %s3 = inlined_call_operand.vmem [shape: bf16[128,384], index: 3, kind: input, shape index: {}]
  %s4 = inlined_call_operand.vmem [shape: bf16[1,384], index: 4, kind: input, shape index: {}]
  %s5 = inlined_call_operand.vmem [shape: bf16[32,384], index: 5, kind: output, shape index: {}]
  %s6 = sld [smem:[#allocation0]]
  $region30: #{build_transformer_forward.10} parent=0
    _
  %s8 = ssub.s32 1, %s6
  %s9 = scalar_select 0, %s8, %s6
  // Predicated region
  $region2: #{build_transformer_forward.10} parent=0 // pred_check
    _
  $region3: #{build_transformer_forward.10} parent=0 // pred_check_branch
    %11 = sbr.rel (0) target = $region5
  $region4: #{build_transformer_forward.10} parent=0 // pred_region
    _
  $region5: #{build_transformer_forward.10} parent=0 // pred_fallthru
    _
  // Predicated region
  $region6: #{build_transformer_forward.10} parent=0 // pred_check
    _
  $region7: #{build_transformer_forward.10} parent=0 // pred_check_branch
    %13 = sbr.rel (0) target = $region9
  $region8: #{build_transformer_forward.10} parent=0 // pred_region
    _
  $region9: #{build_transformer_forward.10} parent=0 // pred_fallthru
    _
  // Predicated region
  $region10: #{build_transformer_forward.10} parent=0 // pred_check
    _
  $region11: #{build_transformer_forward.10} parent=0 // pred_check_branch
    %15 = sbr.rel (0) target = $region13
  $region12: #{build_transformer_forward.10} parent=0 // pred_region
    _
  $region13: #{build_transformer_forward.10} parent=0 // pred_fallthru
    _
  // Predicated region
  $region14: #{build_transformer_forward.10} parent=0 // pred_check
    _
  $region15: #{build_transformer_forward.10} parent=0 // pred_check_branch
    %17 = sbr.rel (0) target = $region17
  $region16: #{build_transformer_forward.10} parent=0 // pred_region
    _
  $region17: #{build_transformer_forward.10} parent=0 // pred_fallthru
    _
  // Predicated region
  $region18: #{build_transformer_forward.10} parent=0 // pred_check
    _
  $region19: #{build_transformer_forward.10} parent=0 // pred_check_branch
    %19 = sbr.rel (0) target = $region21
  $region20: #{build_transformer_forward.10} parent=0 // pred_region
    _
  $region21: #{build_transformer_forward.10} parent=0 // pred_fallthru
    _
  %v20 = vld [vmem:[%s0] sm:$0xf]
  %v21 = vld [vmem:[%s0 + $0x4] sm:$0xf]
  %v22 = vld [vmem:[%s0 + $0x8] sm:$0xf]
  %v23 = vld [vmem:[%s0 + $0xc] sm:$0xf]
  %v24 = vunpack.c.l.bf16 %v20
  %v25 = vunpack.c.l.bf16 %v21
  %v26 = vunpack.c.l.bf16 %v22
  %v27 = vunpack.c.l.bf16 %v23
  %28 = vadd.xlane.f32.xlu0 %v24
  %v29 = vpop.xlane.xlu0 %28
  %30 = vadd.xlane.f32.xlu0 %v25
  %v31 = vpop.xlane.xlu0 %30
  %32 = vadd.xlane.f32.xlu0 %v26
  %v33 = vpop.xlane.xlu0 %32
  %34 = vadd.xlane.f32.xlu0 %v27
  %v35 = vpop.xlane.xlu0 %34
  %v36 = vrcp.pop 128.0
  %v37 = vmul.f32 128.0, %v36
  %v38 = vsub.f32 1.0, %v37
  %v39 = vmul.f32 %v36, %v38
  %v40 = vadd.f32 %v36, %v39
  %vm41 = vweird.f32 %v36
  %v42 = vsel %vm41, %v36, %v40
  %v43 = vmul.f32 %v29, %v42
  %v44 = vmul.f32 %v31, %v42
  %v45 = vmul.f32 %v33, %v42
  %v46 = vmul.f32 %v35, %v42
  %v47 = vsub.f32 %v24, %v43
  %v48 = vsub.f32 %v25, %v44
  %v49 = vsub.f32 %v26, %v45
  %v50 = vsub.f32 %v27, %v46
  %v51 = vmul.f32 %v47, %v47
  %v52 = vmul.f32 %v48, %v48
  %v53 = vmul.f32 %v49, %v49
  %v54 = vmul.f32 %v50, %v50
  %55 = vadd.xlane.f32.xlu0 %v51
  %v56 = vpop.xlane.xlu0 %55
  %57 = vadd.xlane.f32.xlu0 %v52
  %v58 = vpop.xlane.xlu0 %57
  %59 = vadd.xlane.f32.xlu0 %v53
  %v60 = vpop.xlane.xlu0 %59
  %61 = vadd.xlane.f32.xlu0 %v54
  %v62 = vpop.xlane.xlu0 %61
  %v63 = vmul.f32 %v56, %v42
  %v64 = vmul.f32 %v58, %v42
  %v65 = vmul.f32 %v60, %v42
  %v66 = vmul.f32 %v62, %v42
  %v67 = vadd.f32 %v63, 1e-06
  %v68 = vadd.f32 %v64, 1e-06
  %v69 = vadd.f32 %v65, 1e-06
  %v70 = vadd.f32 %v66, 1e-06
  %v71 = vrsqrt.pop %v67
  %v72 = vmul.f32 %v71, %v67
  %v73 = vmul.f32 %v72, %v71
  %v74 = vmul.f32 0.5, %v73
  %v75 = vsub.f32 1.5, %v74
  %v76 = vmul.f32 %v71, %v75
  %vm77 = vweird.f32 %v67
  %vm78 = vweird.f32 %v71
  %vm79 = vmor %vm77, %vm78
  %v80 = vsel %vm79, %v71, %v76
  %v81 = vrsqrt.pop %v68
  %v82 = vmul.f32 %v81, %v68
  %v83 = vmul.f32 %v82, %v81
  %v84 = vmul.f32 0.5, %v83
  %v85 = vsub.f32 1.5, %v84
  %v86 = vmul.f32 %v81, %v85
  %vm87 = vweird.f32 %v68
  %vm88 = vweird.f32 %v81
  %vm89 = vmor %vm87, %vm88
  %v90 = vsel %vm89, %v81, %v86
  %v91 = vrsqrt.pop %v69
  %v92 = vmul.f32 %v91, %v69
  %v93 = vmul.f32 %v92, %v91
  %v94 = vmul.f32 0.5, %v93
  %v95 = vsub.f32 1.5, %v94
  %v96 = vmul.f32 %v91, %v95
  %vm97 = vweird.f32 %v69
  %vm98 = vweird.f32 %v91
  %vm99 = vmor %vm97, %vm98
  %v100 = vsel %vm99, %v91, %v96
  %v101 = vrsqrt.pop %v70
  %v102 = vmul.f32 %v101, %v70
  %v103 = vmul.f32 %v102, %v101
  %v104 = vmul.f32 0.5, %v103
  %v105 = vsub.f32 1.5, %v104
  %v106 = vmul.f32 %v101, %v105
  %vm107 = vweird.f32 %v70
  %vm108 = vweird.f32 %v101
  %vm109 = vmor %vm107, %vm108
  %v110 = vsel %vm109, %v101, %v106
  %v111 = vmul.f32 %v47, %v80
  %v112 = vmul.f32 %v48, %v90
  %v113 = vmul.f32 %v49, %v100
  %v114 = vmul.f32 %v50, %v110
  %v115 = vld [vmem:[%s1] sm:$0x1]
  %v116 = vunpack.c.l.bf16 %v115
  %v117 = vperm.slane %v116, 0
  %v118 = vmul.f32 %v111, %v117
  %v119 = vmul.f32 %v112, %v117
  %v120 = vmul.f32 %v113, %v117
  %v121 = vmul.f32 %v114, %v117
  %v122 = vld [vmem:[%s2] sm:$0x1]
  %v123 = vunpack.c.l.bf16 %v122
  %v124 = vperm.slane %v123, 0
  %v125 = vadd.f32 %v118, %v124
  %v126 = vadd.f32 %v119, %v124
  %v127 = vadd.f32 %v120, %v124
  %v128 = vadd.f32 %v121, %v124
  %v129 = vpack.c.bf16 %v126, %v125
  %v130 = vpack.c.bf16 %v128, %v127
  %v131 = vld [vmem:[%s3] sm:$0xff]
  %v132 = vld [vmem:[%s3 + $0x8] sm:$0xf]
  %v133 = vld [vmem:[%s3 + $0xc] sm:$0xff]
  %v134 = vld [vmem:[%s3 + $0x14] sm:$0xf]
  %v135 = vld [vmem:[%s3 + $0x18] sm:$0xff]
  %v136 = vld [vmem:[%s3 + $0x20] sm:$0xf]
  %v137 = vld [vmem:[%s3 + $0x24] sm:$0xff]
  %v138 = vld [vmem:[%s3 + $0x2c] sm:$0xf]
  %v139 = vld [vmem:[%s3 + $0x30] sm:$0xff]
  %v140 = vld [vmem:[%s3 + $0x38] sm:$0xf]
  %v141 = vld [vmem:[%s3 + $0x3c] sm:$0xff]
  %v142 = vld [vmem:[%s3 + $0x44] sm:$0xf]
  %v143 = vld [vmem:[%s3 + $0x48] sm:$0xff]
  %v144 = vld [vmem:[%s3 + $0x50] sm:$0xf]
  %v145 = vld [vmem:[%s3 + $0x54] sm:$0xff]
  %v146 = vld [vmem:[%s3 + $0x5c] sm:$0xf]
  %v147 = vld [vmem:[%s3 + $0x60] sm:$0xff]
  %v148 = vld [vmem:[%s3 + $0x68] sm:$0xf]
  %v149 = vld [vmem:[%s3 + $0x6c] sm:$0xff]
  %v150 = vld [vmem:[%s3 + $0x74] sm:$0xf]
  %v151 = vld [vmem:[%s3 + $0x78] sm:$0xff]
  %v152 = vld [vmem:[%s3 + $0x80] sm:$0xf]
  %v153 = vld [vmem:[%s3 + $0x84] sm:$0xff]
  %v154 = vld [vmem:[%s3 + $0x8c] sm:$0xf]
  %v155 = vld [vmem:[%s3 + $0x90] sm:$0xff]
  %v156 = vld [vmem:[%s3 + $0x98] sm:$0xf]
  %v157 = vld [vmem:[%s3 + $0x9c] sm:$0xff]
  %v158 = vld [vmem:[%s3 + $0xa4] sm:$0xf]
  %v159 = vld [vmem:[%s3 + $0xa8] sm:$0xff]
  %v160 = vld [vmem:[%s3 + $0xb0] sm:$0xf]
  %v161 = vld [vmem:[%s3 + $0xb4] sm:$0xff]
  %v162 = vld [vmem:[%s3 + $0xbc] sm:$0xf]
  %v163 = vld [vmem:[%s4] sm:$0x7]
  %v164 = vunpack.c.l.bf16 %v163
  %v166 = vperm.slane %v164, 0
  %v167 = vperm.slane %v164, 2
  %v168 = vperm.slane %v164, 4
  %v172 = vperm.slane %v166, 0
  %v173 = vperm.slane %v167, 0
  %v174 = vperm.slane %v168, 0
  %v207 = vunpack.c.l.b16 %v131
  %v208 = vunpack.c.h.b16 %v131
  %v209 = vunpack.c.l.b16 %v132
  %v210 = vunpack.c.l.b16 %v133
  %v211 = vunpack.c.h.b16 %v133
  %v212 = vunpack.c.l.b16 %v134
  %v213 = vunpack.c.l.b16 %v135
  %v214 = vunpack.c.h.b16 %v135
  %v215 = vunpack.c.l.b16 %v136
  %v216 = vunpack.c.l.b16 %v137
  %v217 = vunpack.c.h.b16 %v137
  %v218 = vunpack.c.l.b16 %v138
  %v219 = vunpack.c.l.b16 %v139
  %v220 = vunpack.c.h.b16 %v139
  %v221 = vunpack.c.l.b16 %v140
  %v222 = vunpack.c.l.b16 %v141
  %v223 = vunpack.c.h.b16 %v141
  %v224 = vunpack.c.l.b16 %v142
  %v225 = vunpack.c.l.b16 %v143
  %v226 = vunpack.c.h.b16 %v143
  %v227 = vunpack.c.l.b16 %v144
  %v228 = vunpack.c.l.b16 %v145
  %v229 = vunpack.c.h.b16 %v145
  %v230 = vunpack.c.l.b16 %v146
  %v231 = vunpack.c.l.b16 %v147
  %v232 = vunpack.c.h.b16 %v147
  %v233 = vunpack.c.l.b16 %v148
  %v234 = vunpack.c.l.b16 %v149
  %v235 = vunpack.c.h.b16 %v149
  %v236 = vunpack.c.l.b16 %v150
  %v237 = vunpack.c.l.b16 %v151
  %v238 = vunpack.c.h.b16 %v151
  %v239 = vunpack.c.l.b16 %v152
  %v240 = vunpack.c.l.b16 %v153
  %v241 = vunpack.c.h.b16 %v153
  %v242 = vunpack.c.l.b16 %v154
  %v243 = vunpack.c.l.b16 %v155
  %v244 = vunpack.c.h.b16 %v155
  %v245 = vunpack.c.l.b16 %v156
  %v246 = vunpack.c.l.b16 %v157
  %v247 = vunpack.c.h.b16 %v157
  %v248 = vunpack.c.l.b16 %v158
  %v249 = vunpack.c.l.b16 %v159
  %v250 = vunpack.c.h.b16 %v159
  %v251 = vunpack.c.l.b16 %v160
  %v252 = vunpack.c.l.b16 %v161
  %v253 = vunpack.c.h.b16 %v161
  %v254 = vunpack.c.l.b16 %v162
  %v255 = vpack.c.b16 %v210, %v207
  %v256 = vpack.c.b16 %v211, %v208
  %v257 = vpack.c.b16 %v212, %v209
  %v258 = vpack.c.b16 %v216, %v213
  %v259 = vpack.c.b16 %v217, %v214
  %v260 = vpack.c.b16 %v218, %v215
  %v261 = vpack.c.b16 %v222, %v219
  %v262 = vpack.c.b16 %v223, %v220
  %v263 = vpack.c.b16 %v224, %v221
  %v264 = vpack.c.b16 %v228, %v225
  %v265 = vpack.c.b16 %v229, %v226
  %v266 = vpack.c.b16 %v230, %v227
  %v267 = vpack.c.b16 %v234, %v231
  %v268 = vpack.c.b16 %v235, %v232
  %v269 = vpack.c.b16 %v236, %v233
  %v270 = vpack.c.b16 %v240, %v237
  %v271 = vpack.c.b16 %v241, %v238
  %v272 = vpack.c.b16 %v242, %v239
  %v273 = vpack.c.b16 %v246, %v243
  %v274 = vpack.c.b16 %v247, %v244
  %v275 = vpack.c.b16 %v248, %v245
  %v276 = vpack.c.b16 %v252, %v249
  %v277 = vpack.c.b16 %v253, %v250
  %v278 = vpack.c.b16 %v254, %v251
  %303 = vmatpush.bf16.msra.mxu0 %v276
  %304 = vmatpush.bf16.msra.mxu0 %v273
  %305 = vmatpush.bf16.msra.mxu0 %v270
  %306 = vmatpush.bf16.msra.mxu0 %v267
  %307 = vmatpush.bf16.msra.mxu0 %v264
  %308 = vmatpush.bf16.msra.mxu0 %v261
  %309 = vmatpush.bf16.msra.mxu0 %v258
  %310 = vmatpush.bf16.msra.mxu0 %v255
  %311 = vmatmul.bf16.gmra.mxu0 %v129
  %v312 = vpop.f32.mrf.mxu0
  %v313 = vadd.f32 %v172, %v312
  %v314 = vpop.f32.mrf.mxu0
  %v315 = vadd.f32 %v172, %v314
  %316 = vmatmul.bf16.gmra.mxu0 %v130
  %v317 = vpop.f32.mrf.mxu0
  %v318 = vadd.f32 %v172, %v317
  %v319 = vpop.f32.mrf.mxu0
  %v320 = vadd.f32 %v172, %v319
  %321 = vdwg.mxu0
  %322 = vmatpush.bf16.msra.mxu0 %v277
  %323 = vmatpush.bf16.msra.mxu0 %v274
  %324 = vmatpush.bf16.msra.mxu0 %v271
  %325 = vmatpush.bf16.msra.mxu0 %v268
  %326 = vmatpush.bf16.msra.mxu0 %v265
  %327 = vmatpush.bf16.msra.mxu0 %v262
  %328 = vmatpush.bf16.msra.mxu0 %v259
  %329 = vmatpush.bf16.msra.mxu0 %v256
  %330 = vmatmul.bf16.gmra.mxu0 %v129
  %v331 = vpop.f32.mrf.mxu0
  %v332 = vadd.f32 %v173, %v331
  %v333 = vpop.f32.mrf.mxu0
  %v334 = vadd.f32 %v173, %v333
  %335 = vmatmul.bf16.gmra.mxu0 %v130
  %v336 = vpop.f32.mrf.mxu0
  %v337 = vadd.f32 %v173, %v336
  %v338 = vpop.f32.mrf.mxu0
  %v339 = vadd.f32 %v173, %v338
  %340 = vdwg.mxu0
  %341 = vmatpush.bf16.msra.mxu0 %v278
  %342 = vmatpush.bf16.msra.mxu0 %v275
  %343 = vmatpush.bf16.msra.mxu0 %v272
  %344 = vmatpush.bf16.msra.mxu0 %v269
  %345 = vmatpush.bf16.msra.mxu0 %v266
  %346 = vmatpush.bf16.msra.mxu0 %v263
  %347 = vmatpush.bf16.msra.mxu0 %v260
  %348 = vmatpush.bf16.msra.mxu0 %v257
  %349 = vmatmul.bf16.gmra.mxu0 %v129
  %v350 = vpop.f32.mrf.mxu0
  %v351 = vadd.f32 %v174, %v350
  %v352 = vpop.f32.mrf.mxu0
  %v353 = vadd.f32 %v174, %v352
  %354 = vmatmul.bf16.gmra.mxu0 %v130
  %v355 = vpop.f32.mrf.mxu0
  %v356 = vadd.f32 %v174, %v355
  %v357 = vpop.f32.mrf.mxu0
  %v358 = vadd.f32 %v174, %v357
  %359 = vdwg.mxu0
  %v360 = vpack.c.bf16 %v332, %v313
  %v361 = vpack.c.bf16 %v351, %v351
  %v362 = vpack.c.bf16 %v334, %v315
  %v363 = vpack.c.bf16 %v353, %v353
  %v364 = vpack.c.bf16 %v337, %v318
  %v365 = vpack.c.bf16 %v356, %v356
  %v366 = vpack.c.bf16 %v339, %v320
  %v367 = vpack.c.bf16 %v358, %v358
  %368 = vst [vmem:[%s5] sm:$0xff] %v360
  %369 = vst [vmem:[%s5 + $0x8] sm:$0xf] %v361
  %370 = vst [vmem:[%s5 + $0xc] sm:$0xff] %v362
  %371 = vst [vmem:[%s5 + $0x14] sm:$0xf] %v363
  %372 = vst [vmem:[%s5 + $0x18] sm:$0xff] %v364
  %373 = vst [vmem:[%s5 + $0x20] sm:$0xf] %v365
  %374 = vst [vmem:[%s5 + $0x24] sm:$0xff] %v366
  %375 = vst [vmem:[%s5 + $0x2c] sm:$0xf] %v367
  // Predicated region
  $region22: #{build_transformer_forward.10} parent=0 // pred_check
    _
  $region23: #{build_transformer_forward.10} parent=0 // pred_check_branch
    %377 = sbr.rel (0) target = $region25
  $region24: #{build_transformer_forward.10} parent=0 // pred_region
    _
  $region25: #{build_transformer_forward.10} parent=0 // pred_fallthru
    _
  // Predicated region
  $region26: #{build_transformer_forward.10} parent=0 // pred_check
    _
  $region27: #{build_transformer_forward.10} parent=0 // pred_check_branch
    %379 = sbr.rel (0) target = $region29
  $region28: #{build_transformer_forward.10} parent=0 // pred_region
    _
  $region29: #{build_transformer_forward.10} parent=0 // pred_fallthru
    _

// kernel: build_transformer_forward.9
$region0: #{build_transformer_forward.9}
  #allocation0 [shape = 'u32[]', space=smem, size = 0x4, offset = 0x4, fixed_abs, tag = 'smem constant byte address 0x4 - core index']
  #allocation1 [shape = 'u32[72,128]{1,0:T(1,128)}', space=vmem, size = 0x9000, scoped, tag = 'internal scratch']
  %s0 = inlined_call_operand.vmem [shape: bf16[30,192], index: 0, kind: input, shape index: {}]
  %s1 = inlined_call_operand.vmem [shape: bf16[192,128], index: 1, kind: input, shape index: {}]
  %s2 = inlined_call_operand.vmem [shape: bf16[1,128], index: 2, kind: input, shape index: {}]
  %s3 = inlined_call_operand.vmem [shape: bf16[30,128], index: 3, kind: output, shape index: {}]
  %s4 = sld [smem:[#allocation0]]
  $region22: #{build_transformer_forward.9} parent=0
    _
  %s6 = ssub.s32 1, %s4
  %s7 = scalar_select 0, %s6, %s4
  // Predicated region
  $region2: #{build_transformer_forward.9} parent=0 // pred_check
    _
  $region3: #{build_transformer_forward.9} parent=0 // pred_check_branch
    %9 = sbr.rel (0) target = $region5
  $region4: #{build_transformer_forward.9} parent=0 // pred_region
    _
  $region5: #{build_transformer_forward.9} parent=0 // pred_fallthru
    _
  // Predicated region
  $region6: #{build_transformer_forward.9} parent=0 // pred_check
    _
  $region7: #{build_transformer_forward.9} parent=0 // pred_check_branch
    %11 = sbr.rel (0) target = $region9
  $region8: #{build_transformer_forward.9} parent=0 // pred_region
    _
  $region9: #{build_transformer_forward.9} parent=0 // pred_fallthru
    _
  // Predicated region
  $region10: #{build_transformer_forward.9} parent=0 // pred_check
    _
  $region11: #{build_transformer_forward.9} parent=0 // pred_check_branch
    %13 = sbr.rel (0) target = $region13
  $region12: #{build_transformer_forward.9} parent=0 // pred_region
    _
  $region13: #{build_transformer_forward.9} parent=0 // pred_fallthru
    _
  %v15 = vld [vmem:[%s0] sm:$0xff]
  %v16 = vld [vmem:[%s0 + $0x8] sm:$0xff]
  %v17 = vld [vmem:[%s0 + $0x10] sm:$0xff]
  %v18 = vld [vmem:[%s0 + $0x18] sm:$0x77]
  %v19 = vld [vmem:[%s1] sm:$0xf]
  %v20 = vld [vmem:[%s1 + $0x4] sm:$0xf]
  %v21 = vld [vmem:[%s1 + $0x8] sm:$0xf]
  %v22 = vld [vmem:[%s1 + $0xc] sm:$0xf]
  %v23 = vld [vmem:[%s1 + $0x10] sm:$0xf]
  %v24 = vld [vmem:[%s1 + $0x14] sm:$0xf]
  %v25 = vld [vmem:[%s1 + $0x18] sm:$0xf]
  %v26 = vld [vmem:[%s1 + $0x1c] sm:$0xf]
  %v27 = vld [vmem:[%s1 + $0x20] sm:$0xf]
  %v28 = vld [vmem:[%s1 + $0x24] sm:$0xf]
  %v29 = vld [vmem:[%s1 + $0x28] sm:$0xf]
  %v30 = vld [vmem:[%s1 + $0x2c] sm:$0xf]
  %v31 = vld [vmem:[%s1 + $0x30] sm:$0xf]
  %v32 = vld [vmem:[%s1 + $0x34] sm:$0xf]
  %v33 = vld [vmem:[%s1 + $0x38] sm:$0xf]
  %v34 = vld [vmem:[%s1 + $0x3c] sm:$0xf]
  %v35 = vld [vmem:[%s1 + $0x40] sm:$0xf]
  %v36 = vld [vmem:[%s1 + $0x44] sm:$0xf]
  %v37 = vld [vmem:[%s1 + $0x48] sm:$0xf]
  %v38 = vld [vmem:[%s1 + $0x4c] sm:$0xf]
  %v39 = vld [vmem:[%s1 + $0x50] sm:$0xf]
  %v40 = vld [vmem:[%s1 + $0x54] sm:$0xf]
  %v41 = vld [vmem:[%s1 + $0x58] sm:$0xf]
  %v42 = vld [vmem:[%s1 + $0x5c] sm:$0xf]
  %v43 = vld [vmem:[%s2] sm:$0x1]
  %v44 = vunpack.c.l.bf16 %v43
  %v45 = vperm.slane %v44, 0
  %v50 = vunpack.c.l.b16 %v15
  %v51 = vunpack.c.h.b16 %v15
  %v52 = vunpack.c.l.b16 %v16
  %v53 = vunpack.c.h.b16 %v16
  %v54 = vunpack.c.l.b16 %v17
  %v55 = vunpack.c.h.b16 %v17
  %v56 = vunpack.c.l.b16 %v18
  %v57 = vunpack.c.h.b16 %v18
  %v58 = vpack.c.b16 %v52, %v50
  %v59 = vpack.c.b16 %v53, %v51
  %v60 = vpack.c.b16 %v56, %v54
  %v61 = vpack.c.b16 %v57, %v55
  %v88 = vunpack.c.l.b16 %v19
  %v89 = vunpack.c.l.b16 %v20
  %v90 = vunpack.c.l.b16 %v21
  %v91 = vunpack.c.l.b16 %v22
  %v92 = vunpack.c.l.b16 %v23
  %v93 = vunpack.c.l.b16 %v24
  %v94 = vunpack.c.l.b16 %v25
  %v95 = vunpack.c.l.b16 %v26
  %v96 = vunpack.c.l.b16 %v27
  %v97 = vunpack.c.l.b16 %v28
  %v98 = vunpack.c.l.b16 %v29
  %v99 = vunpack.c.l.b16 %v30
  %v100 = vunpack.c.l.b16 %v31
  %v101 = vunpack.c.l.b16 %v32
  %v102 = vunpack.c.l.b16 %v33
  %v103 = vunpack.c.l.b16 %v34
  %v104 = vunpack.c.l.b16 %v35
  %v105 = vunpack.c.l.b16 %v36
  %v106 = vunpack.c.l.b16 %v37
  %v107 = vunpack.c.l.b16 %v38
  %v108 = vunpack.c.l.b16 %v39
  %v109 = vunpack.c.l.b16 %v40
  %v110 = vunpack.c.l.b16 %v41
  %v111 = vunpack.c.l.b16 %v42
  %v112 = vpack.c.b16 %v89, %v88
  %v113 = vpack.c.b16 %v91, %v90
  %v114 = vpack.c.b16 %v93, %v92
  %v115 = vpack.c.b16 %v95, %v94
  %v116 = vpack.c.b16 %v97, %v96
  %v117 = vpack.c.b16 %v99, %v98
  %v118 = vpack.c.b16 %v101, %v100
  %v119 = vpack.c.b16 %v103, %v102
  %v120 = vpack.c.b16 %v105, %v104
  %v121 = vpack.c.b16 %v107, %v106
  %v122 = vpack.c.b16 %v109, %v108
  %v123 = vpack.c.b16 %v111, %v110
  %vm136 = vcmask 523264
  %v138 = vsel %vm136, %v59, 0
  %v141 = vsel %vm136, %v61, 0
  %143 = vmatpush.bf16.msra.mxu0 %v119
  %144 = vmatpush.bf16.msra.mxu0 %v118
  %145 = vmatpush.bf16.msra.mxu0 %v117
  %146 = vmatpush.bf16.msra.mxu0 %v116
  %147 = vmatpush.bf16.msra.mxu0 %v115
  %148 = vmatpush.bf16.msra.mxu0 %v114
  %149 = vmatpush.bf16.msra.mxu0 %v113
  %150 = vmatpush.bf16.msra.mxu0 %v112
  %151 = vmatmul.bf16.gmra.mxu0 %v58
  %v152 = vpop.f32.mrf.mxu0
  %v153 = vadd.f32 %v45, %v152
  %v154 = vpop.f32.mrf.mxu0
  %v155 = vadd.f32 %v45, %v154
  %156 = vmatmul.bf16.gmra.mxu0 %v60
  %v157 = vpop.f32.mrf.mxu0
  %v158 = vadd.f32 %v45, %v157
  %v159 = vpop.f32.mrf.mxu0
  %v160 = vadd.f32 %v45, %v159
  %161 = vdwg.mxu0
  %162 = vmatpush.bf16.msra.mxu0 0
  %163 = vmatpush.bf16.msra.mxu0 0
  %164 = vmatpush.bf16.msra.mxu0 0
  %165 = vmatpush.bf16.msra.mxu0 0
  %166 = vmatpush.bf16.msra.mxu0 %v123
  %167 = vmatpush.bf16.msra.mxu0 %v122
  %168 = vmatpush.bf16.msra.mxu0 %v121
  %169 = vmatpush.bf16.msra.mxu0 %v120
  %170 = vmatmul.bf16.gmra.mxu0 %v138
  %v171 = vpop.f32.mrf.mxu0
  %v172 = vadd.f32 %v153, %v171
  %v173 = vpop.f32.mrf.mxu0
  %v174 = vadd.f32 %v155, %v173
  %175 = vmatmul.bf16.gmra.mxu0 %v141
  %v176 = vpop.f32.mrf.mxu0
  %v177 = vadd.f32 %v158, %v176
  %v178 = vpop.f32.mrf.mxu0
  %v179 = vadd.f32 %v160, %v178
  %180 = vdwg.mxu0
  %v181 = vpack.c.bf16 %v172, %v172
  %v182 = vpack.c.bf16 %v174, %v174
  %v183 = vpack.c.bf16 %v177, %v177
  %v184 = vpack.c.bf16 %v179, %v179
  %185 = vst [vmem:[%s3] sm:$0xf] %v181
  %186 = vst [vmem:[%s3 + $0x4] sm:$0xf] %v182
  %187 = vst [vmem:[%s3 + $0x8] sm:$0xf] %v183
  %188 = vst [vmem:[%s3 + $0xc] sm:$0x7] %v184
  // Predicated region
  $region14: #{build_transformer_forward.9} parent=0 // pred_check
    _
  $region15: #{build_transformer_forward.9} parent=0 // pred_check_branch
    %190 = sbr.rel (0) target = $region17
  $region16: #{build_transformer_forward.9} parent=0 // pred_region
    _
  $region17: #{build_transformer_forward.9} parent=0 // pred_fallthru
    _
  // Predicated region
  $region18: #{build_transformer_forward.9} parent=0 // pred_check
    _
  $region19: #{build_transformer_forward.9} parent=0 // pred_check_branch
    %192 = sbr.rel (0) target = $region21
  $region20: #{build_transformer_forward.9} parent=0 // pred_region
    _
  $region21: #{build_transformer_forward.9} parent=0 // pred_fallthru
    _

// kernel: build_transformer_forward.11
$region0: #{build_transformer_forward.11}
  #allocation0 [shape = 'u32[]', space=smem, size = 0x4, offset = 0x4, fixed_abs, tag = 'smem constant byte address 0x4 - core index']
  #allocation1 [shape = 'u32[72,128]{1,0:T(1,128)}', space=vmem, size = 0x9000, scoped, tag = 'internal scratch']
  #allocation2 [shape = 'f32[16,128]{1,0:T(8,128)}', space=vmem, size = 0x2000, scoped, tag = 'scratch operand']
  %s0 = inlined_call_operand.vmem [shape: bf16[2,16,384], index: 0, kind: input, shape index: {}, may-alias: {0,1}]
  %s1 = inlined_call_operand.vmem [shape: bf16[2,16,384], index: 1, kind: input, shape index: {}, may-alias: {0,1}]
  %s2 = inlined_call_operand.vmem [shape: bf16[2,16,128], index: 2, kind: input, shape index: {}]
  %s3 = inlined_call_operand.vmem [shape: bf16[128,128], index: 3, kind: input, shape index: {}]
  %s4 = inlined_call_operand.vmem [shape: bf16[1,128], index: 4, kind: input, shape index: {}]
  %s5 = inlined_call_operand.vmem [shape: bf16[2,16,128], index: 5, kind: output, shape index: {}]
  %s6 = sld [smem:[#allocation0]]
  $region53: #{build_transformer_forward.11} parent=0
    _
  %s8 = ssub.s32 1, %s6
  %s9 = scalar_select 0, %s8, %s6
  loop: start=0, step=1, limit=4
  $region2: #{build_transformer_forward.11} parent=0 // loop_pre_header
    _
  $region3: #{build_transformer_forward.11} parent=0 // loop_header
    %s11 = sphi 0, %s15
    %p12 = scmp.ge.s32.totalorder %s11, 4
    %s18 = sphi 0, %s30
    %s19 = sphi 0, %s26
    %s20 = sphi 0, %s18
    %s21 = sphi 0, %s19
    %s22 = sphi 0, %s20
    %s23 = sphi 0, %s21
    %s35 = sphi 0, %s37
    %s38 = sphi 0, %s35
    %s39 = sphi 0, %s38
    %s55 = sphi 0, %s39
    %s61 = sphi 0, %s63
    %s64 = sphi 0, %s61
    %s65 = sphi 0, %s64
    %s81 = sphi 0, %s65
    %s89 = sphi 0, %s91
    %s92 = sphi 0, %s89
    %s93 = sphi 0, %s92
    %s109 = sphi 0, %s93
    %s113 = sphi 0, %s113
    %s115 = sphi 0, %s113
    %s116 = sphi 0, %s115
    %s130 = sphi 0, %s116
    %s134 = sphi 0, %s134
    %s136 = sphi 0, %s134
    %s137 = sphi 0, %s136
    %s151 = sphi 0, %s137
    %s159 = sphi 0, %s161
    %s162 = sphi 0, %s159
    %s163 = sphi 0, %s162
    %s179 = sphi 0, %s163
  $region4: #{build_transformer_forward.11} parent=0 // loop_header_branch
    %14 = sbr.rel (%p12) target = $region8
  $region5: #{build_transformer_forward.11} parent=0 // loop_body
    %s16 = ssub.s32 %s11, 1
    %s17 = ssub.s32 %s11, 2
    %s24 = sadd.s32 1, %s19
    %p25 = scmp.ge.s32.totalorder %s24, 1
    %s26 = scalar_select %p25, 0, %s24
    %s27 = sadd.s32 1, %s18
    %s28 = scalar_select %p25, %s27, %s18
    %p29 = scmp.ge.s32.totalorder %s28, 2
    %s30 = scalar_select %p29, 0, %s28
    %s31 = ssub.s32 %s18, %s30
    %s32 = ssub.s32 %s19, %s26
    %s33 = sor.u32 %s31, %s32
    %p34 = scmp.eq.s32.totalorder %s33, 0
    %s36 = sadd.s32 %s35, 1
    %s37 = scalar_select %p34, %s35, %s36
    %p40 = pneg %p34
    %p41 = scmp.eq.s32.totalorder %s11, 1
    %p42 = por %p40, %p41
    %p43 = scmp.ne.s32.totalorder %s35, %s38
    %p44 = scmp.eq.s32.totalorder %s11, 0
    %p45 = por %p43, %p44
    %p46 = scmp.ne.s32.totalorder %s35, %s38
    %p47 = scmp.eq.s32.totalorder %s16, 1
    %p48 = por %p46, %p47
    %p49 = scmp.ne.s32.totalorder %s38, %s39
    %p50 = scmp.eq.s32.totalorder %s16, 0
    %p51 = por %p49, %p50
    %p52 = scmp.ne.s32.totalorder %s38, %s39
    %p53 = scmp.eq.s32.totalorder %s17, 1
    %p54 = por %p52, %p53
    %p56 = scmp.ne.s32.totalorder %s39, %s55
    %p57 = scmp.eq.s32.totalorder %s17, 0
    %p58 = por %p56, %p57
    %s59 = ssub.s32 %s18, %s30
    %p60 = scmp.eq.s32.totalorder %s59, 0
    %s62 = sadd.s32 %s61, 1
    %s63 = scalar_select %p60, %s61, %s62
    %p66 = pneg %p60
    %p67 = scmp.eq.s32.totalorder %s11, 1
    %p68 = por %p66, %p67
    %p69 = scmp.ne.s32.totalorder %s61, %s64
    %p70 = scmp.eq.s32.totalorder %s11, 0
    %p71 = por %p69, %p70
    %p72 = scmp.ne.s32.totalorder %s61, %s64
    %p73 = scmp.eq.s32.totalorder %s16, 1
    %p74 = por %p72, %p73
    %p75 = scmp.ne.s32.totalorder %s64, %s65
    %p76 = scmp.eq.s32.totalorder %s16, 0
    %p77 = por %p75, %p76
    %p78 = scmp.ne.s32.totalorder %s64, %s65
    %p79 = scmp.eq.s32.totalorder %s17, 1
    %p80 = por %p78, %p79
    %p82 = scmp.ne.s32.totalorder %s65, %s81
    %p83 = scmp.eq.s32.totalorder %s17, 0
    %p84 = por %p82, %p83
    %s85 = ssub.s32 %s18, %s30
    %s86 = ssub.s32 %s19, %s26
    %s87 = sor.u32 %s85, %s86
    %p88 = scmp.eq.s32.totalorder %s87, 0
    %s90 = sadd.s32 %s89, 1
    %s91 = scalar_select %p88, %s89, %s90
    %p94 = pneg %p88
    %p95 = scmp.eq.s32.totalorder %s11, 1
    %p96 = por %p94, %p95
    %p97 = scmp.ne.s32.totalorder %s89, %s92
    %p98 = scmp.eq.s32.totalorder %s11, 0
    %p99 = por %p97, %p98
    %p100 = scmp.ne.s32.totalorder %s89, %s92
    %p101 = scmp.eq.s32.totalorder %s16, 1
    %p102 = por %p100, %p101
    %p103 = scmp.ne.s32.totalorder %s92, %s93
    %p104 = scmp.eq.s32.totalorder %s16, 0
    %p105 = por %p103, %p104
    %p106 = scmp.ne.s32.totalorder %s92, %s93
    %p107 = scmp.eq.s32.totalorder %s17, 1
    %p108 = por %p106, %p107
    %p110 = scmp.ne.s32.totalorder %s93, %s109
    %p111 = scmp.eq.s32.totalorder %s17, 0
    %p112 = por %p110, %p111
    %s114 = sadd.s32 %s113, 1
    %p117 = scmp.eq.s32.totalorder %s11, 1
    %p118 = scmp.ne.s32.totalorder %s113, %s115
    %p119 = scmp.eq.s32.totalorder %s11, 0
    %p120 = por %p118, %p119
    %p121 = scmp.ne.s32.totalorder %s113, %s115
    %p122 = scmp.eq.s32.totalorder %s16, 1
    %p123 = por %p121, %p122
    %p124 = scmp.ne.s32.totalorder %s115, %s116
    %p125 = scmp.eq.s32.totalorder %s16, 0
    %p126 = por %p124, %p125
    %p127 = scmp.ne.s32.totalorder %s115, %s116
    %p128 = scmp.eq.s32.totalorder %s17, 1
    %p129 = por %p127, %p128
    %p131 = scmp.ne.s32.totalorder %s116, %s130
    %p132 = scmp.eq.s32.totalorder %s17, 0
    %p133 = por %p131, %p132
    %s135 = sadd.s32 %s134, 1
    %p138 = scmp.eq.s32.totalorder %s11, 1
    %p139 = scmp.ne.s32.totalorder %s134, %s136
    %p140 = scmp.eq.s32.totalorder %s11, 0
    %p141 = por %p139, %p140
    %p142 = scmp.ne.s32.totalorder %s134, %s136
    %p143 = scmp.eq.s32.totalorder %s16, 1
    %p144 = por %p142, %p143
    %p145 = scmp.ne.s32.totalorder %s136, %s137
    %p146 = scmp.eq.s32.totalorder %s16, 0
    %p147 = por %p145, %p146
    %p148 = scmp.ne.s32.totalorder %s136, %s137
    %p149 = scmp.eq.s32.totalorder %s17, 1
    %p150 = por %p148, %p149
    %p152 = scmp.ne.s32.totalorder %s137, %s151
    %p153 = scmp.eq.s32.totalorder %s17, 0
    %p154 = por %p152, %p153
    %s155 = ssub.s32 %s18, %s30
    %s156 = ssub.s32 %s19, %s26
    %s157 = sor.u32 %s155, %s156
    %p158 = scmp.eq.s32.totalorder %s157, 0
    %s160 = sadd.s32 %s159, 1
    %s161 = scalar_select %p158, %s159, %s160
    %p164 = pneg %p158
    %p165 = scmp.eq.s32.totalorder %s11, 1
    %p166 = por %p164, %p165
    %p167 = scmp.ne.s32.totalorder %s159, %s162
    %p168 = scmp.eq.s32.totalorder %s11, 0
    %p169 = por %p167, %p168
    %p170 = scmp.ne.s32.totalorder %s159, %s162
    %p171 = scmp.eq.s32.totalorder %s16, 1
    %p172 = por %p170, %p171
    %p173 = scmp.ne.s32.totalorder %s162, %s163
    %p174 = scmp.eq.s32.totalorder %s16, 0
    %p175 = por %p173, %p174
    %p176 = scmp.ne.s32.totalorder %s162, %s163
    %p177 = scmp.eq.s32.totalorder %s17, 1
    %p178 = por %p176, %p177
    %p180 = scmp.ne.s32.totalorder %s163, %s179
    %p181 = scmp.eq.s32.totalorder %s17, 0
    %p182 = por %p180, %p181
    %p183 = scmp.le.s32.totalorder 1, %s11
    %p184 = scmp.lt.s32.totalorder %s11, 3
    %p185 = pnand %p183, %p184
    %p186 = pneg %p185
    // Predicated region
    $region9: #{build_transformer_forward.11} parent=5 // pred_check
      _
    $region10: #{build_transformer_forward.11} parent=5 // pred_check_branch
      %188 = sbr.rel (%p185) target = $region12
    $region11: #{build_transformer_forward.11} parent=5 // pred_region
      %s189 = ssub.s32 %s11, 1
      // Predicated region
      $region13: #{build_transformer_forward.11} parent=11 // pred_check
        %p190 = pneg %p126
      $region14: #{build_transformer_forward.11} parent=11 // pred_check_branch
        %192 = sbr.rel (%p190) target = $region16
      $region15: #{build_transformer_forward.11} parent=11 // pred_region
        _
      $region16: #{build_transformer_forward.11} parent=11 // pred_fallthru
        _
      // Predicated region
      $region17: #{build_transformer_forward.11} parent=11 // pred_check
        %p193 = pneg %p147
      $region18: #{build_transformer_forward.11} parent=11 // pred_check_branch
        %195 = sbr.rel (%p193) target = $region20
      $region19: #{build_transformer_forward.11} parent=11 // pred_region
        _
      $region20: #{build_transformer_forward.11} parent=11 // pred_fallthru
        _
    $region12: #{build_transformer_forward.11} parent=5 // pred_fallthru
      _
    %p196 = scmp.lt.s32.totalorder %s11, 2
    // Predicated region
    $region21: #{build_transformer_forward.11} parent=5 // pred_check
      %p197 = pneg %p196
    $region22: #{build_transformer_forward.11} parent=5 // pred_check_branch
      %199 = sbr.rel (%p197) target = $region24
    $region23: #{build_transformer_forward.11} parent=5 // pred_region
      // Predicated region
      $region25: #{build_transformer_forward.11} parent=23 // pred_check
        %p200 = pneg %p45
      $region26: #{build_transformer_forward.11} parent=23 // pred_check_branch
        %202 = sbr.rel (%p200) target = $region28
      $region27: #{build_transformer_forward.11} parent=23 // pred_region
        %s203 = smul.u32 2, %s19
        %p204 = scmp.lt.s32.totalorder %s18, 1
        %s205 = scalar_select %p204, %s18, 1
        %p206 = scmp.lt.s32.totalorder %s203, 1
        %s207 = scalar_select %p206, %s203, 1
        %s208 = smul.addr %s207, 3
        %s209 = smul.addr %s205, 6
        %s210 = sadd.s32 %s208, %s209
        %s211 = smul.addr %s210, 4
        %s212 = scalar_lea.vmem %s0, %s211
        %s213 = smul.u32 2, %s19
      $region28: #{build_transformer_forward.11} parent=23 // pred_fallthru
        _
      // Predicated region
      $region29: #{build_transformer_forward.11} parent=23 // pred_check
        %p214 = pneg %p71
      $region30: #{build_transformer_forward.11} parent=23 // pred_check_branch
        %216 = sbr.rel (%p214) target = $region32
      $region31: #{build_transformer_forward.11} parent=23 // pred_region
        %p217 = scmp.lt.s32.totalorder %s18, 1
        %s218 = scalar_select %p217, %s18, 1
        %s219 = smul.addr %s218, 6
        %s220 = smul.addr %s219, 4
        %s221 = scalar_lea.vmem %s1, %s220
      $region32: #{build_transformer_forward.11} parent=23 // pred_fallthru
        _
      // Predicated region
      $region33: #{build_transformer_forward.11} parent=23 // pred_check
        %p222 = pneg %p99
      $region34: #{build_transformer_forward.11} parent=23 // pred_check_branch
        %224 = sbr.rel (%p222) target = $region36
      $region35: #{build_transformer_forward.11} parent=23 // pred_region
        %s225 = smul.u32 2, %s19
        %p226 = scmp.lt.s32.totalorder %s18, 1
        %s227 = scalar_select %p226, %s18, 1
        %p228 = scmp.lt.s32.totalorder %s225, 1
        %s229 = scalar_select %p228, %s225, 1
        %s230 = smul.addr %s227, 2
        %s231 = sadd.s32 %s229, %s230
        %s232 = smul.addr %s231, 4
        %s233 = scalar_lea.vmem %s2, %s232
        %s234 = smul.u32 2, %s19
      $region36: #{build_transformer_forward.11} parent=23 // pred_fallthru
        _
    $region24: #{build_transformer_forward.11} parent=5 // pred_fallthru
      _
    %p235 = scmp.le.s32.totalorder 1, %s11
    %p236 = scmp.lt.s32.totalorder %s11, 3
    %p237 = pnand %p235, %p236
    %p238 = pneg %p237
    // Predicated region
    $region37: #{build_transformer_forward.11} parent=5 // pred_check
      _
    $region38: #{build_transformer_forward.11} parent=5 // pred_check_branch
      %240 = sbr.rel (%p237) target = $region40
    $region39: #{build_transformer_forward.11} parent=5 // pred_region
      %s241 = ssub.s32 %s11, 1
      %s242 = smul.u32 2, %s21
      %p243 = scmp.lt.s32.totalorder %s20, 1
      %s244 = scalar_select %p243, %s20, 1
      %p245 = scmp.lt.s32.totalorder %s242, 1
      %s246 = scalar_select %p245, %s242, 1
      %s247 = smul.addr %s246, 3
      %s248 = smul.addr %s244, 6
      %s249 = sadd.s32 %s247, %s248
      %s250 = smul.addr %s249, 4
      %s251 = scalar_lea.vmem %s0, %s250
      %p252 = pneg %p51
      %p253 = pneg %p48
      %p254 = scmp.lt.s32.totalorder %s20, 1
      %s255 = scalar_select %p254, %s20, 1
      %s256 = smul.addr %s255, 6
      %s257 = smul.addr %s256, 4
      %s258 = scalar_lea.vmem %s1, %s257
      %p259 = pneg %p77
      %p260 = pneg %p74
      %s261 = smul.u32 2, %s21
      %p262 = scmp.lt.s32.totalorder %s20, 1
      %s263 = scalar_select %p262, %s20, 1
      %p264 = scmp.lt.s32.totalorder %s261, 1
      %s265 = scalar_select %p264, %s261, 1
      %s266 = smul.addr %s263, 2
      %s267 = sadd.s32 %s265, %s266
      %s268 = smul.addr %s267, 4
      %s269 = scalar_lea.vmem %s2, %s268
      %p270 = pneg %p105
      %p271 = pneg %p102
      %p272 = pneg %p126
      %p273 = pneg %p123
      %p274 = pneg %p147
      %p275 = pneg %p144
      %p276 = pneg %p175
      %p277 = pneg %p172
      %s278 = smul.u32 2, %s21
      %p279 = scmp.lt.s32.totalorder %s20, 1
      %s280 = scalar_select %p279, %s20, 1
      %p281 = scmp.lt.s32.totalorder %s278, 1
      %s282 = scalar_select %p281, %s278, 1
      %s283 = smul.addr %s280, 2
      %s284 = sadd.s32 %s282, %s283
      %s285 = smul.addr %s284, 4
      %s286 = scalar_lea.vmem %s5, %s285
      %s287 = smul.u32 2, %s21
      %p288 = scmp.lt.s32.totalorder %s20, 1
      %s289 = scalar_select %p288, %s20, 1
      %p290 = scmp.lt.s32.totalorder %s287, 1
      %s291 = scalar_select %p290, %s287, 1
      %s292 = smul.addr %s291, 3
      %s293 = smul.addr %s289, 6
      %s294 = sadd.s32 %s292, %s293
      %s295 = smul.addr %s294, 4
      %s296 = scalar_lea.vmem %s0, %s295
      %s297 = smul.u32 2, %s21
      %p298 = scmp.lt.s32.totalorder %s20, 1
      %s299 = scalar_select %p298, %s20, 1
      %s300 = smul.addr %s299, 6
      %s301 = smul.addr %s300, 4
      %s302 = scalar_lea.vmem %s1, %s301
      %s303 = smul.u32 2, %s21
      %p304 = scmp.lt.s32.totalorder %s20, 1
      %s305 = scalar_select %p304, %s20, 1
      %p306 = scmp.lt.s32.totalorder %s303, 1
      %s307 = scalar_select %p306, %s303, 1
      %s308 = smul.addr %s305, 2
      %s309 = sadd.s32 %s307, %s308
      %s310 = smul.addr %s309, 4
      %s311 = scalar_lea.vmem %s2, %s310
      %s312 = smul.u32 2, %s21
      %s313 = smul.u32 2, %s21
      %p314 = scmp.lt.s32.totalorder %s20, 1
      %s315 = scalar_select %p314, %s20, 1
      %p316 = scmp.lt.s32.totalorder %s313, 1
      %s317 = scalar_select %p316, %s313, 1
      %s318 = smul.addr %s315, 2
      %s319 = sadd.s32 %s317, %s318
      %s320 = smul.addr %s319, 4
      %s321 = scalar_lea.vmem %s5, %s320
      %s322 = smul.u32 2, %s21
      %v324 = vld [vmem:[%s296] sm:$0xf]
      %v325 = vld [vmem:[%s296 + $0xc] sm:$0xf]
      %v326 = vld [vmem:[%s302 + $0x4] sm:$0xf]
      %v327 = vld [vmem:[%s302 + $0x10] sm:$0xf]
      %v328 = vld [vmem:[%s302 + $0x8] sm:$0xf]
      %v329 = vld [vmem:[%s302 + $0x14] sm:$0xf]
      %v332 = vunpack.c.l.b16 %v324
      %v333 = vunpack.c.l.b16 %v325
      %v334 = vpack.c.b16 %v333, %v332
      %v337 = vunpack.c.l.b16 %v326
      %v338 = vunpack.c.l.b16 %v327
      %v339 = vpack.c.b16 %v338, %v337
      %vm340 = vcmask 261120
      %v342 = vsel %vm340, %v334, 0
      %v345 = vsel %vm340, %v339, 0
      %347 = vmatpush.bf16.xpose.msra.mxu0 0
      %348 = vmatpush.bf16.xpose.msra.mxu0 0
      %349 = vmatpush.bf16.xpose.msra.mxu0 0
      %350 = vmatpush.bf16.xpose.msra.mxu0 0
      %351 = vmatpush.bf16.xpose.msra.mxu0 0
      %352 = vmatpush.bf16.xpose.msra.mxu0 0
      %353 = vmatpush.bf16.xpose.msra.mxu0 0
      %354 = vmatpush.bf16.xpose.msra.mxu0 %v345
      %355 = vmatmul.bf16.gmra.mxu0 %v342
      %v356 = vpop.f32.mrf.mxu0
      %v357 = vadd.f32 0.0, %v356
      %v358 = vpop.f32.mrf.mxu0
      %v359 = vadd.f32 0.0, %v358
      %360 = vdwg.mxu0
      %vm361 = vcmask 130048
      %v362 = vsel %vm361, %v357, -inf
      %363 = vmax.xlane.f32.xlu0 %v362
      %v364 = vpop.xlane.xlu0 %363
      %v365 = vsel %vm361, %v359, -inf
      %366 = vmax.xlane.f32.xlu0 %v365
      %v367 = vpop.xlane.xlu0 %366
      %v368 = vsub.f32 %v357, %v364
      %v369 = vsub.f32 %v359, %v367
      %v370 = vmul.f32 %v368, 1.442695
      %v371 = vpow.pop %v370
      %v372 = vmul.f32 %v369, 1.442695
      %v373 = vpow.pop %v372
      %v374 = vsel %vm361, %v371, 0.0
      %375 = vadd.xlane.f32.xlu0 %v374
      %v376 = vpop.xlane.xlu0 %375
      %v377 = vsel %vm361, %v373, 0.0
      %378 = vadd.xlane.f32.xlu0 %v377
      %v379 = vpop.xlane.xlu0 %378
      %v380 = vrcp.pop %v376
      %v381 = vrcp.pop %v379
      %v382 = vmul.f32 %v371, %v380
      %v383 = vmul.f32 %v373, %v381
      %v384 = vpack.c.bf16 %v383, %v382
      %v387 = vunpack.c.l.b16 %v328
      %v388 = vunpack.c.l.b16 %v329
      %v389 = vpack.c.b16 %v388, %v387
      %v392 = vsel %vm361, %v384, 0
      %394 = vmatpush.bf16.msra.mxu0 0
      %395 = vmatpush.bf16.msra.mxu0 0
      %396 = vmatpush.bf16.msra.mxu0 0
      %397 = vmatpush.bf16.msra.mxu0 0
      %398 = vmatpush.bf16.msra.mxu0 0
      %399 = vmatpush.bf16.msra.mxu0 0
      %400 = vmatpush.bf16.msra.mxu0 0
      %401 = vmatpush.bf16.msra.mxu0 %v389
      %402 = vmatmul.bf16.gmra.mxu0 %v392
      %v403 = vpop.f32.mrf.mxu0
      %v404 = vadd.f32 0.0, %v403
      %v405 = vpop.f32.mrf.mxu0
      %v406 = vadd.f32 0.0, %v405
      %407 = vdwg.mxu0
      %408 = vst.msk [vmem:[#allocation2] sm:$0xff] %vm340, %v404
      %409 = vst.msk [vmem:[#allocation2 + $0x8] sm:$0xff] %vm340, %v406
      %v410 = vld [vmem:[%s296] sm:$0xf]
      %v411 = vld [vmem:[%s296 + $0xc] sm:$0xf]
      %v412 = vld [vmem:[%s302 + $0x4] sm:$0xf]
      %v413 = vld [vmem:[%s302 + $0x10] sm:$0xf]
      %v414 = vld [vmem:[%s302 + $0x8] sm:$0xf]
      %v415 = vld [vmem:[%s302 + $0x14] sm:$0xf]
      %v418 = vunpack.c.l.b16 %v410
      %v419 = vunpack.c.l.b16 %v411
      %v420 = vpack.c.b16 %v419, %v418
      %421 = vrot.lane.b32.xlu0 %v420, 96
      %v422 = vpop.permute.xlu0 %421
      %v425 = vunpack.c.l.b16 %v412
      %v426 = vunpack.c.l.b16 %v413
      %v427 = vpack.c.b16 %v426, %v425
      %428 = vrot.lane.b32.xlu0 %v427, 96
      %v429 = vpop.permute.xlu0 %428
      %v431 = vsel %vm340, %v422, 0
      %v434 = vsel %vm340, %v429, 0
      %436 = vmatpush.bf16.xpose.msra.mxu0 0
      %437 = vmatpush.bf16.xpose.msra.mxu0 0
      %438 = vmatpush.bf16.xpose.msra.mxu0 0
      %439 = vmatpush.bf16.xpose.msra.mxu0 0
      %440 = vmatpush.bf16.xpose.msra.mxu0 0
      %441 = vmatpush.bf16.xpose.msra.mxu0 0
      %442 = vmatpush.bf16.xpose.msra.mxu0 0
      %443 = vmatpush.bf16.xpose.msra.mxu0 %v434
      %444 = vmatmul.bf16.gmra.mxu0 %v431
      %v445 = vpop.f32.mrf.mxu0
      %v446 = vadd.f32 0.0, %v445
      %v447 = vpop.f32.mrf.mxu0
      %v448 = vadd.f32 0.0, %v447
      %449 = vdwg.mxu0
      %v450 = vsel %vm361, %v446, -inf
      %451 = vmax.xlane.f32.xlu0 %v450
      %v452 = vpop.xlane.xlu0 %451
      %v453 = vsel %vm361, %v448, -inf
      %454 = vmax.xlane.f32.xlu0 %v453
      %v455 = vpop.xlane.xlu0 %454
      %v456 = vsub.f32 %v446, %v452
      %v457 = vsub.f32 %v448, %v455
      %v458 = vmul.f32 %v456, 1.442695
      %v459 = vpow.pop %v458
      %v460 = vmul.f32 %v457, 1.442695
      %v461 = vpow.pop %v460
      %v462 = vsel %vm361, %v459, 0.0
      %463 = vadd.xlane.f32.xlu0 %v462
      %v464 = vpop.xlane.xlu0 %463
      %v465 = vsel %vm361, %v461, 0.0
      %466 = vadd.xlane.f32.xlu0 %v465
      %v467 = vpop.xlane.xlu0 %466
      %v468 = vrcp.pop %v464
      %v469 = vrcp.pop %v467
      %v470 = vmul.f32 %v459, %v468
      %v471 = vmul.f32 %v461, %v469
      %v472 = vpack.c.bf16 %v471, %v470
      %v475 = vunpack.c.l.b16 %v414
      %v476 = vunpack.c.l.b16 %v415
      %v477 = vpack.c.b16 %v476, %v475
      %478 = vrot.lane.b32.xlu0 %v477, 96
      %v479 = vpop.permute.xlu0 %478
      %v482 = vsel %vm361, %v472, 0
      %484 = vmatpush.bf16.msra.mxu0 0
      %485 = vmatpush.bf16.msra.mxu0 0
      %486 = vmatpush.bf16.msra.mxu0 0
      %487 = vmatpush.bf16.msra.mxu0 0
      %488 = vmatpush.bf16.msra.mxu0 0
      %489 = vmatpush.bf16.msra.mxu0 0
      %490 = vmatpush.bf16.msra.mxu0 0
      %491 = vmatpush.bf16.msra.mxu0 %v479
      %492 = vmatmul.bf16.gmra.mxu0 %v482
      %v493 = vpop.f32.mrf.mxu0
      %v494 = vadd.f32 0.0, %v493
      %v495 = vpop.f32.mrf.mxu0
      %v496 = vadd.f32 0.0, %v495
      %497 = vdwg.mxu0
      %500 = vrot.lane.b32.xlu0 %v494, 32
      %v501 = vpop.permute.xlu0 %500
      %502 = vrot.lane.b32.xlu0 %v496, 32
      %v503 = vpop.permute.xlu0 %502
      %vm506 = vcmask 523520
      %507 = vst.msk [vmem:[#allocation2] sm:$0xff] %vm506, %v501
      %508 = vst.msk [vmem:[#allocation2 + $0x8] sm:$0xff] %vm506, %v503
      %v509 = vld [vmem:[%s296] sm:$0xf]
      %v510 = vld [vmem:[%s296 + $0xc] sm:$0xf]
      %v511 = vld [vmem:[%s302 + $0x4] sm:$0xf]
      %v512 = vld [vmem:[%s302 + $0x10] sm:$0xf]
      %v513 = vld [vmem:[%s302 + $0x8] sm:$0xf]
      %v514 = vld [vmem:[%s302 + $0x14] sm:$0xf]
      %v517 = vunpack.c.l.b16 %v509
      %v518 = vunpack.c.l.b16 %v510
      %v519 = vpack.c.b16 %v518, %v517
      %520 = vrot.lane.b32.xlu0 %v519, 64
      %v521 = vpop.permute.xlu0 %520
      %v524 = vunpack.c.l.b16 %v511
      %v525 = vunpack.c.l.b16 %v512
      %v526 = vpack.c.b16 %v525, %v524
      %527 = vrot.lane.b32.xlu0 %v526, 64
      %v528 = vpop.permute.xlu0 %527
      %v530 = vsel %vm340, %v521, 0
      %v533 = vsel %vm340, %v528, 0
      %535 = vmatpush.bf16.xpose.msra.mxu0 0
      %536 = vmatpush.bf16.xpose.msra.mxu0 0
      %537 = vmatpush.bf16.xpose.msra.mxu0 0
      %538 = vmatpush.bf16.xpose.msra.mxu0 0
      %539 = vmatpush.bf16.xpose.msra.mxu0 0
      %540 = vmatpush.bf16.xpose.msra.mxu0 0
      %541 = vmatpush.bf16.xpose.msra.mxu0 0
      %542 = vmatpush.bf16.xpose.msra.mxu0 %v533
      %543 = vmatmul.bf16.gmra.mxu0 %v530
      %v544 = vpop.f32.mrf.mxu0
      %v545 = vadd.f32 0.0, %v544
      %v546 = vpop.f32.mrf.mxu0
      %v547 = vadd.f32 0.0, %v546
      %548 = vdwg.mxu0
      %v549 = vsel %vm361, %v545, -inf
      %550 = vmax.xlane.f32.xlu0 %v549
      %v551 = vpop.xlane.xlu0 %550
      %v552 = vsel %vm361, %v547, -inf
      %553 = vmax.xlane.f32.xlu0 %v552
      %v554 = vpop.xlane.xlu0 %553
      %v555 = vsub.f32 %v545, %v551
      %v556 = vsub.f32 %v547, %v554
      %v557 = vmul.f32 %v555, 1.442695
      %v558 = vpow.pop %v557
      %v559 = vmul.f32 %v556, 1.442695
      %v560 = vpow.pop %v559
      %v561 = vsel %vm361, %v558, 0.0
      %562 = vadd.xlane.f32.xlu0 %v561
      %v563 = vpop.xlane.xlu0 %562
      %v564 = vsel %vm361, %v560, 0.0
      %565 = vadd.xlane.f32.xlu0 %v564
      %v566 = vpop.xlane.xlu0 %565
      %v567 = vrcp.pop %v563
      %v568 = vrcp.pop %v566
      %v569 = vmul.f32 %v558, %v567
      %v570 = vmul.f32 %v560, %v568
      %v571 = vpack.c.bf16 %v570, %v569
      %v574 = vunpack.c.l.b16 %v513
      %v575 = vunpack.c.l.b16 %v514
      %v576 = vpack.c.b16 %v575, %v574
      %577 = vrot.lane.b32.xlu0 %v576, 64
      %v578 = vpop.permute.xlu0 %577
      %v581 = vsel %vm361, %v571, 0
      %583 = vmatpush.bf16.msra.mxu0 0
      %584 = vmatpush.bf16.msra.mxu0 0
      %585 = vmatpush.bf16.msra.mxu0 0
      %586 = vmatpush.bf16.msra.mxu0 0
      %587 = vmatpush.bf16.msra.mxu0 0
      %588 = vmatpush.bf16.msra.mxu0 0
      %589 = vmatpush.bf16.msra.mxu0 0
      %590 = vmatpush.bf16.msra.mxu0 %v578
      %591 = vmatmul.bf16.gmra.mxu0 %v581
      %v592 = vpop.f32.mrf.mxu0
      %v593 = vadd.f32 0.0, %v592
      %v594 = vpop.f32.mrf.mxu0
      %v595 = vadd.f32 0.0, %v594
      %596 = vdwg.mxu0
      %599 = vrot.lane.b32.xlu0 %v593, 64
      %v600 = vpop.permute.xlu0 %599
      %601 = vrot.lane.b32.xlu0 %v595, 64
      %v602 = vpop.permute.xlu0 %601
      %vm605 = vcmask 785920
      %606 = vst.msk [vmem:[#allocation2] sm:$0xff] %vm605, %v600
      %607 = vst.msk [vmem:[#allocation2 + $0x8] sm:$0xff] %vm605, %v602
      %v608 = vld [vmem:[%s296] sm:$0xf]
      %v609 = vld [vmem:[%s296 + $0xc] sm:$0xf]
      %v610 = vld [vmem:[%s302 + $0x4] sm:$0xf]
      %v611 = vld [vmem:[%s302 + $0x10] sm:$0xf]
      %v612 = vld [vmem:[%s302 + $0x8] sm:$0xf]
      %v613 = vld [vmem:[%s302 + $0x14] sm:$0xf]
      %v616 = vunpack.c.l.b16 %v608
      %v617 = vunpack.c.l.b16 %v609
      %v618 = vpack.c.b16 %v617, %v616
      %619 = vrot.lane.b32.xlu0 %v618, 32
      %v620 = vpop.permute.xlu0 %619
      %v623 = vunpack.c.l.b16 %v610
      %v624 = vunpack.c.l.b16 %v611
      %v625 = vpack.c.b16 %v624, %v623
      %626 = vrot.lane.b32.xlu0 %v625, 32
      %v627 = vpop.permute.xlu0 %626
      %v629 = vsel %vm340, %v620, 0
      %v632 = vsel %vm340, %v627, 0
      %634 = vmatpush.bf16.xpose.msra.mxu0 0
      %635 = vmatpush.bf16.xpose.msra.mxu0 0
      %636 = vmatpush.bf16.xpose.msra.mxu0 0
      %637 = vmatpush.bf16.xpose.msra.mxu0 0
      %638 = vmatpush.bf16.xpose.msra.mxu0 0
      %639 = vmatpush.bf16.xpose.msra.mxu0 0
      %640 = vmatpush.bf16.xpose.msra.mxu0 0
      %641 = vmatpush.bf16.xpose.msra.mxu0 %v632
      %642 = vmatmul.bf16.gmra.mxu0 %v629
      %v643 = vpop.f32.mrf.mxu0
      %v644 = vadd.f32 0.0, %v643
      %v645 = vpop.f32.mrf.mxu0
      %v646 = vadd.f32 0.0, %v645
      %647 = vdwg.mxu0
      %v648 = vsel %vm361, %v644, -inf
      %649 = vmax.xlane.f32.xlu0 %v648
      %v650 = vpop.xlane.xlu0 %649
      %v651 = vsel %vm361, %v646, -inf
      %652 = vmax.xlane.f32.xlu0 %v651
      %v653 = vpop.xlane.xlu0 %652
      %v654 = vsub.f32 %v644, %v650
      %v655 = vsub.f32 %v646, %v653
      %v656 = vmul.f32 %v654, 1.442695
      %v657 = vpow.pop %v656
      %v658 = vmul.f32 %v655, 1.442695
      %v659 = vpow.pop %v658
      %v660 = vsel %vm361, %v657, 0.0
      %661 = vadd.xlane.f32.xlu0 %v660
      %v662 = vpop.xlane.xlu0 %661
      %v663 = vsel %vm361, %v659, 0.0
      %664 = vadd.xlane.f32.xlu0 %v663
      %v665 = vpop.xlane.xlu0 %664
      %v666 = vrcp.pop %v662
      %v667 = vrcp.pop %v665
      %v668 = vmul.f32 %v657, %v666
      %v669 = vmul.f32 %v659, %v667
      %v670 = vpack.c.bf16 %v669, %v668
      %v673 = vunpack.c.l.b16 %v612
      %v674 = vunpack.c.l.b16 %v613
      %v675 = vpack.c.b16 %v674, %v673
      %676 = vrot.lane.b32.xlu0 %v675, 32
      %v677 = vpop.permute.xlu0 %676
      %v680 = vsel %vm361, %v670, 0
      %682 = vmatpush.bf16.msra.mxu0 0
      %683 = vmatpush.bf16.msra.mxu0 0
      %684 = vmatpush.bf16.msra.mxu0 0
      %685 = vmatpush.bf16.msra.mxu0 0
      %686 = vmatpush.bf16.msra.mxu0 0
      %687 = vmatpush.bf16.msra.mxu0 0
      %688 = vmatpush.bf16.msra.mxu0 0
      %689 = vmatpush.bf16.msra.mxu0 %v677
      %690 = vmatmul.bf16.gmra.mxu0 %v680
      %v691 = vpop.f32.mrf.mxu0
      %v692 = vadd.f32 0.0, %v691
      %v693 = vpop.f32.mrf.mxu0
      %v694 = vadd.f32 0.0, %v693
      %695 = vdwg.mxu0
      %698 = vrot.lane.b32.xlu0 %v692, 96
      %v699 = vpop.permute.xlu0 %698
      %700 = vrot.lane.b32.xlu0 %v694, 96
      %v701 = vpop.permute.xlu0 %700
      %vm704 = vcmask 1048320
      %705 = vst.msk [vmem:[#allocation2] sm:$0xff] %vm704, %v699
      %706 = vst.msk [vmem:[#allocation2 + $0x8] sm:$0xff] %vm704, %v701
      %v707 = vld [vmem:[#allocation2] sm:$0xff]
      %v708 = vld [vmem:[#allocation2 + $0x8] sm:$0xff]
      %v709 = vpack.c.bf16 %v708, %v707
      %v710 = vld [vmem:[%s3] sm:$0xf]
      %v711 = vld [vmem:[%s3 + $0x4] sm:$0xf]
      %v712 = vld [vmem:[%s3 + $0x8] sm:$0xf]
      %v713 = vld [vmem:[%s3 + $0xc] sm:$0xf]
      %v714 = vld [vmem:[%s3 + $0x10] sm:$0xf]
      %v715 = vld [vmem:[%s3 + $0x14] sm:$0xf]
      %v716 = vld [vmem:[%s3 + $0x18] sm:$0xf]
      %v717 = vld [vmem:[%s3 + $0x1c] sm:$0xf]
      %v718 = vld [vmem:[%s3 + $0x20] sm:$0xf]
      %v719 = vld [vmem:[%s3 + $0x24] sm:$0xf]
      %v720 = vld [vmem:[%s3 + $0x28] sm:$0xf]
      %v721 = vld [vmem:[%s3 + $0x2c] sm:$0xf]
      %v722 = vld [vmem:[%s3 + $0x30] sm:$0xf]
      %v723 = vld [vmem:[%s3 + $0x34] sm:$0xf]
      %v724 = vld [vmem:[%s3 + $0x38] sm:$0xf]
      %v725 = vld [vmem:[%s3 + $0x3c] sm:$0xf]
      %v726 = vld [vmem:[%s4] sm:$0x1]
      %v727 = vunpack.c.l.bf16 %v726
      %v728 = vperm.slane %v727, 0
      %v745 = vunpack.c.l.b16 %v710
      %v746 = vunpack.c.l.b16 %v711
      %v747 = vunpack.c.l.b16 %v712
      %v748 = vunpack.c.l.b16 %v713
      %v749 = vunpack.c.l.b16 %v714
      %v750 = vunpack.c.l.b16 %v715
      %v751 = vunpack.c.l.b16 %v716
      %v752 = vunpack.c.l.b16 %v717
      %v753 = vunpack.c.l.b16 %v718
      %v754 = vunpack.c.l.b16 %v719
      %v755 = vunpack.c.l.b16 %v720
      %v756 = vunpack.c.l.b16 %v721
      %v757 = vunpack.c.l.b16 %v722
      %v758 = vunpack.c.l.b16 %v723
      %v759 = vunpack.c.l.b16 %v724
      %v760 = vunpack.c.l.b16 %v725
      %v761 = vpack.c.b16 %v746, %v745
      %v762 = vpack.c.b16 %v748, %v747
      %v763 = vpack.c.b16 %v750, %v749
      %v764 = vpack.c.b16 %v752, %v751
      %v765 = vpack.c.b16 %v754, %v753
      %v766 = vpack.c.b16 %v756, %v755
      %v767 = vpack.c.b16 %v758, %v757
      %v768 = vpack.c.b16 %v760, %v759
      %777 = vmatpush.bf16.msra.mxu0 %v768
      %778 = vmatpush.bf16.msra.mxu0 %v767
      %779 = vmatpush.bf16.msra.mxu0 %v766
      %780 = vmatpush.bf16.msra.mxu0 %v765
      %781 = vmatpush.bf16.msra.mxu0 %v764
      %782 = vmatpush.bf16.msra.mxu0 %v763
      %783 = vmatpush.bf16.msra.mxu0 %v762
      %784 = vmatpush.bf16.msra.mxu0 %v761
      %785 = vmatmul.bf16.gmra.mxu0 %v709
      %v786 = vpop.f32.mrf.mxu0
      %v787 = vadd.f32 %v728, %v786
      %v788 = vpop.f32.mrf.mxu0
      %v789 = vadd.f32 %v728, %v788
      %790 = vdwg.mxu0
      %v791 = vld [vmem:[%s311] sm:$0xf]
      %v792 = vld [vmem:[%s311 + $0x4] sm:$0xf]
      %v793 = vunpack.c.l.bf16 %v791
      %v794 = vunpack.c.l.bf16 %v792
      %v795 = vadd.f32 %v793, %v787
      %v796 = vadd.f32 %v794, %v789
      %v797 = vpack.c.bf16 %v795, %v795
      %v798 = vpack.c.bf16 %v796, %v796
      %799 = vst [vmem:[%s321] sm:$0xf] %v797
      %800 = vst [vmem:[%s321 + $0x4] sm:$0xf] %v798
      %s801 = smul.u32 2, %s21
      %p802 = scmp.lt.s32.totalorder %s20, 1
      %s803 = scalar_select %p802, %s20, 1
      %p804 = scmp.lt.s32.totalorder %s801, 1
      %s805 = scalar_select %p804, %s801, 1
      %s806 = smul.addr %s803, 2
      %s807 = sadd.s32 %s805, %s806
      %s808 = smul.addr %s807, 4
      %s809 = scalar_lea.vmem %s5, %s808
      // Predicated region
      $region41: #{build_transformer_forward.11} parent=39 // pred_check
        %p810 = pneg %p172
      $region42: #{build_transformer_forward.11} parent=39 // pred_check_branch
        %812 = sbr.rel (%p810) target = $region44
      $region43: #{build_transformer_forward.11} parent=39 // pred_region
        %s813 = smul.u32 2, %s21
      $region44: #{build_transformer_forward.11} parent=39 // pred_fallthru
        _
    $region40: #{build_transformer_forward.11} parent=5 // pred_fallthru
      _
    %p814 = scmp.le.s32.totalorder 2, %s11
    // Predicated region
    $region45: #{build_transformer_forward.11} parent=5 // pred_check
      %p815 = pneg %p814
    $region46: #{build_transformer_forward.11} parent=5 // pred_check_branch
      %817 = sbr.rel (%p815) target = $region48
    $region47: #{build_transformer_forward.11} parent=5 // pred_region
      %s818 = ssub.s32 %s11, 2
      // Predicated region
      $region49: #{build_transformer_forward.11} parent=47 // pred_check
        %p819 = pneg %p178
      $region50: #{build_transformer_forward.11} parent=47 // pred_check_branch
        %821 = sbr.rel (%p819) target = $region52
      $region51: #{build_transformer_forward.11} parent=47 // pred_region
        %s822 = smul.u32 2, %s23
        %p823 = scmp.lt.s32.totalorder %s22, 1
        %s824 = scalar_select %p823, %s22, 1
        %p825 = scmp.lt.s32.totalorder %s822, 1
        %s826 = scalar_select %p825, %s822, 1
        %s827 = smul.addr %s824, 2
        %s828 = sadd.s32 %s826, %s827
        %s829 = smul.addr %s828, 4
        %s830 = scalar_lea.vmem %s5, %s829
      $region52: #{build_transformer_forward.11} parent=47 // pred_fallthru
        _
    $region48: #{build_transformer_forward.11} parent=5 // pred_fallthru
      _
  $region6: #{build_transformer_forward.11} parent=0 // loop_footer
    %s15 = sadd.s32 1, %s11
  $region7: #{build_transformer_forward.11} parent=0 // loop_footer_branch
    %10 = sbr.rel target = $region3
  $region8: #{build_transformer_forward.11} parent=0 // loop_exit
    _

// kernel: build_transformer_forward.12
$region0: #{build_transformer_forward.12}
  #allocation0 [shape = 'u32[]', space=smem, size = 0x4, offset = 0x4, fixed_abs, tag = 'smem constant byte address 0x4 - core index']
  #allocation1 [shape = 'u32[72,128]{1,0:T(1,128)}', space=vmem, size = 0x9000, scoped, tag = 'internal scratch']
  %s0 = inlined_call_operand.vmem [shape: bf16[32,128], index: 0, kind: input, shape index: {}]
  %s1 = inlined_call_operand.vmem [shape: bf16[1,128], index: 1, kind: input, shape index: {}]
  %s2 = inlined_call_operand.vmem [shape: bf16[1,128], index: 2, kind: input, shape index: {}]
  %s3 = inlined_call_operand.vmem [shape: bf16[128,512], index: 3, kind: input, shape index: {}]
  %s4 = inlined_call_operand.vmem [shape: bf16[1,512], index: 4, kind: input, shape index: {}]
  %s5 = inlined_call_operand.vmem [shape: bf16[512,128], index: 5, kind: input, shape index: {}]
  %s6 = inlined_call_operand.vmem [shape: bf16[1,128], index: 6, kind: input, shape index: {}]
  %s7 = inlined_call_operand.vmem [shape: bf16[32,128], index: 7, kind: output, shape index: {}]
  %s8 = sld [smem:[#allocation0]]
  $region38: #{build_transformer_forward.12} parent=0
    _
  %s10 = ssub.s32 1, %s8
  %s11 = scalar_select 0, %s10, %s8
  // Predicated region
  $region2: #{build_transformer_forward.12} parent=0 // pred_check
    _
  $region3: #{build_transformer_forward.12} parent=0 // pred_check_branch
    %13 = sbr.rel (0) target = $region5
  $region4: #{build_transformer_forward.12} parent=0 // pred_region
    _
  $region5: #{build_transformer_forward.12} parent=0 // pred_fallthru
    _
  // Predicated region
  $region6: #{build_transformer_forward.12} parent=0 // pred_check
    _
  $region7: #{build_transformer_forward.12} parent=0 // pred_check_branch
    %15 = sbr.rel (0) target = $region9
  $region8: #{build_transformer_forward.12} parent=0 // pred_region
    _
  $region9: #{build_transformer_forward.12} parent=0 // pred_fallthru
    _
  // Predicated region
  $region10: #{build_transformer_forward.12} parent=0 // pred_check
    _
  $region11: #{build_transformer_forward.12} parent=0 // pred_check_branch
    %17 = sbr.rel (0) target = $region13
  $region12: #{build_transformer_forward.12} parent=0 // pred_region
    _
  $region13: #{build_transformer_forward.12} parent=0 // pred_fallthru
    _
  // Predicated region
  $region14: #{build_transformer_forward.12} parent=0 // pred_check
    _
  $region15: #{build_transformer_forward.12} parent=0 // pred_check_branch
    %19 = sbr.rel (0) target = $region17
  $region16: #{build_transformer_forward.12} parent=0 // pred_region
    _
  $region17: #{build_transformer_forward.12} parent=0 // pred_fallthru
    _
  // Predicated region
  $region18: #{build_transformer_forward.12} parent=0 // pred_check
    _
  $region19: #{build_transformer_forward.12} parent=0 // pred_check_branch
    %21 = sbr.rel (0) target = $region21
  $region20: #{build_transformer_forward.12} parent=0 // pred_region
    _
  $region21: #{build_transformer_forward.12} parent=0 // pred_fallthru
    _
  // Predicated region
  $region22: #{build_transformer_forward.12} parent=0 // pred_check
    _
  $region23: #{build_transformer_forward.12} parent=0 // pred_check_branch
    %23 = sbr.rel (0) target = $region25
  $region24: #{build_transformer_forward.12} parent=0 // pred_region
    _
  $region25: #{build_transformer_forward.12} parent=0 // pred_fallthru
    _
  // Predicated region
  $region26: #{build_transformer_forward.12} parent=0 // pred_check
    _
  $region27: #{build_transformer_forward.12} parent=0 // pred_check_branch
    %25 = sbr.rel (0) target = $region29
  $region28: #{build_transformer_forward.12} parent=0 // pred_region
    _
  $region29: #{build_transformer_forward.12} parent=0 // pred_fallthru
    _
  %v26 = vld [vmem:[%s0] sm:$0xf]
  %v27 = vld [vmem:[%s0 + $0x4] sm:$0xf]
  %v28 = vld [vmem:[%s0 + $0x8] sm:$0xf]
  %v29 = vld [vmem:[%s0 + $0xc] sm:$0xf]
  %v30 = vunpack.c.l.bf16 %v26
  %v31 = vunpack.c.l.bf16 %v27
  %v32 = vunpack.c.l.bf16 %v28
  %v33 = vunpack.c.l.bf16 %v29
  %34 = vadd.xlane.f32.xlu0 %v30
  %v35 = vpop.xlane.xlu0 %34
  %36 = vadd.xlane.f32.xlu0 %v31
  %v37 = vpop.xlane.xlu0 %36
  %38 = vadd.xlane.f32.xlu0 %v32
  %v39 = vpop.xlane.xlu0 %38
  %40 = vadd.xlane.f32.xlu0 %v33
  %v41 = vpop.xlane.xlu0 %40
  %v42 = vrcp.pop 128.0
  %v43 = vmul.f32 128.0, %v42
  %v44 = vsub.f32 1.0, %v43
  %v45 = vmul.f32 %v42, %v44
  %v46 = vadd.f32 %v42, %v45
  %vm47 = vweird.f32 %v42
  %v48 = vsel %vm47, %v42, %v46
  %v49 = vmul.f32 %v35, %v48
  %v50 = vmul.f32 %v37, %v48
  %v51 = vmul.f32 %v39, %v48
  %v52 = vmul.f32 %v41, %v48
  %v53 = vsub.f32 %v30, %v49
  %v54 = vsub.f32 %v31, %v50
  %v55 = vsub.f32 %v32, %v51
  %v56 = vsub.f32 %v33, %v52
  %v57 = vmul.f32 %v53, %v53
  %v58 = vmul.f32 %v54, %v54
  %v59 = vmul.f32 %v55, %v55
  %v60 = vmul.f32 %v56, %v56
  %61 = vadd.xlane.f32.xlu0 %v57
  %v62 = vpop.xlane.xlu0 %61
  %63 = vadd.xlane.f32.xlu0 %v58
  %v64 = vpop.xlane.xlu0 %63
  %65 = vadd.xlane.f32.xlu0 %v59
  %v66 = vpop.xlane.xlu0 %65
  %67 = vadd.xlane.f32.xlu0 %v60
  %v68 = vpop.xlane.xlu0 %67
  %v69 = vmul.f32 %v62, %v48
  %v70 = vmul.f32 %v64, %v48
  %v71 = vmul.f32 %v66, %v48
  %v72 = vmul.f32 %v68, %v48
  %v73 = vadd.f32 %v69, 1e-06
  %v74 = vadd.f32 %v70, 1e-06
  %v75 = vadd.f32 %v71, 1e-06
  %v76 = vadd.f32 %v72, 1e-06
  %v77 = vrsqrt.pop %v73
  %v78 = vmul.f32 %v77, %v73
  %v79 = vmul.f32 %v78, %v77
  %v80 = vmul.f32 0.5, %v79
  %v81 = vsub.f32 1.5, %v80
  %v82 = vmul.f32 %v77, %v81
  %vm83 = vweird.f32 %v73
  %vm84 = vweird.f32 %v77
  %vm85 = vmor %vm83, %vm84
  %v86 = vsel %vm85, %v77, %v82
  %v87 = vrsqrt.pop %v74
  %v88 = vmul.f32 %v87, %v74
  %v89 = vmul.f32 %v88, %v87
  %v90 = vmul.f32 0.5, %v89
  %v91 = vsub.f32 1.5, %v90
  %v92 = vmul.f32 %v87, %v91
  %vm93 = vweird.f32 %v74
  %vm94 = vweird.f32 %v87
  %vm95 = vmor %vm93, %vm94
  %v96 = vsel %vm95, %v87, %v92
  %v97 = vrsqrt.pop %v75
  %v98 = vmul.f32 %v97, %v75
  %v99 = vmul.f32 %v98, %v97
  %v100 = vmul.f32 0.5, %v99
  %v101 = vsub.f32 1.5, %v100
  %v102 = vmul.f32 %v97, %v101
  %vm103 = vweird.f32 %v75
  %vm104 = vweird.f32 %v97
  %vm105 = vmor %vm103, %vm104
  %v106 = vsel %vm105, %v97, %v102
  %v107 = vrsqrt.pop %v76
  %v108 = vmul.f32 %v107, %v76
  %v109 = vmul.f32 %v108, %v107
  %v110 = vmul.f32 0.5, %v109
  %v111 = vsub.f32 1.5, %v110
  %v112 = vmul.f32 %v107, %v111
  %vm113 = vweird.f32 %v76
  %vm114 = vweird.f32 %v107
  %vm115 = vmor %vm113, %vm114
  %v116 = vsel %vm115, %v107, %v112
  %v117 = vmul.f32 %v53, %v86
  %v118 = vmul.f32 %v54, %v96
  %v119 = vmul.f32 %v55, %v106
  %v120 = vmul.f32 %v56, %v116
  %v121 = vld [vmem:[%s1] sm:$0x1]
  %v122 = vunpack.c.l.bf16 %v121
  %v123 = vperm.slane %v122, 0
  %v124 = vmul.f32 %v117, %v123
  %v125 = vmul.f32 %v118, %v123
  %v126 = vmul.f32 %v119, %v123
  %v127 = vmul.f32 %v120, %v123
  %v128 = vld [vmem:[%s2] sm:$0x1]
  %v129 = vunpack.c.l.bf16 %v128
  %v130 = vperm.slane %v129, 0
  %v131 = vadd.f32 %v124, %v130
  %v132 = vadd.f32 %v125, %v130
  %v133 = vadd.f32 %v126, %v130
  %v134 = vadd.f32 %v127, %v130
  %v135 = vpack.c.bf16 %v132, %v131
  %v136 = vpack.c.bf16 %v134, %v133
  %v137 = vld [vmem:[%s3] sm:$0xff]
  %v138 = vld [vmem:[%s3 + $0x8] sm:$0xff]
  %v139 = vld [vmem:[%s3 + $0x10] sm:$0xff]
  %v140 = vld [vmem:[%s3 + $0x18] sm:$0xff]
  %v141 = vld [vmem:[%s3 + $0x20] sm:$0xff]
  %v142 = vld [vmem:[%s3 + $0x28] sm:$0xff]
  %v143 = vld [vmem:[%s3 + $0x30] sm:$0xff]
  %v144 = vld [vmem:[%s3 + $0x38] sm:$0xff]
  %v145 = vld [vmem:[%s3 + $0x40] sm:$0xff]
  %v146 = vld [vmem:[%s3 + $0x48] sm:$0xff]
  %v147 = vld [vmem:[%s3 + $0x50] sm:$0xff]
  %v148 = vld [vmem:[%s3 + $0x58] sm:$0xff]
  %v149 = vld [vmem:[%s3 + $0x60] sm:$0xff]
  %v150 = vld [vmem:[%s3 + $0x68] sm:$0xff]
  %v151 = vld [vmem:[%s3 + $0x70] sm:$0xff]
  %v152 = vld [vmem:[%s3 + $0x78] sm:$0xff]
  %v153 = vld [vmem:[%s3 + $0x80] sm:$0xff]
  %v154 = vld [vmem:[%s3 + $0x88] sm:$0xff]
  %v155 = vld [vmem:[%s3 + $0x90] sm:$0xff]
  %v156 = vld [vmem:[%s3 + $0x98] sm:$0xff]
  %v157 = vld [vmem:[%s3 + $0xa0] sm:$0xff]
  %v158 = vld [vmem:[%s3 + $0xa8] sm:$0xff]
  %v159 = vld [vmem:[%s3 + $0xb0] sm:$0xff]
  %v160 = vld [vmem:[%s3 + $0xb8] sm:$0xff]
  %v161 = vld [vmem:[%s3 + $0xc0] sm:$0xff]
  %v162 = vld [vmem:[%s3 + $0xc8] sm:$0xff]
  %v163 = vld [vmem:[%s3 + $0xd0] sm:$0xff]
  %v164 = vld [vmem:[%s3 + $0xd8] sm:$0xff]
  %v165 = vld [vmem:[%s3 + $0xe0] sm:$0xff]
  %v166 = vld [vmem:[%s3 + $0xe8] sm:$0xff]
  %v167 = vld [vmem:[%s3 + $0xf0] sm:$0xff]
  %v168 = vld [vmem:[%s3 + $0xf8] sm:$0xff]
  %v169 = vld [vmem:[%s4] sm:$0xf]
  %v170 = vunpack.c.l.bf16 %v169
  %v172 = vperm.slane %v170, 0
  %v173 = vperm.slane %v170, 2
  %v174 = vperm.slane %v170, 4
  %v175 = vperm.slane %v170, 6
  %v180 = vperm.slane %v172, 0
  %v181 = vperm.slane %v173, 0
  %v182 = vperm.slane %v174, 0
  %v183 = vperm.slane %v175, 0
  %v216 = vunpack.c.l.b16 %v137
  %v217 = vunpack.c.h.b16 %v137
  %v218 = vunpack.c.l.b16 %v138
  %v219 = vunpack.c.h.b16 %v138
  %v220 = vunpack.c.l.b16 %v139
  %v221 = vunpack.c.h.b16 %v139
  %v222 = vunpack.c.l.b16 %v140
  %v223 = vunpack.c.h.b16 %v140
  %v224 = vunpack.c.l.b16 %v141
  %v225 = vunpack.c.h.b16 %v141
  %v226 = vunpack.c.l.b16 %v142
  %v227 = vunpack.c.h.b16 %v142
  %v228 = vunpack.c.l.b16 %v143
  %v229 = vunpack.c.h.b16 %v143
  %v230 = vunpack.c.l.b16 %v144
  %v231 = vunpack.c.h.b16 %v144
  %v232 = vunpack.c.l.b16 %v145
  %v233 = vunpack.c.h.b16 %v145
  %v234 = vunpack.c.l.b16 %v146
  %v235 = vunpack.c.h.b16 %v146
  %v236 = vunpack.c.l.b16 %v147
  %v237 = vunpack.c.h.b16 %v147
  %v238 = vunpack.c.l.b16 %v148
  %v239 = vunpack.c.h.b16 %v148
  %v240 = vunpack.c.l.b16 %v149
  %v241 = vunpack.c.h.b16 %v149
  %v242 = vunpack.c.l.b16 %v150
  %v243 = vunpack.c.h.b16 %v150
  %v244 = vunpack.c.l.b16 %v151
  %v245 = vunpack.c.h.b16 %v151
  %v246 = vunpack.c.l.b16 %v152
  %v247 = vunpack.c.h.b16 %v152
  %v248 = vunpack.c.l.b16 %v153
  %v249 = vunpack.c.h.b16 %v153
  %v250 = vunpack.c.l.b16 %v154
  %v251 = vunpack.c.h.b16 %v154
  %v252 = vunpack.c.l.b16 %v155
  %v253 = vunpack.c.h.b16 %v155
  %v254 = vunpack.c.l.b16 %v156
  %v255 = vunpack.c.h.b16 %v156
  %v256 = vunpack.c.l.b16 %v157
  %v257 = vunpack.c.h.b16 %v157
  %v258 = vunpack.c.l.b16 %v158
  %v259 = vunpack.c.h.b16 %v158
  %v260 = vunpack.c.l.b16 %v159
  %v261 = vunpack.c.h.b16 %v159
  %v262 = vunpack.c.l.b16 %v160
  %v263 = vunpack.c.h.b16 %v160
  %v264 = vunpack.c.l.b16 %v161
  %v265 = vunpack.c.h.b16 %v161
  %v266 = vunpack.c.l.b16 %v162
  %v267 = vunpack.c.h.b16 %v162
  %v268 = vunpack.c.l.b16 %v163
  %v269 = vunpack.c.h.b16 %v163
  %v270 = vunpack.c.l.b16 %v164
  %v271 = vunpack.c.h.b16 %v164
  %v272 = vunpack.c.l.b16 %v165
  %v273 = vunpack.c.h.b16 %v165
  %v274 = vunpack.c.l.b16 %v166
  %v275 = vunpack.c.h.b16 %v166
  %v276 = vunpack.c.l.b16 %v167
  %v277 = vunpack.c.h.b16 %v167
  %v278 = vunpack.c.l.b16 %v168
  %v279 = vunpack.c.h.b16 %v168
  %v280 = vpack.c.b16 %v220, %v216
  %v281 = vpack.c.b16 %v221, %v217
  %v282 = vpack.c.b16 %v222, %v218
  %v283 = vpack.c.b16 %v223, %v219
  %v284 = vpack.c.b16 %v228, %v224
  %v285 = vpack.c.b16 %v229, %v225
  %v286 = vpack.c.b16 %v230, %v226
  %v287 = vpack.c.b16 %v231, %v227
  %v288 = vpack.c.b16 %v236, %v232
  %v289 = vpack.c.b16 %v237, %v233
  %v290 = vpack.c.b16 %v238, %v234
  %v291 = vpack.c.b16 %v239, %v235
  %v292 = vpack.c.b16 %v244, %v240
  %v293 = vpack.c.b16 %v245, %v241
  %v294 = vpack.c.b16 %v246, %v242
  %v295 = vpack.c.b16 %v247, %v243
  %v296 = vpack.c.b16 %v252, %v248
  %v297 = vpack.c.b16 %v253, %v249
  %v298 = vpack.c.b16 %v254, %v250
  %v299 = vpack.c.b16 %v255, %v251
  %v300 = vpack.c.b16 %v260, %v256
  %v301 = vpack.c.b16 %v261, %v257
  %v302 = vpack.c.b16 %v262, %v258
  %v303 = vpack.c.b16 %v263, %v259
  %v304 = vpack.c.b16 %v268, %v264
  %v305 = vpack.c.b16 %v269, %v265
  %v306 = vpack.c.b16 %v270, %v266
  %v307 = vpack.c.b16 %v271, %v267
  %v308 = vpack.c.b16 %v276, %v272
  %v309 = vpack.c.b16 %v277, %v273
  %v310 = vpack.c.b16 %v278, %v274
  %v311 = vpack.c.b16 %v279, %v275
  %344 = vmatpush.bf16.msra.mxu0 %v308
  %345 = vmatpush.bf16.msra.mxu0 %v304
  %346 = vmatpush.bf16.msra.mxu0 %v300
  %347 = vmatpush.bf16.msra.mxu0 %v296
  %348 = vmatpush.bf16.msra.mxu0 %v292
  %349 = vmatpush.bf16.msra.mxu0 %v288
  %350 = vmatpush.bf16.msra.mxu0 %v284
  %351 = vmatpush.bf16.msra.mxu0 %v280
  %352 = vmatmul.bf16.gmra.mxu0 %v135
  %v353 = vpop.f32.mrf.mxu0
  %v354 = vadd.f32 %v180, %v353
  %v355 = vpop.f32.mrf.mxu0
  %v356 = vadd.f32 %v180, %v355
  %357 = vmatmul.bf16.gmra.mxu0 %v136
  %v358 = vpop.f32.mrf.mxu0
  %v359 = vadd.f32 %v180, %v358
  %v360 = vpop.f32.mrf.mxu0
  %v361 = vadd.f32 %v180, %v360
  %362 = vdwg.mxu0
  %363 = vmatpush.bf16.msra.mxu0 %v309
  %364 = vmatpush.bf16.msra.mxu0 %v305
  %365 = vmatpush.bf16.msra.mxu0 %v301
  %366 = vmatpush.bf16.msra.mxu0 %v297
  %367 = vmatpush.bf16.msra.mxu0 %v293
  %368 = vmatpush.bf16.msra.mxu0 %v289
  %369 = vmatpush.bf16.msra.mxu0 %v285
  %370 = vmatpush.bf16.msra.mxu0 %v281
  %371 = vmatmul.bf16.gmra.mxu0 %v135
  %v372 = vpop.f32.mrf.mxu0
  %v373 = vadd.f32 %v181, %v372
  %v374 = vpop.f32.mrf.mxu0
  %v375 = vadd.f32 %v181, %v374
  %376 = vmatmul.bf16.gmra.mxu0 %v136
  %v377 = vpop.f32.mrf.mxu0
  %v378 = vadd.f32 %v181, %v377
  %v379 = vpop.f32.mrf.mxu0
  %v380 = vadd.f32 %v181, %v379
  %381 = vdwg.mxu0
  %382 = vmatpush.bf16.msra.mxu0 %v310
  %383 = vmatpush.bf16.msra.mxu0 %v306
  %384 = vmatpush.bf16.msra.mxu0 %v302
  %385 = vmatpush.bf16.msra.mxu0 %v298
  %386 = vmatpush.bf16.msra.mxu0 %v294
  %387 = vmatpush.bf16.msra.mxu0 %v290
  %388 = vmatpush.bf16.msra.mxu0 %v286
  %389 = vmatpush.bf16.msra.mxu0 %v282
  %390 = vmatmul.bf16.gmra.mxu0 %v135
  %v391 = vpop.f32.mrf.mxu0
  %v392 = vadd.f32 %v182, %v391
  %v393 = vpop.f32.mrf.mxu0
  %v394 = vadd.f32 %v182, %v393
  %395 = vmatmul.bf16.gmra.mxu0 %v136
  %v396 = vpop.f32.mrf.mxu0
  %v397 = vadd.f32 %v182, %v396
  %v398 = vpop.f32.mrf.mxu0
  %v399 = vadd.f32 %v182, %v398
  %400 = vdwg.mxu0
  %401 = vmatpush.bf16.msra.mxu0 %v311
  %402 = vmatpush.bf16.msra.mxu0 %v307
  %403 = vmatpush.bf16.msra.mxu0 %v303
  %404 = vmatpush.bf16.msra.mxu0 %v299
  %405 = vmatpush.bf16.msra.mxu0 %v295
  %406 = vmatpush.bf16.msra.mxu0 %v291
  %407 = vmatpush.bf16.msra.mxu0 %v287
  %408 = vmatpush.bf16.msra.mxu0 %v283
  %409 = vmatmul.bf16.gmra.mxu0 %v135
  %v410 = vpop.f32.mrf.mxu0
  %v411 = vadd.f32 %v183, %v410
  %v412 = vpop.f32.mrf.mxu0
  %v413 = vadd.f32 %v183, %v412
  %414 = vmatmul.bf16.gmra.mxu0 %v136
  %v415 = vpop.f32.mrf.mxu0
  %v416 = vadd.f32 %v183, %v415
  %v417 = vpop.f32.mrf.mxu0
  %v418 = vadd.f32 %v183, %v417
  %419 = vdwg.mxu0
  %v420 = vmul.f32 %v354, 0.5
  %v421 = vmul.f32 %v373, 0.5
  %v422 = vmul.f32 %v392, 0.5
  %v423 = vmul.f32 %v411, 0.5
  %v424 = vmul.f32 %v356, 0.5
  %v425 = vmul.f32 %v375, 0.5
  %v426 = vmul.f32 %v394, 0.5
  %v427 = vmul.f32 %v413, 0.5
  %v428 = vmul.f32 %v359, 0.5
  %v429 = vmul.f32 %v378, 0.5
  %v430 = vmul.f32 %v397, 0.5
  %v431 = vmul.f32 %v416, 0.5
  %v432 = vmul.f32 %v361, 0.5
  %v433 = vmul.f32 %v380, 0.5
  %v434 = vmul.f32 %v399, 0.5
  %v435 = vmul.f32 %v418, 0.5
  %v436 = vmul.f32 %v354, 0.044715
  %v437 = vmul.f32 %v373, 0.044715
  %v438 = vmul.f32 %v392, 0.044715
  %v439 = vmul.f32 %v411, 0.044715
  %v440 = vmul.f32 %v356, 0.044715
  %v441 = vmul.f32 %v375, 0.044715
  %v442 = vmul.f32 %v394, 0.044715
  %v443 = vmul.f32 %v413, 0.044715
  %v444 = vmul.f32 %v359, 0.044715
  %v445 = vmul.f32 %v378, 0.044715
  %v446 = vmul.f32 %v397, 0.044715
  %v447 = vmul.f32 %v416, 0.044715
  %v448 = vmul.f32 %v361, 0.044715
  %v449 = vmul.f32 %v380, 0.044715
  %v450 = vmul.f32 %v399, 0.044715
  %v451 = vmul.f32 %v418, 0.044715
  %v452 = vmul.f32 %v436, %v354
  %v453 = vmul.f32 %v437, %v373
  %v454 = vmul.f32 %v438, %v392
  %v455 = vmul.f32 %v439, %v411
  %v456 = vmul.f32 %v440, %v356
  %v457 = vmul.f32 %v441, %v375
  %v458 = vmul.f32 %v442, %v394
  %v459 = vmul.f32 %v443, %v413
  %v460 = vmul.f32 %v444, %v359
  %v461 = vmul.f32 %v445, %v378
  %v462 = vmul.f32 %v446, %v397
  %v463 = vmul.f32 %v447, %v416
  %v464 = vmul.f32 %v448, %v361
  %v465 = vmul.f32 %v449, %v380
  %v466 = vmul.f32 %v450, %v399
  %v467 = vmul.f32 %v451, %v418
  %v468 = vmul.f32 %v452, %v354
  %v469 = vmul.f32 %v453, %v373
  %v470 = vmul.f32 %v454, %v392
  %v471 = vmul.f32 %v455, %v411
  %v472 = vmul.f32 %v456, %v356
  %v473 = vmul.f32 %v457, %v375
  %v474 = vmul.f32 %v458, %v394
  %v475 = vmul.f32 %v459, %v413
  %v476 = vmul.f32 %v460, %v359
  %v477 = vmul.f32 %v461, %v378
  %v478 = vmul.f32 %v462, %v397
  %v479 = vmul.f32 %v463, %v416
  %v480 = vmul.f32 %v464, %v361
  %v481 = vmul.f32 %v465, %v380
  %v482 = vmul.f32 %v466, %v399
  %v483 = vmul.f32 %v467, %v418
  %v484 = vadd.f32 %v354, %v468
  %v485 = vadd.f32 %v373, %v469
  %v486 = vadd.f32 %v392, %v470
  %v487 = vadd.f32 %v411, %v471
  %v488 = vadd.f32 %v356, %v472
  %v489 = vadd.f32 %v375, %v473
  %v490 = vadd.f32 %v394, %v474
  %v491 = vadd.f32 %v413, %v475
  %v492 = vadd.f32 %v359, %v476
  %v493 = vadd.f32 %v378, %v477
  %v494 = vadd.f32 %v397, %v478
  %v495 = vadd.f32 %v416, %v479
  %v496 = vadd.f32 %v361, %v480
  %v497 = vadd.f32 %v380, %v481
  %v498 = vadd.f32 %v399, %v482
  %v499 = vadd.f32 %v418, %v483
  %v500 = vmul.f32 %v484, 0.7978846
  %v501 = vmul.f32 %v485, 0.7978846
  %v502 = vmul.f32 %v486, 0.7978846
  %v503 = vmul.f32 %v487, 0.7978846
  %v504 = vmul.f32 %v488, 0.7978846
  %v505 = vmul.f32 %v489, 0.7978846
  %v506 = vmul.f32 %v490, 0.7978846
  %v507 = vmul.f32 %v491, 0.7978846
  %v508 = vmul.f32 %v492, 0.7978846
  %v509 = vmul.f32 %v493, 0.7978846
  %v510 = vmul.f32 %v494, 0.7978846
  %v511 = vmul.f32 %v495, 0.7978846
  %v512 = vmul.f32 %v496, 0.7978846
  %v513 = vmul.f32 %v497, 0.7978846
  %v514 = vmul.f32 %v498, 0.7978846
  %v515 = vmul.f32 %v499, 0.7978846
  %v516 = vtanh.pop %v500
  %v517 = vtanh.pop %v501
  %v518 = vtanh.pop %v502
  %v519 = vtanh.pop %v503
  %v520 = vtanh.pop %v504
  %v521 = vtanh.pop %v505
  %v522 = vtanh.pop %v506
  %v523 = vtanh.pop %v507
  %v524 = vtanh.pop %v508
  %v525 = vtanh.pop %v509
  %v526 = vtanh.pop %v510
  %v527 = vtanh.pop %v511
  %v528 = vtanh.pop %v512
  %v529 = vtanh.pop %v513
  %v530 = vtanh.pop %v514
  %v531 = vtanh.pop %v515
  %v532 = vadd.f32 %v516, 1.0
  %v533 = vadd.f32 %v517, 1.0
  %v534 = vadd.f32 %v518, 1.0
  %v535 = vadd.f32 %v519, 1.0
  %v536 = vadd.f32 %v520, 1.0
  %v537 = vadd.f32 %v521, 1.0
  %v538 = vadd.f32 %v522, 1.0
  %v539 = vadd.f32 %v523, 1.0
  %v540 = vadd.f32 %v524, 1.0
  %v541 = vadd.f32 %v525, 1.0
  %v542 = vadd.f32 %v526, 1.0
  %v543 = vadd.f32 %v527, 1.0
  %v544 = vadd.f32 %v528, 1.0
  %v545 = vadd.f32 %v529, 1.0
  %v546 = vadd.f32 %v530, 1.0
  %v547 = vadd.f32 %v531, 1.0
  %v548 = vmul.f32 %v420, %v532
  %v549 = vmul.f32 %v421, %v533
  %v550 = vmul.f32 %v422, %v534
  %v551 = vmul.f32 %v423, %v535
  %v552 = vmul.f32 %v424, %v536
  %v553 = vmul.f32 %v425, %v537
  %v554 = vmul.f32 %v426, %v538
  %v555 = vmul.f32 %v427, %v539
  %v556 = vmul.f32 %v428, %v540
  %v557 = vmul.f32 %v429, %v541
  %v558 = vmul.f32 %v430, %v542
  %v559 = vmul.f32 %v431, %v543
  %v560 = vmul.f32 %v432, %v544
  %v561 = vmul.f32 %v433, %v545
  %v562 = vmul.f32 %v434, %v546
  %v563 = vmul.f32 %v435, %v547
  %v564 = vpack.c.bf16 %v552, %v548
  %v565 = vpack.c.bf16 %v553, %v549
  %v566 = vpack.c.bf16 %v554, %v550
  %v567 = vpack.c.bf16 %v555, %v551
  %v568 = vpack.c.bf16 %v560, %v556
  %v569 = vpack.c.bf16 %v561, %v557
  %v570 = vpack.c.bf16 %v562, %v558
  %v571 = vpack.c.bf16 %v563, %v559
  %v572 = vld [vmem:[%s5] sm:$0xf]
  %v573 = vld [vmem:[%s5 + $0x4] sm:$0xf]
  %v574 = vld [vmem:[%s5 + $0x8] sm:$0xf]
  %v575 = vld [vmem:[%s5 + $0xc] sm:$0xf]
  %v576 = vld [vmem:[%s5 + $0x10] sm:$0xf]
  %v577 = vld [vmem:[%s5 + $0x14] sm:$0xf]
  %v578 = vld [vmem:[%s5 + $0x18] sm:$0xf]
  %v579 = vld [vmem:[%s5 + $0x1c] sm:$0xf]
  %v580 = vld [vmem:[%s5 + $0x20] sm:$0xf]
  %v581 = vld [vmem:[%s5 + $0x24] sm:$0xf]
  %v582 = vld [vmem:[%s5 + $0x28] sm:$0xf]
  %v583 = vld [vmem:[%s5 + $0x2c] sm:$0xf]
  %v584 = vld [vmem:[%s5 + $0x30] sm:$0xf]
  %v585 = vld [vmem:[%s5 + $0x34] sm:$0xf]
  %v586 = vld [vmem:[%s5 + $0x38] sm:$0xf]
  %v587 = vld [vmem:[%s5 + $0x3c] sm:$0xf]
  %v588 = vld [vmem:[%s5 + $0x40] sm:$0xf]
  %v589 = vld [vmem:[%s5 + $0x44] sm:$0xf]
  %v590 = vld [vmem:[%s5 + $0x48] sm:$0xf]
  %v591 = vld [vmem:[%s5 + $0x4c] sm:$0xf]
  %v592 = vld [vmem:[%s5 + $0x50] sm:$0xf]
  %v593 = vld [vmem:[%s5 + $0x54] sm:$0xf]
  %v594 = vld [vmem:[%s5 + $0x58] sm:$0xf]
  %v595 = vld [vmem:[%s5 + $0x5c] sm:$0xf]
  %v596 = vld [vmem:[%s5 + $0x60] sm:$0xf]
  %v597 = vld [vmem:[%s5 + $0x64] sm:$0xf]
  %v598 = vld [vmem:[%s5 + $0x68] sm:$0xf]
  %v599 = vld [vmem:[%s5 + $0x6c] sm:$0xf]
  %v600 = vld [vmem:[%s5 + $0x70] sm:$0xf]
  %v601 = vld [vmem:[%s5 + $0x74] sm:$0xf]
  %v602 = vld [vmem:[%s5 + $0x78] sm:$0xf]
  %v603 = vld [vmem:[%s5 + $0x7c] sm:$0xf]
  %v604 = vld [vmem:[%s5 + $0x80] sm:$0xf]
  %v605 = vld [vmem:[%s5 + $0x84] sm:$0xf]
  %v606 = vld [vmem:[%s5 + $0x88] sm:$0xf]
  %v607 = vld [vmem:[%s5 + $0x8c] sm:$0xf]
  %v608 = vld [vmem:[%s5 + $0x90] sm:$0xf]
  %v609 = vld [vmem:[%s5 + $0x94] sm:$0xf]
  %v610 = vld [vmem:[%s5 + $0x98] sm:$0xf]
  %v611 = vld [vmem:[%s5 + $0x9c] sm:$0xf]
  %v612 = vld [vmem:[%s5 + $0xa0] sm:$0xf]
  %v613 = vld [vmem:[%s5 + $0xa4] sm:$0xf]
  %v614 = vld [vmem:[%s5 + $0xa8] sm:$0xf]
  %v615 = vld [vmem:[%s5 + $0xac] sm:$0xf]
  %v616 = vld [vmem:[%s5 + $0xb0] sm:$0xf]
  %v617 = vld [vmem:[%s5 + $0xb4] sm:$0xf]
  %v618 = vld [vmem:[%s5 + $0xb8] sm:$0xf]
  %v619 = vld [vmem:[%s5 + $0xbc] sm:$0xf]
  %v620 = vld [vmem:[%s5 + $0xc0] sm:$0xf]
  %v621 = vld [vmem:[%s5 + $0xc4] sm:$0xf]
  %v622 = vld [vmem:[%s5 + $0xc8] sm:$0xf]
  %v623 = vld [vmem:[%s5 + $0xcc] sm:$0xf]
  %v624 = vld [vmem:[%s5 + $0xd0] sm:$0xf]
  %v625 = vld [vmem:[%s5 + $0xd4] sm:$0xf]
  %v626 = vld [vmem:[%s5 + $0xd8] sm:$0xf]
  %v627 = vld [vmem:[%s5 + $0xdc] sm:$0xf]
  %v628 = vld [vmem:[%s5 + $0xe0] sm:$0xf]
  %v629 = vld [vmem:[%s5 + $0xe4] sm:$0xf]
  %v630 = vld [vmem:[%s5 + $0xe8] sm:$0xf]
  %v631 = vld [vmem:[%s5 + $0xec] sm:$0xf]
  %v632 = vld [vmem:[%s5 + $0xf0] sm:$0xf]
  %v633 = vld [vmem:[%s5 + $0xf4] sm:$0xf]
  %v634 = vld [vmem:[%s5 + $0xf8] sm:$0xf]
  %v635 = vld [vmem:[%s5 + $0xfc] sm:$0xf]
  %v636 = vld [vmem:[%s6] sm:$0x1]
  %v637 = vunpack.c.l.bf16 %v636
  %v638 = vperm.slane %v637, 0
  %v703 = vunpack.c.l.b16 %v572
  %v704 = vunpack.c.l.b16 %v573
  %v705 = vunpack.c.l.b16 %v574
  %v706 = vunpack.c.l.b16 %v575
  %v707 = vunpack.c.l.b16 %v576
  %v708 = vunpack.c.l.b16 %v577
  %v709 = vunpack.c.l.b16 %v578
  %v710 = vunpack.c.l.b16 %v579
  %v711 = vunpack.c.l.b16 %v580
  %v712 = vunpack.c.l.b16 %v581
  %v713 = vunpack.c.l.b16 %v582
  %v714 = vunpack.c.l.b16 %v583
  %v715 = vunpack.c.l.b16 %v584
  %v716 = vunpack.c.l.b16 %v585
  %v717 = vunpack.c.l.b16 %v586
  %v718 = vunpack.c.l.b16 %v587
  %v719 = vunpack.c.l.b16 %v588
  %v720 = vunpack.c.l.b16 %v589
  %v721 = vunpack.c.l.b16 %v590
  %v722 = vunpack.c.l.b16 %v591
  %v723 = vunpack.c.l.b16 %v592
  %v724 = vunpack.c.l.b16 %v593
  %v725 = vunpack.c.l.b16 %v594
  %v726 = vunpack.c.l.b16 %v595
  %v727 = vunpack.c.l.b16 %v596
  %v728 = vunpack.c.l.b16 %v597
  %v729 = vunpack.c.l.b16 %v598
  %v730 = vunpack.c.l.b16 %v599
  %v731 = vunpack.c.l.b16 %v600
  %v732 = vunpack.c.l.b16 %v601
  %v733 = vunpack.c.l.b16 %v602
  %v734 = vunpack.c.l.b16 %v603
  %v735 = vunpack.c.l.b16 %v604
  %v736 = vunpack.c.l.b16 %v605
  %v737 = vunpack.c.l.b16 %v606
  %v738 = vunpack.c.l.b16 %v607
  %v739 = vunpack.c.l.b16 %v608
  %v740 = vunpack.c.l.b16 %v609
  %v741 = vunpack.c.l.b16 %v610
  %v742 = vunpack.c.l.b16 %v611
  %v743 = vunpack.c.l.b16 %v612
  %v744 = vunpack.c.l.b16 %v613
  %v745 = vunpack.c.l.b16 %v614
  %v746 = vunpack.c.l.b16 %v615
  %v747 = vunpack.c.l.b16 %v616
  %v748 = vunpack.c.l.b16 %v617
  %v749 = vunpack.c.l.b16 %v618
  %v750 = vunpack.c.l.b16 %v619
  %v751 = vunpack.c.l.b16 %v620
  %v752 = vunpack.c.l.b16 %v621
  %v753 = vunpack.c.l.b16 %v622
  %v754 = vunpack.c.l.b16 %v623
  %v755 = vunpack.c.l.b16 %v624
  %v756 = vunpack.c.l.b16 %v625
  %v757 = vunpack.c.l.b16 %v626
  %v758 = vunpack.c.l.b16 %v627
  %v759 = vunpack.c.l.b16 %v628
  %v760 = vunpack.c.l.b16 %v629
  %v761 = vunpack.c.l.b16 %v630
  %v762 = vunpack.c.l.b16 %v631
  %v763 = vunpack.c.l.b16 %v632
  %v764 = vunpack.c.l.b16 %v633
  %v765 = vunpack.c.l.b16 %v634
  %v766 = vunpack.c.l.b16 %v635
  %v767 = vpack.c.b16 %v704, %v703
  %v768 = vpack.c.b16 %v706, %v705
  %v769 = vpack.c.b16 %v708, %v707
  %v770 = vpack.c.b16 %v710, %v709
  %v771 = vpack.c.b16 %v712, %v711
  %v772 = vpack.c.b16 %v714, %v713
  %v773 = vpack.c.b16 %v716, %v715
  %v774 = vpack.c.b16 %v718, %v717
  %v775 = vpack.c.b16 %v720, %v719
  %v776 = vpack.c.b16 %v722, %v721
  %v777 = vpack.c.b16 %v724, %v723
  %v778 = vpack.c.b16 %v726, %v725
  %v779 = vpack.c.b16 %v728, %v727
  %v780 = vpack.c.b16 %v730, %v729
  %v781 = vpack.c.b16 %v732, %v731
  %v782 = vpack.c.b16 %v734, %v733
  %v783 = vpack.c.b16 %v736, %v735
  %v784 = vpack.c.b16 %v738, %v737
  %v785 = vpack.c.b16 %v740, %v739
  %v786 = vpack.c.b16 %v742, %v741
  %v787 = vpack.c.b16 %v744, %v743
  %v788 = vpack.c.b16 %v746, %v745
  %v789 = vpack.c.b16 %v748, %v747
  %v790 = vpack.c.b16 %v750, %v749
  %v791 = vpack.c.b16 %v752, %v751
  %v792 = vpack.c.b16 %v754, %v753
  %v793 = vpack.c.b16 %v756, %v755
  %v794 = vpack.c.b16 %v758, %v757
  %v795 = vpack.c.b16 %v760, %v759
  %v796 = vpack.c.b16 %v762, %v761
  %v797 = vpack.c.b16 %v764, %v763
  %v798 = vpack.c.b16 %v766, %v765
  %831 = vmatpush.bf16.msra.mxu0 %v774
  %832 = vmatpush.bf16.msra.mxu0 %v773
  %833 = vmatpush.bf16.msra.mxu0 %v772
  %834 = vmatpush.bf16.msra.mxu0 %v771
  %835 = vmatpush.bf16.msra.mxu0 %v770
  %836 = vmatpush.bf16.msra.mxu0 %v769
  %837 = vmatpush.bf16.msra.mxu0 %v768
  %838 = vmatpush.bf16.msra.mxu0 %v767
  %839 = vmatmul.bf16.gmra.mxu0 %v564
  %v840 = vpop.f32.mrf.mxu0
  %v841 = vadd.f32 %v638, %v840
  %v842 = vpop.f32.mrf.mxu0
  %v843 = vadd.f32 %v638, %v842
  %844 = vmatmul.bf16.gmra.mxu0 %v568
  %v845 = vpop.f32.mrf.mxu0
  %v846 = vadd.f32 %v638, %v845
  %v847 = vpop.f32.mrf.mxu0
  %v848 = vadd.f32 %v638, %v847
  %849 = vdwg.mxu0
  %850 = vmatpush.bf16.msra.mxu0 %v782
  %851 = vmatpush.bf16.msra.mxu0 %v781
  %852 = vmatpush.bf16.msra.mxu0 %v780
  %853 = vmatpush.bf16.msra.mxu0 %v779
  %854 = vmatpush.bf16.msra.mxu0 %v778
  %855 = vmatpush.bf16.msra.mxu0 %v777
  %856 = vmatpush.bf16.msra.mxu0 %v776
  %857 = vmatpush.bf16.msra.mxu0 %v775
  %858 = vmatmul.bf16.gmra.mxu0 %v565
  %v859 = vpop.f32.mrf.mxu0
  %v860 = vadd.f32 %v841, %v859
  %v861 = vpop.f32.mrf.mxu0
  %v862 = vadd.f32 %v843, %v861
  %863 = vmatmul.bf16.gmra.mxu0 %v569
  %v864 = vpop.f32.mrf.mxu0
  %v865 = vadd.f32 %v846, %v864
  %v866 = vpop.f32.mrf.mxu0
  %v867 = vadd.f32 %v848, %v866
  %868 = vdwg.mxu0
  %869 = vmatpush.bf16.msra.mxu0 %v790
  %870 = vmatpush.bf16.msra.mxu0 %v789
  %871 = vmatpush.bf16.msra.mxu0 %v788
  %872 = vmatpush.bf16.msra.mxu0 %v787
  %873 = vmatpush.bf16.msra.mxu0 %v786
  %874 = vmatpush.bf16.msra.mxu0 %v785
  %875 = vmatpush.bf16.msra.mxu0 %v784
  %876 = vmatpush.bf16.msra.mxu0 %v783
  %877 = vmatmul.bf16.gmra.mxu0 %v566
  %v878 = vpop.f32.mrf.mxu0
  %v879 = vadd.f32 %v860, %v878
  %v880 = vpop.f32.mrf.mxu0
  %v881 = vadd.f32 %v862, %v880
  %882 = vmatmul.bf16.gmra.mxu0 %v570
  %v883 = vpop.f32.mrf.mxu0
  %v884 = vadd.f32 %v865, %v883
  %v885 = vpop.f32.mrf.mxu0
  %v886 = vadd.f32 %v867, %v885
  %887 = vdwg.mxu0
  %888 = vmatpush.bf16.msra.mxu0 %v798
  %889 = vmatpush.bf16.msra.mxu0 %v797
  %890 = vmatpush.bf16.msra.mxu0 %v796
  %891 = vmatpush.bf16.msra.mxu0 %v795
  %892 = vmatpush.bf16.msra.mxu0 %v794
  %893 = vmatpush.bf16.msra.mxu0 %v793
  %894 = vmatpush.bf16.msra.mxu0 %v792
  %895 = vmatpush.bf16.msra.mxu0 %v791
  %896 = vmatmul.bf16.gmra.mxu0 %v567
  %v897 = vpop.f32.mrf.mxu0
  %v898 = vadd.f32 %v879, %v897
  %v899 = vpop.f32.mrf.mxu0
  %v900 = vadd.f32 %v881, %v899
  %901 = vmatmul.bf16.gmra.mxu0 %v571
  %v902 = vpop.f32.mrf.mxu0
  %v903 = vadd.f32 %v884, %v902
  %v904 = vpop.f32.mrf.mxu0
  %v905 = vadd.f32 %v886, %v904
  %906 = vdwg.mxu0
  %v907 = vadd.f32 %v30, %v898
  %v908 = vadd.f32 %v31, %v900
  %v909 = vadd.f32 %v32, %v903
  %v910 = vadd.f32 %v33, %v905
  %v911 = vpack.c.bf16 %v907, %v907
  %v912 = vpack.c.bf16 %v908, %v908
  %v913 = vpack.c.bf16 %v909, %v909
  %v914 = vpack.c.bf16 %v910, %v910
  %915 = vst [vmem:[%s7] sm:$0xf] %v911
  %916 = vst [vmem:[%s7 + $0x4] sm:$0xf] %v912
  %917 = vst [vmem:[%s7 + $0x8] sm:$0xf] %v913
  %918 = vst [vmem:[%s7 + $0xc] sm:$0xf] %v914
  // Predicated region
  $region30: #{build_transformer_forward.12} parent=0 // pred_check
    _
  $region31: #{build_transformer_forward.12} parent=0 // pred_check_branch
    %920 = sbr.rel (0) target = $region33
  $region32: #{build_transformer_forward.12} parent=0 // pred_region
    _
  $region33: #{build_transformer_forward.12} parent=0 // pred_fallthru
    _
  // Predicated region
  $region34: #{build_transformer_forward.12} parent=0 // pred_check
    _
  $region35: #{build_transformer_forward.12} parent=0 // pred_check_branch
    %922 = sbr.rel (0) target = $region37
  $region36: #{build_transformer_forward.12} parent=0 // pred_region
    _
  $region37: #{build_transformer_forward.12} parent=0 // pred_fallthru
    _

// kernel: build_transformer_forward.16
$region0: #{build_transformer_forward.16}
  #allocation0 [shape = 'u32[]', space=smem, size = 0x4, offset = 0x4, fixed_abs, tag = 'smem constant byte address 0x4 - core index']
  #allocation1 [shape = 'u32[72,128]{1,0:T(1,128)}', space=vmem, size = 0x9000, scoped, tag = 'internal scratch']
  %s0 = inlined_call_operand.vmem [shape: bf16[2,128], index: 0, kind: input, shape index: {}]
  %s1 = inlined_call_operand.vmem [shape: bf16[1,128], index: 1, kind: input, shape index: {}]
  %s2 = inlined_call_operand.vmem [shape: bf16[1,128], index: 2, kind: input, shape index: {}]
  %s3 = inlined_call_operand.vmem [shape: bf16[2,128], index: 3, kind: output, shape index: {}]
  %s4 = sld [smem:[#allocation0]]
  $region22: #{build_transformer_forward.16} parent=0
    _
  %s6 = ssub.s32 1, %s4
  %s7 = scalar_select 0, %s6, %s4
  // Predicated region
  $region2: #{build_transformer_forward.16} parent=0 // pred_check
    _
  $region3: #{build_transformer_forward.16} parent=0 // pred_check_branch
    %9 = sbr.rel (0) target = $region5
  $region4: #{build_transformer_forward.16} parent=0 // pred_region
    _
  $region5: #{build_transformer_forward.16} parent=0 // pred_fallthru
    _
  // Predicated region
  $region6: #{build_transformer_forward.16} parent=0 // pred_check
    _
  $region7: #{build_transformer_forward.16} parent=0 // pred_check_branch
    %11 = sbr.rel (0) target = $region9
  $region8: #{build_transformer_forward.16} parent=0 // pred_region
    _
  $region9: #{build_transformer_forward.16} parent=0 // pred_fallthru
    _
  // Predicated region
  $region10: #{build_transformer_forward.16} parent=0 // pred_check
    _
  $region11: #{build_transformer_forward.16} parent=0 // pred_check_branch
    %13 = sbr.rel (0) target = $region13
  $region12: #{build_transformer_forward.16} parent=0 // pred_region
    _
  $region13: #{build_transformer_forward.16} parent=0 // pred_fallthru
    _
  %v14 = vld [vmem:[%s0] sm:$0x1]
  %v15 = vunpack.c.l.bf16 %v14
  %vm16 = vcmask 1041408
  %v17 = vsel %vm16, %v15, 0.0
  %18 = vadd.xlane.f32.xlu0 %v17
  %v19 = vpop.xlane.xlu0 %18
  %v20 = vrcp.pop 128.0
  %v21 = vmul.f32 128.0, %v20
  %v22 = vsub.f32 1.0, %v21
  %v23 = vmul.f32 %v20, %v22
  %v24 = vadd.f32 %v20, %v23
  %vm25 = vweird.f32 %v20
  %v26 = vsel %vm25, %v20, %v24
  %v27 = vmul.f32 %v19, %v26
  %v28 = vsub.f32 %v15, %v27
  %v29 = vmul.f32 %v28, %v28
  %v30 = vsel %vm16, %v29, 0.0
  %31 = vadd.xlane.f32.xlu0 %v30
  %v32 = vpop.xlane.xlu0 %31
  %v33 = vmul.f32 %v32, %v26
  %v34 = vadd.f32 %v33, 1e-06
  %v35 = vrsqrt.pop %v34
  %v36 = vmul.f32 %v35, %v34
  %v37 = vmul.f32 %v36, %v35
  %v38 = vmul.f32 0.5, %v37
  %v39 = vsub.f32 1.5, %v38
  %v40 = vmul.f32 %v35, %v39
  %vm41 = vweird.f32 %v34
  %vm42 = vweird.f32 %v35
  %vm43 = vmor %vm41, %vm42
  %v44 = vsel %vm43, %v35, %v40
  %v45 = vmul.f32 %v28, %v44
  %v46 = vld [vmem:[%s1] sm:$0x1]
  %v47 = vunpack.c.l.bf16 %v46
  %v48 = vperm.slane %v47, 0
  %v49 = vmul.f32 %v45, %v48
  %v50 = vld [vmem:[%s2] sm:$0x1]
  %v51 = vunpack.c.l.bf16 %v50
  %v52 = vperm.slane %v51, 0
  %v53 = vadd.f32 %v49, %v52
  %v54 = vpack.c.bf16 %v53, %v53
  %55 = vst [vmem:[%s3] sm:$0x1] %v54
  // Predicated region
  $region14: #{build_transformer_forward.16} parent=0 // pred_check
    _
  $region15: #{build_transformer_forward.16} parent=0 // pred_check_branch
    %57 = sbr.rel (0) target = $region17
  $region16: #{build_transformer_forward.16} parent=0 // pred_region
    _
  $region17: #{build_transformer_forward.16} parent=0 // pred_fallthru
    _
  // Predicated region
  $region18: #{build_transformer_forward.16} parent=0 // pred_check
    _
  $region19: #{build_transformer_forward.16} parent=0 // pred_check_branch
    %59 = sbr.rel (0) target = $region21
  $region20: #{build_transformer_forward.16} parent=0 // pred_region
    _
  $region21: #{build_transformer_forward.16} parent=0 // pred_fallthru
    _

// kernel: build_transformer_forward.17
$region0: #{build_transformer_forward.17}
  #allocation0 [shape = 'u32[]', space=smem, size = 0x4, offset = 0x4, fixed_abs, tag = 'smem constant byte address 0x4 - core index']
  #allocation1 [shape = 'u32[72,128]{1,0:T(1,128)}', space=vmem, size = 0x9000, scoped, tag = 'internal scratch']
  %s0 = inlined_call_operand.vmem [shape: bf16[2,128], index: 0, kind: input, shape index: {}]
  %s1 = inlined_call_operand.vmem [shape: bf16[1,128], index: 1, kind: input, shape index: {}]
  %s2 = inlined_call_operand.vmem [shape: bf16[1,128], index: 2, kind: input, shape index: {}]
  %s3 = inlined_call_operand.vmem [shape: bf16[128,128], index: 3, kind: input, shape index: {}]
  %s4 = inlined_call_operand.hbm [shape: f32[2,128], index: 4, kind: output, shape index: {}]
  %s5 = sld [smem:[#allocation0]]
  $region26: #{build_transformer_forward.17} parent=0
    _
  %s7 = ssub.s32 1, %s5
  %s8 = scalar_select 0, %s7, %s5
  $region1: #{build_transformer_forward.17} parent=0
    #allocation2 [shape = 'u8[1024]{0}', space=vmem, size = 0x400, scoped, tag = 'output window, operand 0, single buffered']
    #allocation3 [shape = 's32[1]{0}', space=sflag, size = 0x4, scoped, tag = 'scoped memory for build_transformer_forward.17']
    %9 = vsyncpa [#allocation3], 0
    // Predicated region
    $region2: #{build_transformer_forward.17} parent=1 // pred_check
      _
    $region3: #{build_transformer_forward.17} parent=1 // pred_check_branch
      %11 = sbr.rel (0) target = $region5
    $region4: #{build_transformer_forward.17} parent=1 // pred_region
      _
    $region5: #{build_transformer_forward.17} parent=1 // pred_fallthru
      _
    // Predicated region
    $region6: #{build_transformer_forward.17} parent=1 // pred_check
      _
    $region7: #{build_transformer_forward.17} parent=1 // pred_check_branch
      %13 = sbr.rel (0) target = $region9
    $region8: #{build_transformer_forward.17} parent=1 // pred_region
      _
    $region9: #{build_transformer_forward.17} parent=1 // pred_fallthru
      _
    // Predicated region
    $region10: #{build_transformer_forward.17} parent=1 // pred_check
      _
    $region11: #{build_transformer_forward.17} parent=1 // pred_check_branch
      %15 = sbr.rel (0) target = $region13
    $region12: #{build_transformer_forward.17} parent=1 // pred_region
      _
    $region13: #{build_transformer_forward.17} parent=1 // pred_fallthru
      _
    // Predicated region
    $region14: #{build_transformer_forward.17} parent=1 // pred_check
      _
    $region15: #{build_transformer_forward.17} parent=1 // pred_check_branch
      %17 = sbr.rel (0) target = $region17
    $region16: #{build_transformer_forward.17} parent=1 // pred_region
      _
    $region17: #{build_transformer_forward.17} parent=1 // pred_fallthru
      _
    %v18 = vld [vmem:[%s0] sm:$0x1]
    %v19 = vunpack.c.l.bf16 %v18
    %vm20 = vcmask 1041408
    %v21 = vsel %vm20, %v19, 0.0
    %v22 = vrot.slane %v21, 4
    %v23 = vadd.f32 %v21, %v22
    %v24 = vrot.slane %v23, 2
    %v25 = vadd.f32 %v23, %v24
    %v26 = vrot.slane %v25, 1
    %v27 = vadd.f32 %v25, %v26
    %v28 = vrcp.pop 2.0
    %v29 = vmul.f32 2.0, %v28
    %v30 = vsub.f32 1.0, %v29
    %v31 = vmul.f32 %v28, %v30
    %v32 = vadd.f32 %v28, %v31
    %vm33 = vweird.f32 %v28
    %v34 = vsel %vm33, %v28, %v32
    %v35 = vmul.f32 %v27, %v34
    %v36 = vsub.f32 %v19, %v35
    %v37 = vmul.f32 %v36, %v36
    %v38 = vsel %vm20, %v37, 0.0
    %v39 = vrot.slane %v38, 4
    %v40 = vadd.f32 %v38, %v39
    %v41 = vrot.slane %v40, 2
    %v42 = vadd.f32 %v40, %v41
    %v43 = vrot.slane %v42, 1
    %v44 = vadd.f32 %v42, %v43
    %v45 = vmul.f32 %v44, %v34
    %v46 = vadd.f32 %v45, 1e-05
    %v47 = vrsqrt.pop %v46
    %v48 = vmul.f32 %v47, %v46
    %v49 = vmul.f32 %v48, %v47
    %v50 = vmul.f32 0.5, %v49
    %v51 = vsub.f32 1.5, %v50
    %v52 = vmul.f32 %v47, %v51
    %vm53 = vweird.f32 %v46
    %vm54 = vweird.f32 %v47
    %vm55 = vmor %vm53, %vm54
    %v56 = vsel %vm55, %v47, %v52
    %v57 = vmul.f32 %v36, %v56
    %v58 = vld [vmem:[%s1] sm:$0x1]
    %v59 = vunpack.c.l.bf16 %v58
    %v60 = vperm.slane %v59, 0
    %v61 = vmul.f32 %v57, %v60
    %v62 = vld [vmem:[%s2] sm:$0x1]
    %v63 = vunpack.c.l.bf16 %v62
    %v64 = vperm.slane %v63, 0
    %v65 = vadd.f32 %v61, %v64
    %v66 = vpack.c.bf16 %v65, %v65
    %v67 = vld [vmem:[%s3] sm:$0xf]
    %v68 = vld [vmem:[%s3 + $0x4] sm:$0xf]
    %v69 = vld [vmem:[%s3 + $0x8] sm:$0xf]
    %v70 = vld [vmem:[%s3 + $0xc] sm:$0xf]
    %v71 = vld [vmem:[%s3 + $0x10] sm:$0xf]
    %v72 = vld [vmem:[%s3 + $0x14] sm:$0xf]
    %v73 = vld [vmem:[%s3 + $0x18] sm:$0xf]
    %v74 = vld [vmem:[%s3 + $0x1c] sm:$0xf]
    %v75 = vld [vmem:[%s3 + $0x20] sm:$0xf]
    %v76 = vld [vmem:[%s3 + $0x24] sm:$0xf]
    %v77 = vld [vmem:[%s3 + $0x28] sm:$0xf]
    %v78 = vld [vmem:[%s3 + $0x2c] sm:$0xf]
    %v79 = vld [vmem:[%s3 + $0x30] sm:$0xf]
    %v80 = vld [vmem:[%s3 + $0x34] sm:$0xf]
    %v81 = vld [vmem:[%s3 + $0x38] sm:$0xf]
    %v82 = vld [vmem:[%s3 + $0x3c] sm:$0xf]
    %v99 = vunpack.c.l.b16 %v67
    %v100 = vunpack.c.l.b16 %v68
    %v101 = vunpack.c.l.b16 %v69
    %v102 = vunpack.c.l.b16 %v70
    %v103 = vunpack.c.l.b16 %v71
    %v104 = vunpack.c.l.b16 %v72
    %v105 = vunpack.c.l.b16 %v73
    %v106 = vunpack.c.l.b16 %v74
    %v107 = vunpack.c.l.b16 %v75
    %v108 = vunpack.c.l.b16 %v76
    %v109 = vunpack.c.l.b16 %v77
    %v110 = vunpack.c.l.b16 %v78
    %v111 = vunpack.c.l.b16 %v79
    %v112 = vunpack.c.l.b16 %v80
    %v113 = vunpack.c.l.b16 %v81
    %v114 = vunpack.c.l.b16 %v82
    %v115 = vpack.c.b16 %v100, %v99
    %v116 = vpack.c.b16 %v102, %v101
    %v117 = vpack.c.b16 %v104, %v103
    %v118 = vpack.c.b16 %v106, %v105
    %v119 = vpack.c.b16 %v108, %v107
    %v120 = vpack.c.b16 %v110, %v109
    %v121 = vpack.c.b16 %v112, %v111
    %v122 = vpack.c.b16 %v114, %v113
    %131 = vmatpush.bf16.msra.mxu0 %v122
    %132 = vmatpush.bf16.msra.mxu0 %v121
    %133 = vmatpush.bf16.msra.mxu0 %v120
    %134 = vmatpush.bf16.msra.mxu0 %v119
    %135 = vmatpush.bf16.msra.mxu0 %v118
    %136 = vmatpush.bf16.msra.mxu0 %v117
    %137 = vmatpush.bf16.msra.mxu0 %v116
    %138 = vmatpush.bf16.msra.mxu0 %v115
    %139 = vmatmul.bf16.gmra.mxu0 %v66
    %v140 = vpop.f32.mrf.mxu0
    %v141 = vadd.f32 0.0, %v140
    %v142 = vpop.f32.mrf.mxu0
    %143 = vdwg.mxu0
    %144 = vst [vmem:[#allocation2] sm:$0x3] %v141
    // Predicated region
    $region18: #{build_transformer_forward.17} parent=1 // pred_check
      _
    $region19: #{build_transformer_forward.17} parent=1 // pred_check_branch
      %146 = sbr.rel (0) target = $region21
    $region20: #{build_transformer_forward.17} parent=1 // pred_region
      %148 = vsyncadd [#allocation3], 0
      %s150 = sshll.u32 [#allocation2], 4
      %s151 = int_to_ptr.vmem [resolvable:$true] %s150
      %s152 = sshll.u32 %s4, 4
      %s153 = int_to_ptr.hbm [resolvable:$true] %s152
      %155 = dma.vmem_to_hbm [thread:$0]  %s151, 32, %s153, [#allocation3]
    $region21: #{build_transformer_forward.17} parent=1 // pred_fallthru
      _
    // Predicated region
    $region22: #{build_transformer_forward.17} parent=1 // pred_check
      _
    $region23: #{build_transformer_forward.17} parent=1 // pred_check_branch
      %157 = sbr.rel (0) target = $region25
    $region24: #{build_transformer_forward.17} parent=1 // pred_region
      %159 = dma.done [#allocation3], 32
    $region25: #{build_transformer_forward.17} parent=1 // pred_fallthru
      _
    %160 = vsyncpa [#allocation3], 1

</llo_original>
